<compile_context>
chip_gen: v6e
topology: v6e:2x2x1
jax: 0.10.0
libtpu: 0.0.40
codegen_flags: <defaults>
</compile_context>

<pallas_src>
import math
import functools

import numpy as np
import jax
import jax.numpy as jnp
from jax.experimental import pallas as pl
from jax.experimental.pallas import tpu as pltpu


# ----------------------------- kernel ---------------------------------------

def _layernorm2d_lastdim(x, gamma, beta):
    # torch layernorm2d: mean/std over the channel dim; torch.std is unbiased
    # (ddof=1); eps=1e-6 added to std (not var).
    d = x.shape[-1]
    mean = jnp.mean(x, axis=-1, keepdims=True)
    c = x - mean
    var = jnp.sum(c * c, axis=-1, keepdims=True) * (1.0 / (d - 1))
    inv = pl.reciprocal(jnp.sqrt(var) + 1e-6, approx=True)
    return gamma * (c * inv) + beta


def _update_kernel(f0_ref, f1_ref, pos_ref,
                   wq_ref, wk_ref, wvf_ref, wvp_ref, wm_ref,
                   wf1a_ref, wf1b_ref, wf2_ref,
                   g1_ref, b1_ref, g2_ref, b2_ref,
                   out_ref, *, nhead):
    f0 = f0_ref[0]                      # [L, D]  f32
    f1 = f1_ref[0]                      # [L, D]
    pos = pos_ref[0]                    # [L, Dp]

    L, D = f0.shape
    dh = D // nhead
    scale = 1.0 / math.sqrt(dh)

    # bf16 only at MXU operands; elementwise math stays f32.
    f0b = f0.astype(jnp.bfloat16)
    f1b = f1.astype(jnp.bfloat16)
    posb = pos.astype(jnp.bfloat16)

    # ---- per-head projections (weights pre-split per head in the wrapper) ----
    # v-proj on cat([f1, pos1]) is done as a sum of two aligned matmuls.
    v_heads = []
    s_list = []
    for h in range(nhead):
        q_h = jnp.dot(f0b, wq_ref[h], preferred_element_type=jnp.float32) * scale
        k_h = jnp.dot(f1b, wk_ref[h], preferred_element_type=jnp.float32)
        v_h = (jnp.dot(f1b, wvf_ref[h], preferred_element_type=jnp.float32)
               + jnp.dot(posb, wvp_ref[h], preferred_element_type=jnp.float32))
        v_heads.append(v_h.astype(jnp.bfloat16))
        # scores: contract the head dim (minor dim of both operands) -> [L, S]
        s_h = jax.lax.dot_general(
            q_h.astype(jnp.bfloat16), k_h.astype(jnp.bfloat16),
            dimension_numbers=(((1,), (1,)), ((), ())),
            preferred_element_type=jnp.float32)
        s_list.append(s_h)

    # ---- one merged softmax over all heads: [nhead*L, S] ----
    s = jnp.concatenate(s_list, axis=0)
    m = jnp.max(s, axis=-1, keepdims=True)
    p = jnp.exp(s - m)
    inv = pl.reciprocal(jnp.sum(p, axis=-1, keepdims=True), approx=True)
    a = (p * inv).astype(jnp.bfloat16)

    # ---- attention output + merge_head accumulated per head (no lane concat) ----
    msg = jnp.zeros((L, D), jnp.float32)
    for h in range(nhead):
        a_h = a[h * L:(h + 1) * L, :]                                        # sublane slice
        o_h = jnp.dot(a_h, v_heads[h], preferred_element_type=jnp.float32)   # [L, dh]
        msg = msg + jnp.dot(o_h.astype(jnp.bfloat16), wm_ref[h],
                            preferred_element_type=jnp.float32)              # [L, D]

    msg = _layernorm2d_lastdim(msg, g1_ref[...], b1_ref[...])

    # ---- merge_f: conv1x1(2D->2D) -> ReLU -> conv1x1(2D->D) as sum-of-matmuls ----
    hid = (jnp.dot(f0b, wf1a_ref[...], preferred_element_type=jnp.float32)
           + jnp.dot(msg.astype(jnp.bfloat16), wf1b_ref[...],
                     preferred_element_type=jnp.float32))
    hid = jnp.maximum(hid, 0.0)
    out = jnp.dot(hid.astype(jnp.bfloat16), wf2_ref[...],
                  preferred_element_type=jnp.float32)
    out = _layernorm2d_lastdim(out, g2_ref[...], b2_ref[...])

    out_ref[0] = (f0 + out).astype(out_ref.dtype)


# ----------------------------- wrappers --------------------------------------

def _fused_update_pallas(x_all, pos_all, kparams, nhead, half):
    """x_all: [2N, L, D] (directions stacked), pos_all: [2N, L, Dp]."""
    B, L, D = x_all.shape
    Dp = pos_all.shape[-1]
    (wq_h, wk_h, wvf_h, wvp_h, wm_h, wf1a, wf1b, wf2t, g1, b1, g2, b2) = kparams

    def const_spec(arr):
        shape = arr.shape
        return pl.BlockSpec(shape, lambda b: (0,) * len(shape))

    grid_spec = pltpu.PrefetchScalarGridSpec(
        num_scalar_prefetch=0,
        grid=(B,),
        in_specs=[
            pl.BlockSpec((1, L, D), lambda b: (b, 0, 0)),                # f0
            pl.BlockSpec((1, L, D), lambda b: ((b + half) % B, 0, 0)),   # f1 = opposite dir
            pl.BlockSpec((1, L, Dp), lambda b: (b, 0, 0)),               # pos (paired with f1)
            const_spec(wq_h), const_spec(wk_h), const_spec(wvf_h), const_spec(wvp_h),
            const_spec(wm_h), const_spec(wf1a), const_spec(wf1b), const_spec(wf2t),
            const_spec(g1), const_spec(b1), const_spec(g2), const_spec(b2),
        ],
        out_specs=pl.BlockSpec((1, L, D), lambda b: (b, 0, 0)),
    )

    kernel = functools.partial(_update_kernel, nhead=nhead)
    return pl.pallas_call(
        kernel,
        out_shape=jax.ShapeDtypeStruct((B, L, D), x_all.dtype),
        grid_spec=grid_spec,
        compiler_params=pltpu.CompilerParams(dimension_semantics=("parallel",)),
    )(x_all, x_all, pos_all,
      wq_h, wk_h, wvf_h, wvp_h, wm_h, wf1a, wf1b, wf2t, g1, b1, g2, b2)


@functools.partial(jax.jit, static_argnums=(5,))
def message_layer_ini_forward(x0, x1, pos0, pos1, kparams, nhead):
    """x0, x1: [N, d_model, H, W] (NCHW); pos*: [N, d_value - d_model, H, W]."""
    N, D, H, W = x0.shape
    Dp = pos0.shape[1]
    L = H * W
    # Both update directions consume the ORIGINAL x0/x1 (PyTorch tuple RHS is
    # evaluated first).  Stack them into one 2N batch; single relayout each.
    x_all = jnp.concatenate([x0, x1], axis=0).reshape(2 * N, D, L).transpose(0, 2, 1)
    pos_all = jnp.concatenate([pos1, pos0], axis=0).reshape(2 * N, Dp, L).transpose(0, 2, 1)
    out_all = _fused_update_pallas(x_all, pos_all, kparams, nhead, N)   # [2N, L, D]
    out = out_all.transpose(0, 2, 1).reshape(2 * N, D, H, W)
    return out[:N], out[N:]


def prepare_kernel_params(wq, wk, wv, wm, wf1, wf2, g1, b1, g2, b2,
                          d_model, nhead, mxu_dtype=jnp.bfloat16):
    """Torch-layout ([out, in]) weights -> kernel-layout, per-head-split, bf16."""
    dh = d_model // nhead

    def per_head_in_out(w_t):                       # [out, in] -> [nhead, in, dh]
        return jnp.transpose(
            w_t.T.reshape(w_t.shape[1], nhead, dh), (1, 0, 2)).astype(mxu_dtype)

    wq_h = per_head_in_out(wq)                      # [nh, D, dh]
    wk_h = per_head_in_out(wk)                      # [nh, D, dh]
    wv_t = wv.T                                     # [d_value, D]
    wvf_h = jnp.transpose(wv_t[:d_model].reshape(d_model, nhead, dh), (1, 0, 2)).astype(mxu_dtype)
    wvp_h = jnp.transpose(wv_t[d_model:].reshape(-1, nhead, dh), (1, 0, 2)).astype(mxu_dtype)
    wm_h = wm.T.reshape(nhead, dh, d_model).astype(mxu_dtype)   # [nh, dh, D]
    wf1a = wf1.T[:d_model].astype(mxu_dtype)        # [D, 2D]  (f0 part)
    wf1b = wf1.T[d_model:].astype(mxu_dtype)        # [D, 2D]  (msg part)
    wf2t = wf2.T.astype(mxu_dtype)                  # [2D, D]
    return (wq_h, wk_h, wvf_h, wvp_h, wm_h, wf1a, wf1b, wf2t,
            g1.reshape(1, -1), b1.reshape(1, -1),
            g2.reshape(1, -1), b2.reshape(1, -1))


# ----------------------------- pure-JAX reference ----------------------------

def _ref_update(f0, f1, pos1, tparams, nhead):
    # Mirrors the PyTorch module in NCHW with torch-shaped f32 weights ([out, in]).
    wq, wk, wv, wm, wf1, wf2, g1, b1, g2, b2 = tparams
    N, D, H, W = f0.shape
    L = H * W
    f0f = f0.reshape(N, D, L)
    f1f = f1.reshape(N, D, L)
    p1f = pos1.reshape(N, pos1.shape[1], L)
    f1v = jnp.concatenate([f1f, p1f], axis=1)

    q = jnp.einsum('oi,nil->nol', wq, f0f)
    k = jnp.einsum('oi,nil->nol', wk, f1f)
    v = jnp.einsum('oi,nil->nol', wv, f1v)

    dh = D // nhead
    qh = q.reshape(N, nhead, dh, L)
    kh = k.reshape(N, nhead, dh, L)
    vh = v.reshape(N, nhead, dh, L)
    QK = jnp.einsum('nhdl,nhds->nhls', qh, kh)
    A = jax.nn.softmax(QK / math.sqrt(dh), axis=-1)
    qv = jnp.einsum('nhls,nhds->nhdl', A, vh).reshape(N, D, L)
    msg = jnp.einsum('oi,nil->nol', wm, qv).reshape(N, D, H, W)

    def ln(x, g, b):
        mean = jnp.mean(x, axis=1, keepdims=True)
        var = jnp.sum((x - mean) ** 2, axis=1, keepdims=True) / (x.shape[1] - 1)
        std = jnp.sqrt(var)
        return g[None, :, None, None] * (x - mean) / (std + 1e-6) + b[None, :, None, None]

    msg = ln(msg, g1, b1)
    cat = jnp.concatenate([f0, msg], axis=1)
    h1 = jax.nn.relu(jnp.einsum('oi,nihw->nohw', wf1, cat))
    h2 = jnp.einsum('oi,nihw->nohw', wf2, h1)
    return f0 + ln(h2, g2, b2)


# ----------------------------- main ------------------------------------------

if __name__ == "__main__":
    d_model, d_value, nhead = 32, 48, 4
    N, H, W = 2, 8, 8
    d_pos = d_value - d_model

    key = jax.random.PRNGKey(0)
    ks = jax.random.split(key, 14)

    # Parameters in PyTorch layout ([out, in]); synthetic deterministic init.
    wq_t = 0.1 * jax.random.normal(ks[0], (d_model, d_model), jnp.float32)
    wk_t = 0.1 * jax.random.normal(ks[1], (d_model, d_model), jnp.float32)
    wv_t = 0.1 * jax.random.normal(ks[2], (d_model, d_value), jnp.float32)
    wm_t = 0.1 * jax.random.normal(ks[3], (d_model, d_model), jnp.float32)
    wf1_t = 0.1 * jax.random.normal(ks[4], (2 * d_model, 2 * d_model), jnp.float32)
    wf2_t = 0.1 * jax.random.normal(ks[5], (d_model, 2 * d_model), jnp.float32)
    g1 = 1.0 + 0.1 * jax.random.normal(ks[6], (d_model,), jnp.float32)
    b1 = 0.1 * jax.random.normal(ks[7], (d_model,), jnp.float32)
    g2 = 1.0 + 0.1 * jax.random.normal(ks[8], (d_model,), jnp.float32)
    b2 = 0.1 * jax.random.normal(ks[9], (d_model,), jnp.float32)

    kparams = prepare_kernel_params(wq_t, wk_t, wv_t, wm_t, wf1_t, wf2_t,
                                    g1, b1, g2, b2, d_model, nhead)
    tparams = (wq_t, wk_t, wv_t, wm_t, wf1_t, wf2_t, g1, b1, g2, b2)

    # Inputs (NCHW, matching the PyTorch module signature).
    x0 = jax.random.normal(ks[10], (N, d_model, H, W), jnp.float32)
    x1 = jax.random.normal(ks[11], (N, d_model, H, W), jnp.float32)
    pos0 = jax.random.normal(ks[12], (N, d_pos, H, W), jnp.float32)
    pos1 = jax.random.normal(ks[13], (N, d_pos, H, W), jnp.float32)

    x0_new, x1_new = message_layer_ini_forward(x0, x1, pos0, pos1, kparams, nhead)
    x0_new = jax.block_until_ready(x0_new)
    x1_new = jax.block_until_ready(x1_new)

    # Correctness check against a pure-JAX f32 NCHW reference of the torch
    # module.  Kernel uses bf16 MXU operands + approx reciprocals, so the
    # absolute tolerance is slightly looser than a pure-f32 comparison.
    ref0 = _ref_update(x0, x1, pos1, tparams, nhead)
    ref1 = _ref_update(x1, x0, pos0, tparams, nhead)
    np.testing.assert_allclose(np.asarray(x0_new), np.asarray(ref0), rtol=5e-2, atol=1e-1)
    np.testing.assert_allclose(np.asarray(x1_new), np.asarray(ref1), rtol=5e-2, atol=1e-1)

    print("KERNEL_OK")
</pallas_src>

<mosaic_0001>
module attributes {stable_mosaic.version = 11 : i64} {
  func.func @_update_kernel(%arg0: i32, %arg1: memref<1x64x32xf32, #tpu.memory_space<vmem>>, %arg2: memref<1x64x32xf32, #tpu.memory_space<vmem>>, %arg3: memref<1x64x16xf32, #tpu.memory_space<vmem>>, %arg4: memref<4x32x8xbf16, #tpu.memory_space<vmem>>, %arg5: memref<4x32x8xbf16, #tpu.memory_space<vmem>>, %arg6: memref<4x32x8xbf16, #tpu.memory_space<vmem>>, %arg7: memref<4x16x8xbf16, #tpu.memory_space<vmem>>, %arg8: memref<4x8x32xbf16, #tpu.memory_space<vmem>>, %arg9: memref<32x64xbf16, #tpu.memory_space<vmem>>, %arg10: memref<32x64xbf16, #tpu.memory_space<vmem>>, %arg11: memref<64x32xbf16, #tpu.memory_space<vmem>>, %arg12: memref<1x32xf32, #tpu.memory_space<vmem>>, %arg13: memref<1x32xf32, #tpu.memory_space<vmem>>, %arg14: memref<1x32xf32, #tpu.memory_space<vmem>>, %arg15: memref<1x32xf32, #tpu.memory_space<vmem>>, %arg16: memref<1x64x32xf32, #tpu.memory_space<vmem>>) attributes {dimension_semantics = [#tpu.dimension_semantics<parallel>], iteration_bounds = array<i64: 4>, scalar_prefetch = 0 : i64, scratch_operands = 0 : i64, tpu.core_type = #tpu.core_type<tc>, window_params = [{transform_indices = @transform_0, window_bounds = array<i64: 1, 64, 32>}, {transform_indices = @transform_1, window_bounds = array<i64: 1, 64, 32>}, {transform_indices = @transform_2, window_bounds = array<i64: 1, 64, 16>}, {pipeline_mode = #tpu.pipeline_mode<synchronous>, transform_indices = @transform_3, window_bounds = array<i64: 4, 32, 8>}, {pipeline_mode = #tpu.pipeline_mode<synchronous>, transform_indices = @transform_4, window_bounds = array<i64: 4, 32, 8>}, {pipeline_mode = #tpu.pipeline_mode<synchronous>, transform_indices = @transform_5, window_bounds = array<i64: 4, 32, 8>}, {pipeline_mode = #tpu.pipeline_mode<synchronous>, transform_indices = @transform_6, window_bounds = array<i64: 4, 16, 8>}, {pipeline_mode = #tpu.pipeline_mode<synchronous>, transform_indices = @transform_7, window_bounds = array<i64: 4, 8, 32>}, {pipeline_mode = #tpu.pipeline_mode<synchronous>, transform_indices = @transform_8, window_bounds = array<i64: 32, 64>}, {pipeline_mode = #tpu.pipeline_mode<synchronous>, transform_indices = @transform_9, window_bounds = array<i64: 32, 64>}, {pipeline_mode = #tpu.pipeline_mode<synchronous>, transform_indices = @transform_10, window_bounds = array<i64: 64, 32>}, {pipeline_mode = #tpu.pipeline_mode<synchronous>, transform_indices = @transform_11, window_bounds = array<i64: 1, 32>}, {pipeline_mode = #tpu.pipeline_mode<synchronous>, transform_indices = @transform_12, window_bounds = array<i64: 1, 32>}, {pipeline_mode = #tpu.pipeline_mode<synchronous>, transform_indices = @transform_13, window_bounds = array<i64: 1, 32>}, {pipeline_mode = #tpu.pipeline_mode<synchronous>, transform_indices = @transform_14, window_bounds = array<i64: 1, 32>}, {transform_indices = @transform_15, window_bounds = array<i64: 1, 64, 32>}]} {
    %c0 = arith.constant 0 : index
    %c0_0 = arith.constant 0 : index
    %c0_1 = arith.constant 0 : index
    %0 = vector.load %arg1[%c0, %c0_0, %c0_1] : memref<1x64x32xf32, #tpu.memory_space<vmem>>, vector<1x64x32xf32>
    %1 = vector.shape_cast %0 : vector<1x64x32xf32> to vector<64x32xf32>
    %c0_2 = arith.constant 0 : index
    %c0_3 = arith.constant 0 : index
    %c0_4 = arith.constant 0 : index
    %2 = vector.load %arg2[%c0_2, %c0_3, %c0_4] : memref<1x64x32xf32, #tpu.memory_space<vmem>>, vector<1x64x32xf32>
    %3 = vector.shape_cast %2 : vector<1x64x32xf32> to vector<64x32xf32>
    %c0_5 = arith.constant 0 : index
    %c0_6 = arith.constant 0 : index
    %c0_7 = arith.constant 0 : index
    %4 = vector.load %arg3[%c0_5, %c0_6, %c0_7] : memref<1x64x16xf32, #tpu.memory_space<vmem>>, vector<1x64x16xf32>
    %5 = vector.shape_cast %4 : vector<1x64x16xf32> to vector<64x16xf32>
    %6 = arith.truncf %1 : vector<64x32xf32> to vector<64x32xbf16>
    %7 = arith.truncf %3 : vector<64x32xf32> to vector<64x32xbf16>
    %8 = arith.truncf %5 : vector<64x16xf32> to vector<64x16xbf16>
    %c0_8 = arith.constant 0 : index
    %c0_9 = arith.constant 0 : index
    %c0_10 = arith.constant 0 : index
    %9 = vector.load %arg4[%c0_8, %c0_9, %c0_10] : memref<4x32x8xbf16, #tpu.memory_space<vmem>>, vector<1x32x8xbf16>
    %10 = vector.shape_cast %9 : vector<1x32x8xbf16> to vector<32x8xbf16>
    %cst = arith.constant dense<0.000000e+00> : vector<64x8xf32>
    %11 = tpu.matmul %6, %10, %cst {dimension_numbers = #tpu.dot_dimension_numbers<[1], [0], [0], [1], [0, 0, 1, 1], [], []>} : vector<64x32xbf16>, vector<32x8xbf16>, vector<64x8xf32> -> vector<64x8xf32>
    %cst_11 = arith.constant 0.353553385 : f32
    %12 = vector.broadcast %cst_11 : f32 to vector<64x8xf32>
    %13 = arith.mulf %11, %12 : vector<64x8xf32>
    %c0_12 = arith.constant 0 : index
    %c0_13 = arith.constant 0 : index
    %c0_14 = arith.constant 0 : index
    %14 = vector.load %arg5[%c0_12, %c0_13, %c0_14] : memref<4x32x8xbf16, #tpu.memory_space<vmem>>, vector<1x32x8xbf16>
    %15 = vector.shape_cast %14 : vector<1x32x8xbf16> to vector<32x8xbf16>
    %cst_15 = arith.constant dense<0.000000e+00> : vector<64x8xf32>
    %16 = tpu.matmul %7, %15, %cst_15 {dimension_numbers = #tpu.dot_dimension_numbers<[1], [0], [0], [1], [0, 0, 1, 1], [], []>} : vector<64x32xbf16>, vector<32x8xbf16>, vector<64x8xf32> -> vector<64x8xf32>
    %c0_16 = arith.constant 0 : index
    %c0_17 = arith.constant 0 : index
    %c0_18 = arith.constant 0 : index
    %17 = vector.load %arg6[%c0_16, %c0_17, %c0_18] : memref<4x32x8xbf16, #tpu.memory_space<vmem>>, vector<1x32x8xbf16>
    %18 = vector.shape_cast %17 : vector<1x32x8xbf16> to vector<32x8xbf16>
    %cst_19 = arith.constant dense<0.000000e+00> : vector<64x8xf32>
    %19 = tpu.matmul %7, %18, %cst_19 {dimension_numbers = #tpu.dot_dimension_numbers<[1], [0], [0], [1], [0, 0, 1, 1], [], []>} : vector<64x32xbf16>, vector<32x8xbf16>, vector<64x8xf32> -> vector<64x8xf32>
    %c0_20 = arith.constant 0 : index
    %c0_21 = arith.constant 0 : index
    %c0_22 = arith.constant 0 : index
    %20 = vector.load %arg7[%c0_20, %c0_21, %c0_22] : memref<4x16x8xbf16, #tpu.memory_space<vmem>>, vector<1x16x8xbf16>
    %21 = vector.shape_cast %20 : vector<1x16x8xbf16> to vector<16x8xbf16>
    %cst_23 = arith.constant dense<0.000000e+00> : vector<64x8xf32>
    %22 = tpu.matmul %8, %21, %cst_23 {dimension_numbers = #tpu.dot_dimension_numbers<[1], [0], [0], [1], [0, 0, 1, 1], [], []>} : vector<64x16xbf16>, vector<16x8xbf16>, vector<64x8xf32> -> vector<64x8xf32>
    %23 = arith.addf %19, %22 : vector<64x8xf32>
    %24 = arith.truncf %23 : vector<64x8xf32> to vector<64x8xbf16>
    %25 = arith.truncf %13 : vector<64x8xf32> to vector<64x8xbf16>
    %26 = arith.truncf %16 : vector<64x8xf32> to vector<64x8xbf16>
    %cst_24 = arith.constant dense<0.000000e+00> : vector<64x64xf32>
    %27 = tpu.matmul %25, %26, %cst_24 {dimension_numbers = #tpu.dot_dimension_numbers<[1], [1], [0], [0], [0, 0, 1, 0], [], []>} : vector<64x8xbf16>, vector<64x8xbf16>, vector<64x64xf32> -> vector<64x64xf32>
    %c1 = arith.constant 1 : index
    %c0_25 = arith.constant 0 : index
    %c0_26 = arith.constant 0 : index
    %28 = vector.load %arg4[%c1, %c0_25, %c0_26] : memref<4x32x8xbf16, #tpu.memory_space<vmem>>, vector<1x32x8xbf16>
    %29 = vector.shape_cast %28 : vector<1x32x8xbf16> to vector<32x8xbf16>
    %cst_27 = arith.constant dense<0.000000e+00> : vector<64x8xf32>
    %30 = tpu.matmul %6, %29, %cst_27 {dimension_numbers = #tpu.dot_dimension_numbers<[1], [0], [0], [1], [0, 0, 1, 1], [], []>} : vector<64x32xbf16>, vector<32x8xbf16>, vector<64x8xf32> -> vector<64x8xf32>
    %cst_28 = arith.constant 0.353553385 : f32
    %31 = vector.broadcast %cst_28 : f32 to vector<64x8xf32>
    %32 = arith.mulf %30, %31 : vector<64x8xf32>
    %c1_29 = arith.constant 1 : index
    %c0_30 = arith.constant 0 : index
    %c0_31 = arith.constant 0 : index
    %33 = vector.load %arg5[%c1_29, %c0_30, %c0_31] : memref<4x32x8xbf16, #tpu.memory_space<vmem>>, vector<1x32x8xbf16>
    %34 = vector.shape_cast %33 : vector<1x32x8xbf16> to vector<32x8xbf16>
    %cst_32 = arith.constant dense<0.000000e+00> : vector<64x8xf32>
    %35 = tpu.matmul %7, %34, %cst_32 {dimension_numbers = #tpu.dot_dimension_numbers<[1], [0], [0], [1], [0, 0, 1, 1], [], []>} : vector<64x32xbf16>, vector<32x8xbf16>, vector<64x8xf32> -> vector<64x8xf32>
    %c1_33 = arith.constant 1 : index
    %c0_34 = arith.constant 0 : index
    %c0_35 = arith.constant 0 : index
    %36 = vector.load %arg6[%c1_33, %c0_34, %c0_35] : memref<4x32x8xbf16, #tpu.memory_space<vmem>>, vector<1x32x8xbf16>
    %37 = vector.shape_cast %36 : vector<1x32x8xbf16> to vector<32x8xbf16>
    %cst_36 = arith.constant dense<0.000000e+00> : vector<64x8xf32>
    %38 = tpu.matmul %7, %37, %cst_36 {dimension_numbers = #tpu.dot_dimension_numbers<[1], [0], [0], [1], [0, 0, 1, 1], [], []>} : vector<64x32xbf16>, vector<32x8xbf16>, vector<64x8xf32> -> vector<64x8xf32>
    %c1_37 = arith.constant 1 : index
    %c0_38 = arith.constant 0 : index
    %c0_39 = arith.constant 0 : index
    %39 = vector.load %arg7[%c1_37, %c0_38, %c0_39] : memref<4x16x8xbf16, #tpu.memory_space<vmem>>, vector<1x16x8xbf16>
    %40 = vector.shape_cast %39 : vector<1x16x8xbf16> to vector<16x8xbf16>
    %cst_40 = arith.constant dense<0.000000e+00> : vector<64x8xf32>
    %41 = tpu.matmul %8, %40, %cst_40 {dimension_numbers = #tpu.dot_dimension_numbers<[1], [0], [0], [1], [0, 0, 1, 1], [], []>} : vector<64x16xbf16>, vector<16x8xbf16>, vector<64x8xf32> -> vector<64x8xf32>
    %42 = arith.addf %38, %41 : vector<64x8xf32>
    %43 = arith.truncf %42 : vector<64x8xf32> to vector<64x8xbf16>
    %44 = arith.truncf %32 : vector<64x8xf32> to vector<64x8xbf16>
    %45 = arith.truncf %35 : vector<64x8xf32> to vector<64x8xbf16>
    %cst_41 = arith.constant dense<0.000000e+00> : vector<64x64xf32>
    %46 = tpu.matmul %44, %45, %cst_41 {dimension_numbers = #tpu.dot_dimension_numbers<[1], [1], [0], [0], [0, 0, 1, 0], [], []>} : vector<64x8xbf16>, vector<64x8xbf16>, vector<64x64xf32> -> vector<64x64xf32>
    %c2 = arith.constant 2 : index
    %c0_42 = arith.constant 0 : index
    %c0_43 = arith.constant 0 : index
    %47 = vector.load %arg4[%c2, %c0_42, %c0_43] : memref<4x32x8xbf16, #tpu.memory_space<vmem>>, vector<1x32x8xbf16>
    %48 = vector.shape_cast %47 : vector<1x32x8xbf16> to vector<32x8xbf16>
    %cst_44 = arith.constant dense<0.000000e+00> : vector<64x8xf32>
    %49 = tpu.matmul %6, %48, %cst_44 {dimension_numbers = #tpu.dot_dimension_numbers<[1], [0], [0], [1], [0, 0, 1, 1], [], []>} : vector<64x32xbf16>, vector<32x8xbf16>, vector<64x8xf32> -> vector<64x8xf32>
    %cst_45 = arith.constant 0.353553385 : f32
    %50 = vector.broadcast %cst_45 : f32 to vector<64x8xf32>
    %51 = arith.mulf %49, %50 : vector<64x8xf32>
    %c2_46 = arith.constant 2 : index
    %c0_47 = arith.constant 0 : index
    %c0_48 = arith.constant 0 : index
    %52 = vector.load %arg5[%c2_46, %c0_47, %c0_48] : memref<4x32x8xbf16, #tpu.memory_space<vmem>>, vector<1x32x8xbf16>
    %53 = vector.shape_cast %52 : vector<1x32x8xbf16> to vector<32x8xbf16>
    %cst_49 = arith.constant dense<0.000000e+00> : vector<64x8xf32>
    %54 = tpu.matmul %7, %53, %cst_49 {dimension_numbers = #tpu.dot_dimension_numbers<[1], [0], [0], [1], [0, 0, 1, 1], [], []>} : vector<64x32xbf16>, vector<32x8xbf16>, vector<64x8xf32> -> vector<64x8xf32>
    %c2_50 = arith.constant 2 : index
    %c0_51 = arith.constant 0 : index
    %c0_52 = arith.constant 0 : index
    %55 = vector.load %arg6[%c2_50, %c0_51, %c0_52] : memref<4x32x8xbf16, #tpu.memory_space<vmem>>, vector<1x32x8xbf16>
    %56 = vector.shape_cast %55 : vector<1x32x8xbf16> to vector<32x8xbf16>
    %cst_53 = arith.constant dense<0.000000e+00> : vector<64x8xf32>
    %57 = tpu.matmul %7, %56, %cst_53 {dimension_numbers = #tpu.dot_dimension_numbers<[1], [0], [0], [1], [0, 0, 1, 1], [], []>} : vector<64x32xbf16>, vector<32x8xbf16>, vector<64x8xf32> -> vector<64x8xf32>
    %c2_54 = arith.constant 2 : index
    %c0_55 = arith.constant 0 : index
    %c0_56 = arith.constant 0 : index
    %58 = vector.load %arg7[%c2_54, %c0_55, %c0_56] : memref<4x16x8xbf16, #tpu.memory_space<vmem>>, vector<1x16x8xbf16>
    %59 = vector.shape_cast %58 : vector<1x16x8xbf16> to vector<16x8xbf16>
    %cst_57 = arith.constant dense<0.000000e+00> : vector<64x8xf32>
    %60 = tpu.matmul %8, %59, %cst_57 {dimension_numbers = #tpu.dot_dimension_numbers<[1], [0], [0], [1], [0, 0, 1, 1], [], []>} : vector<64x16xbf16>, vector<16x8xbf16>, vector<64x8xf32> -> vector<64x8xf32>
    %61 = arith.addf %57, %60 : vector<64x8xf32>
    %62 = arith.truncf %61 : vector<64x8xf32> to vector<64x8xbf16>
    %63 = arith.truncf %51 : vector<64x8xf32> to vector<64x8xbf16>
    %64 = arith.truncf %54 : vector<64x8xf32> to vector<64x8xbf16>
    %cst_58 = arith.constant dense<0.000000e+00> : vector<64x64xf32>
    %65 = tpu.matmul %63, %64, %cst_58 {dimension_numbers = #tpu.dot_dimension_numbers<[1], [1], [0], [0], [0, 0, 1, 0], [], []>} : vector<64x8xbf16>, vector<64x8xbf16>, vector<64x64xf32> -> vector<64x64xf32>
    %c3 = arith.constant 3 : index
    %c0_59 = arith.constant 0 : index
    %c0_60 = arith.constant 0 : index
    %66 = vector.load %arg4[%c3, %c0_59, %c0_60] : memref<4x32x8xbf16, #tpu.memory_space<vmem>>, vector<1x32x8xbf16>
    %67 = vector.shape_cast %66 : vector<1x32x8xbf16> to vector<32x8xbf16>
    %cst_61 = arith.constant dense<0.000000e+00> : vector<64x8xf32>
    %68 = tpu.matmul %6, %67, %cst_61 {dimension_numbers = #tpu.dot_dimension_numbers<[1], [0], [0], [1], [0, 0, 1, 1], [], []>} : vector<64x32xbf16>, vector<32x8xbf16>, vector<64x8xf32> -> vector<64x8xf32>
    %cst_62 = arith.constant 0.353553385 : f32
    %69 = vector.broadcast %cst_62 : f32 to vector<64x8xf32>
    %70 = arith.mulf %68, %69 : vector<64x8xf32>
    %c3_63 = arith.constant 3 : index
    %c0_64 = arith.constant 0 : index
    %c0_65 = arith.constant 0 : index
    %71 = vector.load %arg5[%c3_63, %c0_64, %c0_65] : memref<4x32x8xbf16, #tpu.memory_space<vmem>>, vector<1x32x8xbf16>
    %72 = vector.shape_cast %71 : vector<1x32x8xbf16> to vector<32x8xbf16>
    %cst_66 = arith.constant dense<0.000000e+00> : vector<64x8xf32>
    %73 = tpu.matmul %7, %72, %cst_66 {dimension_numbers = #tpu.dot_dimension_numbers<[1], [0], [0], [1], [0, 0, 1, 1], [], []>} : vector<64x32xbf16>, vector<32x8xbf16>, vector<64x8xf32> -> vector<64x8xf32>
    %c3_67 = arith.constant 3 : index
    %c0_68 = arith.constant 0 : index
    %c0_69 = arith.constant 0 : index
    %74 = vector.load %arg6[%c3_67, %c0_68, %c0_69] : memref<4x32x8xbf16, #tpu.memory_space<vmem>>, vector<1x32x8xbf16>
    %75 = vector.shape_cast %74 : vector<1x32x8xbf16> to vector<32x8xbf16>
    %cst_70 = arith.constant dense<0.000000e+00> : vector<64x8xf32>
    %76 = tpu.matmul %7, %75, %cst_70 {dimension_numbers = #tpu.dot_dimension_numbers<[1], [0], [0], [1], [0, 0, 1, 1], [], []>} : vector<64x32xbf16>, vector<32x8xbf16>, vector<64x8xf32> -> vector<64x8xf32>
    %c3_71 = arith.constant 3 : index
    %c0_72 = arith.constant 0 : index
    %c0_73 = arith.constant 0 : index
    %77 = vector.load %arg7[%c3_71, %c0_72, %c0_73] : memref<4x16x8xbf16, #tpu.memory_space<vmem>>, vector<1x16x8xbf16>
    %78 = vector.shape_cast %77 : vector<1x16x8xbf16> to vector<16x8xbf16>
    %cst_74 = arith.constant dense<0.000000e+00> : vector<64x8xf32>
    %79 = tpu.matmul %8, %78, %cst_74 {dimension_numbers = #tpu.dot_dimension_numbers<[1], [0], [0], [1], [0, 0, 1, 1], [], []>} : vector<64x16xbf16>, vector<16x8xbf16>, vector<64x8xf32> -> vector<64x8xf32>
    %80 = arith.addf %76, %79 : vector<64x8xf32>
    %81 = arith.truncf %80 : vector<64x8xf32> to vector<64x8xbf16>
    %82 = arith.truncf %70 : vector<64x8xf32> to vector<64x8xbf16>
    %83 = arith.truncf %73 : vector<64x8xf32> to vector<64x8xbf16>
    %cst_75 = arith.constant dense<0.000000e+00> : vector<64x64xf32>
    %84 = tpu.matmul %82, %83, %cst_75 {dimension_numbers = #tpu.dot_dimension_numbers<[1], [1], [0], [0], [0, 0, 1, 0], [], []>} : vector<64x8xbf16>, vector<64x8xbf16>, vector<64x64xf32> -> vector<64x64xf32>
    %85 = tpu.concatenate %27, %46, %65, %84 in 0 : vector<64x64xf32>, vector<64x64xf32>, vector<64x64xf32>, vector<64x64xf32> -> vector<256x64xf32>
    %cst_76 = arith.constant dense<0xFF800000> : vector<256xf32>
    %86 = vector.multi_reduction <maximumf>, %85, %cst_76 [1] : vector<256x64xf32> to vector<256xf32>
    %87 = vector.shape_cast %86 : vector<256xf32> to vector<256x1xf32>
    %88 = vector.broadcast %87 : vector<256x1xf32> to vector<256x64xf32>
    %89 = arith.subf %85, %88 : vector<256x64xf32>
    %90 = math.exp %89 : vector<256x64xf32>
    %cst_77 = arith.constant dense<0.000000e+00> : vector<256xf32>
    %91 = vector.multi_reduction <add>, %90, %cst_77 [1] : vector<256x64xf32> to vector<256xf32>
    %92 = vector.shape_cast %91 : vector<256xf32> to vector<256x1xf32>
    %93 = tpu.reciprocal %92 {approx = true} : vector<256x1xf32> -> vector<256x1xf32>
    %94 = vector.broadcast %93 : vector<256x1xf32> to vector<256x64xf32>
    %95 = arith.mulf %90, %94 : vector<256x64xf32>
    %96 = arith.truncf %95 : vector<256x64xf32> to vector<256x64xbf16>
    %cst_78 = arith.constant 0.000000e+00 : f32
    %97 = vector.broadcast %cst_78 : f32 to vector<64x32xf32>
    %98 = vector.extract_strided_slice %96 {offsets = [0, 0], sizes = [64, 64], strides = [1, 1]} : vector<256x64xbf16> to vector<64x64xbf16>
    %cst_79 = arith.constant dense<0.000000e+00> : vector<64x8xf32>
    %99 = tpu.matmul %98, %24, %cst_79 {dimension_numbers = #tpu.dot_dimension_numbers<[1], [0], [0], [1], [0, 0, 1, 1], [], []>} : vector<64x64xbf16>, vector<64x8xbf16>, vector<64x8xf32> -> vector<64x8xf32>
    %100 = arith.truncf %99 : vector<64x8xf32> to vector<64x8xbf16>
    %c0_80 = arith.constant 0 : index
    %c0_81 = arith.constant 0 : index
    %c0_82 = arith.constant 0 : index
    %101 = vector.load %arg8[%c0_80, %c0_81, %c0_82] : memref<4x8x32xbf16, #tpu.memory_space<vmem>>, vector<1x8x32xbf16>
    %102 = vector.shape_cast %101 : vector<1x8x32xbf16> to vector<8x32xbf16>
    %cst_83 = arith.constant dense<0.000000e+00> : vector<64x32xf32>
    %103 = tpu.matmul %100, %102, %cst_83 {dimension_numbers = #tpu.dot_dimension_numbers<[1], [0], [0], [1], [0, 0, 1, 1], [], []>} : vector<64x8xbf16>, vector<8x32xbf16>, vector<64x32xf32> -> vector<64x32xf32>
    %104 = arith.addf %97, %103 : vector<64x32xf32>
    %105 = vector.extract_strided_slice %96 {offsets = [64, 0], sizes = [64, 64], strides = [1, 1]} : vector<256x64xbf16> to vector<64x64xbf16>
    %cst_84 = arith.constant dense<0.000000e+00> : vector<64x8xf32>
    %106 = tpu.matmul %105, %43, %cst_84 {dimension_numbers = #tpu.dot_dimension_numbers<[1], [0], [0], [1], [0, 0, 1, 1], [], []>} : vector<64x64xbf16>, vector<64x8xbf16>, vector<64x8xf32> -> vector<64x8xf32>
    %107 = arith.truncf %106 : vector<64x8xf32> to vector<64x8xbf16>
    %c1_85 = arith.constant 1 : index
    %c0_86 = arith.constant 0 : index
    %c0_87 = arith.constant 0 : index
    %108 = vector.load %arg8[%c1_85, %c0_86, %c0_87] : memref<4x8x32xbf16, #tpu.memory_space<vmem>>, vector<1x8x32xbf16>
    %109 = vector.shape_cast %108 : vector<1x8x32xbf16> to vector<8x32xbf16>
    %cst_88 = arith.constant dense<0.000000e+00> : vector<64x32xf32>
    %110 = tpu.matmul %107, %109, %cst_88 {dimension_numbers = #tpu.dot_dimension_numbers<[1], [0], [0], [1], [0, 0, 1, 1], [], []>} : vector<64x8xbf16>, vector<8x32xbf16>, vector<64x32xf32> -> vector<64x32xf32>
    %111 = arith.addf %104, %110 : vector<64x32xf32>
    %112 = vector.extract_strided_slice %96 {offsets = [128, 0], sizes = [64, 64], strides = [1, 1]} : vector<256x64xbf16> to vector<64x64xbf16>
    %cst_89 = arith.constant dense<0.000000e+00> : vector<64x8xf32>
    %113 = tpu.matmul %112, %62, %cst_89 {dimension_numbers = #tpu.dot_dimension_numbers<[1], [0], [0], [1], [0, 0, 1, 1], [], []>} : vector<64x64xbf16>, vector<64x8xbf16>, vector<64x8xf32> -> vector<64x8xf32>
    %114 = arith.truncf %113 : vector<64x8xf32> to vector<64x8xbf16>
    %c2_90 = arith.constant 2 : index
    %c0_91 = arith.constant 0 : index
    %c0_92 = arith.constant 0 : index
    %115 = vector.load %arg8[%c2_90, %c0_91, %c0_92] : memref<4x8x32xbf16, #tpu.memory_space<vmem>>, vector<1x8x32xbf16>
    %116 = vector.shape_cast %115 : vector<1x8x32xbf16> to vector<8x32xbf16>
    %cst_93 = arith.constant dense<0.000000e+00> : vector<64x32xf32>
    %117 = tpu.matmul %114, %116, %cst_93 {dimension_numbers = #tpu.dot_dimension_numbers<[1], [0], [0], [1], [0, 0, 1, 1], [], []>} : vector<64x8xbf16>, vector<8x32xbf16>, vector<64x32xf32> -> vector<64x32xf32>
    %118 = arith.addf %111, %117 : vector<64x32xf32>
    %119 = vector.extract_strided_slice %96 {offsets = [192, 0], sizes = [64, 64], strides = [1, 1]} : vector<256x64xbf16> to vector<64x64xbf16>
    %cst_94 = arith.constant dense<0.000000e+00> : vector<64x8xf32>
    %120 = tpu.matmul %119, %81, %cst_94 {dimension_numbers = #tpu.dot_dimension_numbers<[1], [0], [0], [1], [0, 0, 1, 1], [], []>} : vector<64x64xbf16>, vector<64x8xbf16>, vector<64x8xf32> -> vector<64x8xf32>
    %121 = arith.truncf %120 : vector<64x8xf32> to vector<64x8xbf16>
    %c3_95 = arith.constant 3 : index
    %c0_96 = arith.constant 0 : index
    %c0_97 = arith.constant 0 : index
    %122 = vector.load %arg8[%c3_95, %c0_96, %c0_97] : memref<4x8x32xbf16, #tpu.memory_space<vmem>>, vector<1x8x32xbf16>
    %123 = vector.shape_cast %122 : vector<1x8x32xbf16> to vector<8x32xbf16>
    %cst_98 = arith.constant dense<0.000000e+00> : vector<64x32xf32>
    %124 = tpu.matmul %121, %123, %cst_98 {dimension_numbers = #tpu.dot_dimension_numbers<[1], [0], [0], [1], [0, 0, 1, 1], [], []>} : vector<64x8xbf16>, vector<8x32xbf16>, vector<64x32xf32> -> vector<64x32xf32>
    %125 = arith.addf %118, %124 : vector<64x32xf32>
    %c0_99 = arith.constant 0 : index
    %c0_100 = arith.constant 0 : index
    %126 = vector.load %arg12[%c0_99, %c0_100] : memref<1x32xf32, #tpu.memory_space<vmem>>, vector<1x32xf32>
    %c0_101 = arith.constant 0 : index
    %c0_102 = arith.constant 0 : index
    %127 = vector.load %arg13[%c0_101, %c0_102] : memref<1x32xf32, #tpu.memory_space<vmem>>, vector<1x32xf32>
    %cst_103 = arith.constant dense<0.000000e+00> : vector<64xf32>
    %128 = vector.multi_reduction <add>, %125, %cst_103 [1] : vector<64x32xf32> to vector<64xf32>
    %129 = vector.shape_cast %128 : vector<64xf32> to vector<64x1xf32>
    %cst_104 = arith.constant 3.200000e+01 : f32
    %130 = vector.broadcast %cst_104 : f32 to vector<64x1xf32>
    %131 = arith.divf %129, %130 : vector<64x1xf32>
    %132 = vector.broadcast %131 : vector<64x1xf32> to vector<64x32xf32>
    %133 = arith.subf %125, %132 : vector<64x32xf32>
    %134 = arith.mulf %133, %133 : vector<64x32xf32>
    %cst_105 = arith.constant dense<0.000000e+00> : vector<64xf32>
    %135 = vector.multi_reduction <add>, %134, %cst_105 [1] : vector<64x32xf32> to vector<64xf32>
    %136 = vector.shape_cast %135 : vector<64xf32> to vector<64x1xf32>
    %cst_106 = arith.constant 0.0322580636 : f32
    %137 = vector.broadcast %cst_106 : f32 to vector<64x1xf32>
    %138 = arith.mulf %136, %137 : vector<64x1xf32>
    %139 = math.sqrt %138 : vector<64x1xf32>
    %cst_107 = arith.constant 9.99999997E-7 : f32
    %140 = vector.broadcast %cst_107 : f32 to vector<64x1xf32>
    %141 = arith.addf %139, %140 : vector<64x1xf32>
    %142 = tpu.reciprocal %141 {approx = true} : vector<64x1xf32> -> vector<64x1xf32>
    %143 = vector.broadcast %142 : vector<64x1xf32> to vector<64x32xf32>
    %144 = arith.mulf %133, %143 : vector<64x32xf32>
    %145 = vector.broadcast %126 : vector<1x32xf32> to vector<64x32xf32>
    %146 = arith.mulf %145, %144 : vector<64x32xf32>
    %147 = vector.broadcast %127 : vector<1x32xf32> to vector<64x32xf32>
    %148 = arith.addf %146, %147 : vector<64x32xf32>
    %c0_108 = arith.constant 0 : index
    %c0_109 = arith.constant 0 : index
    %149 = vector.load %arg9[%c0_108, %c0_109] : memref<32x64xbf16, #tpu.memory_space<vmem>>, vector<32x64xbf16>
    %cst_110 = arith.constant dense<0.000000e+00> : vector<64x64xf32>
    %150 = tpu.matmul %6, %149, %cst_110 {dimension_numbers = #tpu.dot_dimension_numbers<[1], [0], [0], [1], [0, 0, 1, 1], [], []>} : vector<64x32xbf16>, vector<32x64xbf16>, vector<64x64xf32> -> vector<64x64xf32>
    %151 = arith.truncf %148 : vector<64x32xf32> to vector<64x32xbf16>
    %c0_111 = arith.constant 0 : index
    %c0_112 = arith.constant 0 : index
    %152 = vector.load %arg10[%c0_111, %c0_112] : memref<32x64xbf16, #tpu.memory_space<vmem>>, vector<32x64xbf16>
    %cst_113 = arith.constant dense<0.000000e+00> : vector<64x64xf32>
    %153 = tpu.matmul %151, %152, %cst_113 {dimension_numbers = #tpu.dot_dimension_numbers<[1], [0], [0], [1], [0, 0, 1, 1], [], []>} : vector<64x32xbf16>, vector<32x64xbf16>, vector<64x64xf32> -> vector<64x64xf32>
    %154 = arith.addf %150, %153 : vector<64x64xf32>
    %cst_114 = arith.constant 0.000000e+00 : f32
    %155 = vector.broadcast %cst_114 : f32 to vector<64x64xf32>
    %156 = arith.maximumf %154, %155 : vector<64x64xf32>
    %157 = arith.truncf %156 : vector<64x64xf32> to vector<64x64xbf16>
    %c0_115 = arith.constant 0 : index
    %c0_116 = arith.constant 0 : index
    %158 = vector.load %arg11[%c0_115, %c0_116] : memref<64x32xbf16, #tpu.memory_space<vmem>>, vector<64x32xbf16>
    %cst_117 = arith.constant dense<0.000000e+00> : vector<64x32xf32>
    %159 = tpu.matmul %157, %158, %cst_117 {dimension_numbers = #tpu.dot_dimension_numbers<[1], [0], [0], [1], [0, 0, 1, 1], [], []>} : vector<64x64xbf16>, vector<64x32xbf16>, vector<64x32xf32> -> vector<64x32xf32>
    %c0_118 = arith.constant 0 : index
    %c0_119 = arith.constant 0 : index
    %160 = vector.load %arg14[%c0_118, %c0_119] : memref<1x32xf32, #tpu.memory_space<vmem>>, vector<1x32xf32>
    %c0_120 = arith.constant 0 : index
    %c0_121 = arith.constant 0 : index
    %161 = vector.load %arg15[%c0_120, %c0_121] : memref<1x32xf32, #tpu.memory_space<vmem>>, vector<1x32xf32>
    %cst_122 = arith.constant dense<0.000000e+00> : vector<64xf32>
    %162 = vector.multi_reduction <add>, %159, %cst_122 [1] : vector<64x32xf32> to vector<64xf32>
    %163 = vector.shape_cast %162 : vector<64xf32> to vector<64x1xf32>
    %cst_123 = arith.constant 3.200000e+01 : f32
    %164 = vector.broadcast %cst_123 : f32 to vector<64x1xf32>
    %165 = arith.divf %163, %164 : vector<64x1xf32>
    %166 = vector.broadcast %165 : vector<64x1xf32> to vector<64x32xf32>
    %167 = arith.subf %159, %166 : vector<64x32xf32>
    %168 = arith.mulf %167, %167 : vector<64x32xf32>
    %cst_124 = arith.constant dense<0.000000e+00> : vector<64xf32>
    %169 = vector.multi_reduction <add>, %168, %cst_124 [1] : vector<64x32xf32> to vector<64xf32>
    %170 = vector.shape_cast %169 : vector<64xf32> to vector<64x1xf32>
    %cst_125 = arith.constant 0.0322580636 : f32
    %171 = vector.broadcast %cst_125 : f32 to vector<64x1xf32>
    %172 = arith.mulf %170, %171 : vector<64x1xf32>
    %173 = math.sqrt %172 : vector<64x1xf32>
    %cst_126 = arith.constant 9.99999997E-7 : f32
    %174 = vector.broadcast %cst_126 : f32 to vector<64x1xf32>
    %175 = arith.addf %173, %174 : vector<64x1xf32>
    %176 = tpu.reciprocal %175 {approx = true} : vector<64x1xf32> -> vector<64x1xf32>
    %177 = vector.broadcast %176 : vector<64x1xf32> to vector<64x32xf32>
    %178 = arith.mulf %167, %177 : vector<64x32xf32>
    %179 = vector.broadcast %160 : vector<1x32xf32> to vector<64x32xf32>
    %180 = arith.mulf %179, %178 : vector<64x32xf32>
    %181 = vector.broadcast %161 : vector<1x32xf32> to vector<64x32xf32>
    %182 = arith.addf %180, %181 : vector<64x32xf32>
    %183 = arith.addf %1, %182 : vector<64x32xf32>
    %c0_127 = arith.constant 0 : index
    %c0_128 = arith.constant 0 : index
    %c0_129 = arith.constant 0 : index
    %184 = vector.load %arg16[%c0_127, %c0_128, %c0_129] : memref<1x64x32xf32, #tpu.memory_space<vmem>>, vector<1x64x32xf32>
    %185 = vector.shape_cast %184 : vector<1x64x32xf32> to vector<64x32xf32>
    %186 = vector.shape_cast %183 : vector<64x32xf32> to vector<1x64x32xf32>
    tpu.vector_store %arg16[%c0_127, %c0_128, %c0_129], %186 {strides = array<i32>} : memref<1x64x32xf32, #tpu.memory_space<vmem>>, vector<1x64x32xf32>,
    return
  }
  func.func @transform_0(%arg0: i32) -> (i32, i32, i32) {
    %c0_i32 = arith.constant 0 : i32
    %c0_i32_0 = arith.constant 0 : i32
    %c0_i32_1 = arith.constant 0 : i32
    return %arg0, %c0_i32, %c0_i32_0 : i32, i32, i32
  }
  func.func @transform_1(%arg0: i32) -> (i32, i32, i32) {
    %c2_i32 = arith.constant 2 : i32
    %0 = arith.addi %arg0, %c2_i32 : i32
    %c4_i32 = arith.constant 4 : i32
    %c0_i32 = arith.constant 0 : i32
    %1 = arith.cmpi eq, %c4_i32, %c0_i32 : i32
    %c1_i32 = arith.constant 1 : i32
    %2 = arith.select %1, %c1_i32, %c4_i32 : i32
    %3 = arith.remsi %0, %2 : i32
    %c0_i32_0 = arith.constant 0 : i32
    %4 = arith.cmpi ne, %3, %c0_i32_0 : i32
    %c0_i32_1 = arith.constant 0 : i32
    %5 = arith.cmpi slt, %3, %c0_i32_1 : i32
    %c0_i32_2 = arith.constant 0 : i32
    %6 = arith.cmpi slt, %2, %c0_i32_2 : i32
    %7 = arith.xori %5, %6 : i1
    %8 = arith.andi %7, %4 : i1
    %9 = arith.addi %3, %2 : i32
    %10 = arith.select %8, %9, %3 : i32
    %c0_i32_3 = arith.constant 0 : i32
    %c0_i32_4 = arith.constant 0 : i32
    %c0_i32_5 = arith.constant 0 : i32
    return %10, %c0_i32_3, %c0_i32_4 : i32, i32, i32
  }
  func.func @transform_2(%arg0: i32) -> (i32, i32, i32) {
    %c0_i32 = arith.constant 0 : i32
    %c0_i32_0 = arith.constant 0 : i32
    %c0_i32_1 = arith.constant 0 : i32
    return %arg0, %c0_i32, %c0_i32_0 : i32, i32, i32
  }
  func.func @transform_3(%arg0: i32) -> (i32, i32, i32) {
    %c0_i32 = arith.constant 0 : i32
    %c0_i32_0 = arith.constant 0 : i32
    %c0_i32_1 = arith.constant 0 : i32
    %c0_i32_2 = arith.constant 0 : i32
    return %c0_i32, %c0_i32_0, %c0_i32_1 : i32, i32, i32
  }
  func.func @transform_4(%arg0: i32) -> (i32, i32, i32) {
    %c0_i32 = arith.constant 0 : i32
    %c0_i32_0 = arith.constant 0 : i32
    %c0_i32_1 = arith.constant 0 : i32
    %c0_i32_2 = arith.constant 0 : i32
    return %c0_i32, %c0_i32_0, %c0_i32_1 : i32, i32, i32
  }
  func.func @transform_5(%arg0: i32) -> (i32, i32, i32) {
    %c0_i32 = arith.constant 0 : i32
    %c0_i32_0 = arith.constant 0 : i32
    %c0_i32_1 = arith.constant 0 : i32
    %c0_i32_2 = arith.constant 0 : i32
    return %c0_i32, %c0_i32_0, %c0_i32_1 : i32, i32, i32
  }
  func.func @transform_6(%arg0: i32) -> (i32, i32, i32) {
    %c0_i32 = arith.constant 0 : i32
    %c0_i32_0 = arith.constant 0 : i32
    %c0_i32_1 = arith.constant 0 : i32
    %c0_i32_2 = arith.constant 0 : i32
    return %c0_i32, %c0_i32_0, %c0_i32_1 : i32, i32, i32
  }
  func.func @transform_7(%arg0: i32) -> (i32, i32, i32) {
    %c0_i32 = arith.constant 0 : i32
    %c0_i32_0 = arith.constant 0 : i32
    %c0_i32_1 = arith.constant 0 : i32
    %c0_i32_2 = arith.constant 0 : i32
    return %c0_i32, %c0_i32_0, %c0_i32_1 : i32, i32, i32
  }
  func.func @transform_8(%arg0: i32) -> (i32, i32) {
    %c0_i32 = arith.constant 0 : i32
    %c0_i32_0 = arith.constant 0 : i32
    %c0_i32_1 = arith.constant 0 : i32
    return %c0_i32, %c0_i32_0 : i32, i32
  }
  func.func @transform_9(%arg0: i32) -> (i32, i32) {
    %c0_i32 = arith.constant 0 : i32
    %c0_i32_0 = arith.constant 0 : i32
    %c0_i32_1 = arith.constant 0 : i32
    return %c0_i32, %c0_i32_0 : i32, i32
  }
  func.func @transform_10(%arg0: i32) -> (i32, i32) {
    %c0_i32 = arith.constant 0 : i32
    %c0_i32_0 = arith.constant 0 : i32
    %c0_i32_1 = arith.constant 0 : i32
    return %c0_i32, %c0_i32_0 : i32, i32
  }
  func.func @transform_11(%arg0: i32) -> (i32, i32) {
    %c0_i32 = arith.constant 0 : i32
    %c0_i32_0 = arith.constant 0 : i32
    %c0_i32_1 = arith.constant 0 : i32
    return %c0_i32, %c0_i32_0 : i32, i32
  }
  func.func @transform_12(%arg0: i32) -> (i32, i32) {
    %c0_i32 = arith.constant 0 : i32
    %c0_i32_0 = arith.constant 0 : i32
    %c0_i32_1 = arith.constant 0 : i32
    return %c0_i32, %c0_i32_0 : i32, i32
  }
  func.func @transform_13(%arg0: i32) -> (i32, i32) {
    %c0_i32 = arith.constant 0 : i32
    %c0_i32_0 = arith.constant 0 : i32
    %c0_i32_1 = arith.constant 0 : i32
    return %c0_i32, %c0_i32_0 : i32, i32
  }
  func.func @transform_14(%arg0: i32) -> (i32, i32) {
    %c0_i32 = arith.constant 0 : i32
    %c0_i32_0 = arith.constant 0 : i32
    %c0_i32_1 = arith.constant 0 : i32
    return %c0_i32, %c0_i32_0 : i32, i32
  }
  func.func @transform_15(%arg0: i32) -> (i32, i32, i32) {
    %c0_i32 = arith.constant 0 : i32
    %c0_i32_0 = arith.constant 0 : i32
    %c0_i32_1 = arith.constant 0 : i32
    return %arg0, %c0_i32, %c0_i32_0 : i32, i32, i32
  }
}

</mosaic_0001>

<llo_original>
// kernel: message_layer_ini_forward.1
$region0: #{message_layer_ini_forward.1}
  #allocation0 [shape = 'u32[]', space=smem, size = 0x4, offset = 0x4, fixed_abs, tag = 'smem constant byte address 0x4 - core index']
  #allocation1 [shape = 'u32[144,128]{1,0:T(1,128)}', space=vmem, size = 0x12000, scoped, tag = 'internal scratch']
  %s0 = inlined_call_operand.vmem [shape: f32[4,64,32], index: 0, kind: input, shape index: {}, may-alias: {0,1}]
  %s1 = inlined_call_operand.vmem [shape: f32[4,64,32], index: 1, kind: input, shape index: {}, may-alias: {0,1}]
  %s2 = inlined_call_operand.vmem [shape: f32[4,64,16], index: 2, kind: input, shape index: {}]
  %s3 = inlined_call_operand.vmem [shape: bf16[4,32,8], index: 3, kind: input, shape index: {}]
  %s4 = inlined_call_operand.vmem [shape: bf16[4,32,8], index: 4, kind: input, shape index: {}]
  %s5 = inlined_call_operand.vmem [shape: bf16[4,32,8], index: 5, kind: input, shape index: {}]
  %s6 = inlined_call_operand.vmem [shape: bf16[4,16,8], index: 6, kind: input, shape index: {}]
  %s7 = inlined_call_operand.vmem [shape: bf16[4,8,32], index: 7, kind: input, shape index: {}]
  %s8 = inlined_call_operand.vmem [shape: bf16[32,64], index: 8, kind: input, shape index: {}]
  %s9 = inlined_call_operand.vmem [shape: bf16[32,64], index: 9, kind: input, shape index: {}]
  %s10 = inlined_call_operand.vmem [shape: bf16[64,32], index: 10, kind: input, shape index: {}]
  %s11 = inlined_call_operand.vmem [shape: f32[1,32], index: 11, kind: input, shape index: {}]
  %s12 = inlined_call_operand.vmem [shape: f32[1,32], index: 12, kind: input, shape index: {}]
  %s13 = inlined_call_operand.vmem [shape: f32[1,32], index: 13, kind: input, shape index: {}]
  %s14 = inlined_call_operand.vmem [shape: f32[1,32], index: 14, kind: input, shape index: {}]
  %s15 = inlined_call_operand.vmem [shape: f32[4,64,32], index: 15, kind: output, shape index: {}]
  %s16 = sld [smem:[#allocation0]]
  $region93: #{message_layer_ini_forward.1} parent=0
    _
  %s18 = ssub.s32 1, %s16
  %s19 = scalar_select 0, %s18, %s16
  loop: start=0, step=1, limit=6
  $region2: #{message_layer_ini_forward.1} parent=0 // loop_pre_header
    _
  $region3: #{message_layer_ini_forward.1} parent=0 // loop_header
    %s21 = sphi 0, %s25
    %p22 = scmp.ge.s32.totalorder %s21, 6
    %s31 = sphi 0, %s33
    %s34 = sphi 0, %s31
    %s35 = sphi 0, %s34
    %s51 = sphi 0, %s35
    %s83 = sphi 0, %s85
    %s86 = sphi 0, %s83
    %s87 = sphi 0, %s86
    %s103 = sphi 0, %s87
    %s109 = sphi 0, %s111
    %s112 = sphi 0, %s109
    %s113 = sphi 0, %s112
    %s129 = sphi 0, %s113
    %s133 = sphi 0, %s133
    %s135 = sphi 0, %s133
    %s136 = sphi 0, %s135
    %s150 = sphi 0, %s136
    %s154 = sphi 0, %s154
    %s156 = sphi 0, %s154
    %s157 = sphi 0, %s156
    %s171 = sphi 0, %s157
    %s175 = sphi 0, %s175
    %s177 = sphi 0, %s175
    %s178 = sphi 0, %s177
    %s192 = sphi 0, %s178
    %s196 = sphi 0, %s196
    %s198 = sphi 0, %s196
    %s199 = sphi 0, %s198
    %s213 = sphi 0, %s199
    %s217 = sphi 0, %s217
    %s219 = sphi 0, %s217
    %s220 = sphi 0, %s219
    %s234 = sphi 0, %s220
    %s238 = sphi 0, %s238
    %s240 = sphi 0, %s238
    %s241 = sphi 0, %s240
    %s255 = sphi 0, %s241
    %s259 = sphi 0, %s259
    %s261 = sphi 0, %s259
    %s262 = sphi 0, %s261
    %s276 = sphi 0, %s262
    %s280 = sphi 0, %s280
    %s282 = sphi 0, %s280
    %s283 = sphi 0, %s282
    %s297 = sphi 0, %s283
    %s301 = sphi 0, %s301
    %s303 = sphi 0, %s301
    %s304 = sphi 0, %s303
    %s318 = sphi 0, %s304
    %s322 = sphi 0, %s322
    %s324 = sphi 0, %s322
    %s325 = sphi 0, %s324
    %s339 = sphi 0, %s325
    %s343 = sphi 0, %s343
    %s345 = sphi 0, %s343
    %s346 = sphi 0, %s345
    %s360 = sphi 0, %s346
    %s364 = sphi 0, %s364
    %s366 = sphi 0, %s364
    %s367 = sphi 0, %s366
    %s381 = sphi 0, %s367
    %s387 = sphi 0, %s389
    %s390 = sphi 0, %s387
    %s391 = sphi 0, %s390
    %s407 = sphi 0, %s391
  $region4: #{message_layer_ini_forward.1} parent=0 // loop_header_branch
    %24 = sbr.rel (%p22) target = $region8
  $region5: #{message_layer_ini_forward.1} parent=0 // loop_body
    %s26 = ssub.s32 %s21, 1
    %s27 = ssub.s32 %s21, 2
    %s28 = sadd.s32 %s21, 1
    %s29 = ssub.s32 %s21, %s28
    %p30 = scmp.eq.s32.totalorder %s29, 0
    %s32 = sadd.s32 %s31, 1
    %s33 = scalar_select %p30, %s31, %s32
    %p36 = pneg %p30
    %p37 = scmp.eq.s32.totalorder %s21, 3
    %p38 = por %p36, %p37
    %p39 = scmp.ne.s32.totalorder %s31, %s34
    %p40 = scmp.eq.s32.totalorder %s21, 0
    %p41 = por %p39, %p40
    %p42 = scmp.ne.s32.totalorder %s31, %s34
    %p43 = scmp.eq.s32.totalorder %s26, 3
    %p44 = por %p42, %p43
    %p45 = scmp.ne.s32.totalorder %s34, %s35
    %p46 = scmp.eq.s32.totalorder %s26, 0
    %p47 = por %p45, %p46
    %p48 = scmp.ne.s32.totalorder %s34, %s35
    %p49 = scmp.eq.s32.totalorder %s27, 3
    %p50 = por %p48, %p49
    %p52 = scmp.ne.s32.totalorder %s35, %s51
    %p53 = scmp.eq.s32.totalorder %s27, 0
    %p54 = por %p52, %p53
    %s55 = sadd.s32 %s21, 2
    %p56 = scmp.lt.s32.totalorder %s55, 0
    %s57 = ssub.s32 0, %s55
    %s58 = scalar_select %p56, %s57, %s55
    %s59 = sand.u32 %s58, 3
    %s60 = ssub.s32 0, %s59
    %s61 = scalar_select %p56, %s60, %s59
    %p62 = scmp.ne.s32.totalorder %s61, 0
    %p63 = scmp.lt.s32.totalorder %s61, 0
    %p64 = pnand %p63, %p62
    %p65 = pneg %p64
    %s66 = sadd.s32 %s61, 4
    %s67 = scalar_select %p65, %s66, %s61
    %s68 = sadd.s32 %s28, 2
    %p69 = scmp.lt.s32.totalorder %s68, 0
    %s70 = ssub.s32 0, %s68
    %s71 = scalar_select %p69, %s70, %s68
    %s72 = sand.u32 %s71, 3
    %s73 = ssub.s32 0, %s72
    %s74 = scalar_select %p69, %s73, %s72
    %p75 = scmp.ne.s32.totalorder %s74, 0
    %p76 = scmp.lt.s32.totalorder %s74, 0
    %p77 = pnand %p76, %p75
    %p78 = pneg %p77
    %s79 = sadd.s32 %s74, 4
    %s80 = scalar_select %p78, %s79, %s74
    %s81 = ssub.s32 %s67, %s80
    %p82 = scmp.eq.s32.totalorder %s81, 0
    %s84 = sadd.s32 %s83, 1
    %s85 = scalar_select %p82, %s83, %s84
    %p88 = pneg %p82
    %p89 = scmp.eq.s32.totalorder %s21, 3
    %p90 = por %p88, %p89
    %p91 = scmp.ne.s32.totalorder %s83, %s86
    %p92 = scmp.eq.s32.totalorder %s21, 0
    %p93 = por %p91, %p92
    %p94 = scmp.ne.s32.totalorder %s83, %s86
    %p95 = scmp.eq.s32.totalorder %s26, 3
    %p96 = por %p94, %p95
    %p97 = scmp.ne.s32.totalorder %s86, %s87
    %p98 = scmp.eq.s32.totalorder %s26, 0
    %p99 = por %p97, %p98
    %p100 = scmp.ne.s32.totalorder %s86, %s87
    %p101 = scmp.eq.s32.totalorder %s27, 3
    %p102 = por %p100, %p101
    %p104 = scmp.ne.s32.totalorder %s87, %s103
    %p105 = scmp.eq.s32.totalorder %s27, 0
    %p106 = por %p104, %p105
    %s107 = ssub.s32 %s21, %s28
    %p108 = scmp.eq.s32.totalorder %s107, 0
    %s110 = sadd.s32 %s109, 1
    %s111 = scalar_select %p108, %s109, %s110
    %p114 = pneg %p108
    %p115 = scmp.eq.s32.totalorder %s21, 3
    %p116 = por %p114, %p115
    %p117 = scmp.ne.s32.totalorder %s109, %s112
    %p118 = scmp.eq.s32.totalorder %s21, 0
    %p119 = por %p117, %p118
    %p120 = scmp.ne.s32.totalorder %s109, %s112
    %p121 = scmp.eq.s32.totalorder %s26, 3
    %p122 = por %p120, %p121
    %p123 = scmp.ne.s32.totalorder %s112, %s113
    %p124 = scmp.eq.s32.totalorder %s26, 0
    %p125 = por %p123, %p124
    %p126 = scmp.ne.s32.totalorder %s112, %s113
    %p127 = scmp.eq.s32.totalorder %s27, 3
    %p128 = por %p126, %p127
    %p130 = scmp.ne.s32.totalorder %s113, %s129
    %p131 = scmp.eq.s32.totalorder %s27, 0
    %p132 = por %p130, %p131
    %s134 = sadd.s32 %s133, 1
    %p137 = scmp.eq.s32.totalorder %s21, 3
    %p138 = scmp.ne.s32.totalorder %s133, %s135
    %p139 = scmp.eq.s32.totalorder %s21, 0
    %p140 = por %p138, %p139
    %p141 = scmp.ne.s32.totalorder %s133, %s135
    %p142 = scmp.eq.s32.totalorder %s26, 3
    %p143 = por %p141, %p142
    %p144 = scmp.ne.s32.totalorder %s135, %s136
    %p145 = scmp.eq.s32.totalorder %s26, 0
    %p146 = por %p144, %p145
    %p147 = scmp.ne.s32.totalorder %s135, %s136
    %p148 = scmp.eq.s32.totalorder %s27, 3
    %p149 = por %p147, %p148
    %p151 = scmp.ne.s32.totalorder %s136, %s150
    %p152 = scmp.eq.s32.totalorder %s27, 0
    %p153 = por %p151, %p152
    %s155 = sadd.s32 %s154, 1
    %p158 = scmp.eq.s32.totalorder %s21, 3
    %p159 = scmp.ne.s32.totalorder %s154, %s156
    %p160 = scmp.eq.s32.totalorder %s21, 0
    %p161 = por %p159, %p160
    %p162 = scmp.ne.s32.totalorder %s154, %s156
    %p163 = scmp.eq.s32.totalorder %s26, 3
    %p164 = por %p162, %p163
    %p165 = scmp.ne.s32.totalorder %s156, %s157
    %p166 = scmp.eq.s32.totalorder %s26, 0
    %p167 = por %p165, %p166
    %p168 = scmp.ne.s32.totalorder %s156, %s157
    %p169 = scmp.eq.s32.totalorder %s27, 3
    %p170 = por %p168, %p169
    %p172 = scmp.ne.s32.totalorder %s157, %s171
    %p173 = scmp.eq.s32.totalorder %s27, 0
    %p174 = por %p172, %p173
    %s176 = sadd.s32 %s175, 1
    %p179 = scmp.eq.s32.totalorder %s21, 3
    %p180 = scmp.ne.s32.totalorder %s175, %s177
    %p181 = scmp.eq.s32.totalorder %s21, 0
    %p182 = por %p180, %p181
    %p183 = scmp.ne.s32.totalorder %s175, %s177
    %p184 = scmp.eq.s32.totalorder %s26, 3
    %p185 = por %p183, %p184
    %p186 = scmp.ne.s32.totalorder %s177, %s178
    %p187 = scmp.eq.s32.totalorder %s26, 0
    %p188 = por %p186, %p187
    %p189 = scmp.ne.s32.totalorder %s177, %s178
    %p190 = scmp.eq.s32.totalorder %s27, 3
    %p191 = por %p189, %p190
    %p193 = scmp.ne.s32.totalorder %s178, %s192
    %p194 = scmp.eq.s32.totalorder %s27, 0
    %p195 = por %p193, %p194
    %s197 = sadd.s32 %s196, 1
    %p200 = scmp.eq.s32.totalorder %s21, 3
    %p201 = scmp.ne.s32.totalorder %s196, %s198
    %p202 = scmp.eq.s32.totalorder %s21, 0
    %p203 = por %p201, %p202
    %p204 = scmp.ne.s32.totalorder %s196, %s198
    %p205 = scmp.eq.s32.totalorder %s26, 3
    %p206 = por %p204, %p205
    %p207 = scmp.ne.s32.totalorder %s198, %s199
    %p208 = scmp.eq.s32.totalorder %s26, 0
    %p209 = por %p207, %p208
    %p210 = scmp.ne.s32.totalorder %s198, %s199
    %p211 = scmp.eq.s32.totalorder %s27, 3
    %p212 = por %p210, %p211
    %p214 = scmp.ne.s32.totalorder %s199, %s213
    %p215 = scmp.eq.s32.totalorder %s27, 0
    %p216 = por %p214, %p215
    %s218 = sadd.s32 %s217, 1
    %p221 = scmp.eq.s32.totalorder %s21, 3
    %p222 = scmp.ne.s32.totalorder %s217, %s219
    %p223 = scmp.eq.s32.totalorder %s21, 0
    %p224 = por %p222, %p223
    %p225 = scmp.ne.s32.totalorder %s217, %s219
    %p226 = scmp.eq.s32.totalorder %s26, 3
    %p227 = por %p225, %p226
    %p228 = scmp.ne.s32.totalorder %s219, %s220
    %p229 = scmp.eq.s32.totalorder %s26, 0
    %p230 = por %p228, %p229
    %p231 = scmp.ne.s32.totalorder %s219, %s220
    %p232 = scmp.eq.s32.totalorder %s27, 3
    %p233 = por %p231, %p232
    %p235 = scmp.ne.s32.totalorder %s220, %s234
    %p236 = scmp.eq.s32.totalorder %s27, 0
    %p237 = por %p235, %p236
    %s239 = sadd.s32 %s238, 1
    %p242 = scmp.eq.s32.totalorder %s21, 3
    %p243 = scmp.ne.s32.totalorder %s238, %s240
    %p244 = scmp.eq.s32.totalorder %s21, 0
    %p245 = por %p243, %p244
    %p246 = scmp.ne.s32.totalorder %s238, %s240
    %p247 = scmp.eq.s32.totalorder %s26, 3
    %p248 = por %p246, %p247
    %p249 = scmp.ne.s32.totalorder %s240, %s241
    %p250 = scmp.eq.s32.totalorder %s26, 0
    %p251 = por %p249, %p250
    %p252 = scmp.ne.s32.totalorder %s240, %s241
    %p253 = scmp.eq.s32.totalorder %s27, 3
    %p254 = por %p252, %p253
    %p256 = scmp.ne.s32.totalorder %s241, %s255
    %p257 = scmp.eq.s32.totalorder %s27, 0
    %p258 = por %p256, %p257
    %s260 = sadd.s32 %s259, 1
    %p263 = scmp.eq.s32.totalorder %s21, 3
    %p264 = scmp.ne.s32.totalorder %s259, %s261
    %p265 = scmp.eq.s32.totalorder %s21, 0
    %p266 = por %p264, %p265
    %p267 = scmp.ne.s32.totalorder %s259, %s261
    %p268 = scmp.eq.s32.totalorder %s26, 3
    %p269 = por %p267, %p268
    %p270 = scmp.ne.s32.totalorder %s261, %s262
    %p271 = scmp.eq.s32.totalorder %s26, 0
    %p272 = por %p270, %p271
    %p273 = scmp.ne.s32.totalorder %s261, %s262
    %p274 = scmp.eq.s32.totalorder %s27, 3
    %p275 = por %p273, %p274
    %p277 = scmp.ne.s32.totalorder %s262, %s276
    %p278 = scmp.eq.s32.totalorder %s27, 0
    %p279 = por %p277, %p278
    %s281 = sadd.s32 %s280, 1
    %p284 = scmp.eq.s32.totalorder %s21, 3
    %p285 = scmp.ne.s32.totalorder %s280, %s282
    %p286 = scmp.eq.s32.totalorder %s21, 0
    %p287 = por %p285, %p286
    %p288 = scmp.ne.s32.totalorder %s280, %s282
    %p289 = scmp.eq.s32.totalorder %s26, 3
    %p290 = por %p288, %p289
    %p291 = scmp.ne.s32.totalorder %s282, %s283
    %p292 = scmp.eq.s32.totalorder %s26, 0
    %p293 = por %p291, %p292
    %p294 = scmp.ne.s32.totalorder %s282, %s283
    %p295 = scmp.eq.s32.totalorder %s27, 3
    %p296 = por %p294, %p295
    %p298 = scmp.ne.s32.totalorder %s283, %s297
    %p299 = scmp.eq.s32.totalorder %s27, 0
    %p300 = por %p298, %p299
    %s302 = sadd.s32 %s301, 1
    %p305 = scmp.eq.s32.totalorder %s21, 3
    %p306 = scmp.ne.s32.totalorder %s301, %s303
    %p307 = scmp.eq.s32.totalorder %s21, 0
    %p308 = por %p306, %p307
    %p309 = scmp.ne.s32.totalorder %s301, %s303
    %p310 = scmp.eq.s32.totalorder %s26, 3
    %p311 = por %p309, %p310
    %p312 = scmp.ne.s32.totalorder %s303, %s304
    %p313 = scmp.eq.s32.totalorder %s26, 0
    %p314 = por %p312, %p313
    %p315 = scmp.ne.s32.totalorder %s303, %s304
    %p316 = scmp.eq.s32.totalorder %s27, 3
    %p317 = por %p315, %p316
    %p319 = scmp.ne.s32.totalorder %s304, %s318
    %p320 = scmp.eq.s32.totalorder %s27, 0
    %p321 = por %p319, %p320
    %s323 = sadd.s32 %s322, 1
    %p326 = scmp.eq.s32.totalorder %s21, 3
    %p327 = scmp.ne.s32.totalorder %s322, %s324
    %p328 = scmp.eq.s32.totalorder %s21, 0
    %p329 = por %p327, %p328
    %p330 = scmp.ne.s32.totalorder %s322, %s324
    %p331 = scmp.eq.s32.totalorder %s26, 3
    %p332 = por %p330, %p331
    %p333 = scmp.ne.s32.totalorder %s324, %s325
    %p334 = scmp.eq.s32.totalorder %s26, 0
    %p335 = por %p333, %p334
    %p336 = scmp.ne.s32.totalorder %s324, %s325
    %p337 = scmp.eq.s32.totalorder %s27, 3
    %p338 = por %p336, %p337
    %p340 = scmp.ne.s32.totalorder %s325, %s339
    %p341 = scmp.eq.s32.totalorder %s27, 0
    %p342 = por %p340, %p341
    %s344 = sadd.s32 %s343, 1
    %p347 = scmp.eq.s32.totalorder %s21, 3
    %p348 = scmp.ne.s32.totalorder %s343, %s345
    %p349 = scmp.eq.s32.totalorder %s21, 0
    %p350 = por %p348, %p349
    %p351 = scmp.ne.s32.totalorder %s343, %s345
    %p352 = scmp.eq.s32.totalorder %s26, 3
    %p353 = por %p351, %p352
    %p354 = scmp.ne.s32.totalorder %s345, %s346
    %p355 = scmp.eq.s32.totalorder %s26, 0
    %p356 = por %p354, %p355
    %p357 = scmp.ne.s32.totalorder %s345, %s346
    %p358 = scmp.eq.s32.totalorder %s27, 3
    %p359 = por %p357, %p358
    %p361 = scmp.ne.s32.totalorder %s346, %s360
    %p362 = scmp.eq.s32.totalorder %s27, 0
    %p363 = por %p361, %p362
    %s365 = sadd.s32 %s364, 1
    %p368 = scmp.eq.s32.totalorder %s21, 3
    %p369 = scmp.ne.s32.totalorder %s364, %s366
    %p370 = scmp.eq.s32.totalorder %s21, 0
    %p371 = por %p369, %p370
    %p372 = scmp.ne.s32.totalorder %s364, %s366
    %p373 = scmp.eq.s32.totalorder %s26, 3
    %p374 = por %p372, %p373
    %p375 = scmp.ne.s32.totalorder %s366, %s367
    %p376 = scmp.eq.s32.totalorder %s26, 0
    %p377 = por %p375, %p376
    %p378 = scmp.ne.s32.totalorder %s366, %s367
    %p379 = scmp.eq.s32.totalorder %s27, 3
    %p380 = por %p378, %p379
    %p382 = scmp.ne.s32.totalorder %s367, %s381
    %p383 = scmp.eq.s32.totalorder %s27, 0
    %p384 = por %p382, %p383
    %s385 = ssub.s32 %s21, %s28
    %p386 = scmp.eq.s32.totalorder %s385, 0
    %s388 = sadd.s32 %s387, 1
    %s389 = scalar_select %p386, %s387, %s388
    %p392 = pneg %p386
    %p393 = scmp.eq.s32.totalorder %s21, 3
    %p394 = por %p392, %p393
    %p395 = scmp.ne.s32.totalorder %s387, %s390
    %p396 = scmp.eq.s32.totalorder %s21, 0
    %p397 = por %p395, %p396
    %p398 = scmp.ne.s32.totalorder %s387, %s390
    %p399 = scmp.eq.s32.totalorder %s26, 3
    %p400 = por %p398, %p399
    %p401 = scmp.ne.s32.totalorder %s390, %s391
    %p402 = scmp.eq.s32.totalorder %s26, 0
    %p403 = por %p401, %p402
    %p404 = scmp.ne.s32.totalorder %s390, %s391
    %p405 = scmp.eq.s32.totalorder %s27, 3
    %p406 = por %p404, %p405
    %p408 = scmp.ne.s32.totalorder %s391, %s407
    %p409 = scmp.eq.s32.totalorder %s27, 0
    %p410 = por %p408, %p409
    %p411 = scmp.le.s32.totalorder 1, %s21
    %p412 = scmp.lt.s32.totalorder %s21, 5
    %p413 = pnand %p411, %p412
    %p414 = pneg %p413
    // Predicated region
    $region9: #{message_layer_ini_forward.1} parent=5 // pred_check
      _
    $region10: #{message_layer_ini_forward.1} parent=5 // pred_check_branch
      %416 = sbr.rel (%p413) target = $region12
    $region11: #{message_layer_ini_forward.1} parent=5 // pred_region
      %s417 = ssub.s32 %s21, 1
      // Predicated region
      $region13: #{message_layer_ini_forward.1} parent=11 // pred_check
        %p418 = pneg %p146
      $region14: #{message_layer_ini_forward.1} parent=11 // pred_check_branch
        %420 = sbr.rel (%p418) target = $region16
      $region15: #{message_layer_ini_forward.1} parent=11 // pred_region
        _
      $region16: #{message_layer_ini_forward.1} parent=11 // pred_fallthru
        _
      // Predicated region
      $region17: #{message_layer_ini_forward.1} parent=11 // pred_check
        %p421 = pneg %p167
      $region18: #{message_layer_ini_forward.1} parent=11 // pred_check_branch
        %423 = sbr.rel (%p421) target = $region20
      $region19: #{message_layer_ini_forward.1} parent=11 // pred_region
        _
      $region20: #{message_layer_ini_forward.1} parent=11 // pred_fallthru
        _
      // Predicated region
      $region21: #{message_layer_ini_forward.1} parent=11 // pred_check
        %p424 = pneg %p188
      $region22: #{message_layer_ini_forward.1} parent=11 // pred_check_branch
        %426 = sbr.rel (%p424) target = $region24
      $region23: #{message_layer_ini_forward.1} parent=11 // pred_region
        _
      $region24: #{message_layer_ini_forward.1} parent=11 // pred_fallthru
        _
      // Predicated region
      $region25: #{message_layer_ini_forward.1} parent=11 // pred_check
        %p427 = pneg %p209
      $region26: #{message_layer_ini_forward.1} parent=11 // pred_check_branch
        %429 = sbr.rel (%p427) target = $region28
      $region27: #{message_layer_ini_forward.1} parent=11 // pred_region
        _
      $region28: #{message_layer_ini_forward.1} parent=11 // pred_fallthru
        _
      // Predicated region
      $region29: #{message_layer_ini_forward.1} parent=11 // pred_check
        %p430 = pneg %p230
      $region30: #{message_layer_ini_forward.1} parent=11 // pred_check_branch
        %432 = sbr.rel (%p430) target = $region32
      $region31: #{message_layer_ini_forward.1} parent=11 // pred_region
        _
      $region32: #{message_layer_ini_forward.1} parent=11 // pred_fallthru
        _
      // Predicated region
      $region33: #{message_layer_ini_forward.1} parent=11 // pred_check
        %p433 = pneg %p251
      $region34: #{message_layer_ini_forward.1} parent=11 // pred_check_branch
        %435 = sbr.rel (%p433) target = $region36
      $region35: #{message_layer_ini_forward.1} parent=11 // pred_region
        _
      $region36: #{message_layer_ini_forward.1} parent=11 // pred_fallthru
        _
      // Predicated region
      $region37: #{message_layer_ini_forward.1} parent=11 // pred_check
        %p436 = pneg %p272
      $region38: #{message_layer_ini_forward.1} parent=11 // pred_check_branch
        %438 = sbr.rel (%p436) target = $region40
      $region39: #{message_layer_ini_forward.1} parent=11 // pred_region
        _
      $region40: #{message_layer_ini_forward.1} parent=11 // pred_fallthru
        _
      // Predicated region
      $region41: #{message_layer_ini_forward.1} parent=11 // pred_check
        %p439 = pneg %p293
      $region42: #{message_layer_ini_forward.1} parent=11 // pred_check_branch
        %441 = sbr.rel (%p439) target = $region44
      $region43: #{message_layer_ini_forward.1} parent=11 // pred_region
        _
      $region44: #{message_layer_ini_forward.1} parent=11 // pred_fallthru
        _
      // Predicated region
      $region45: #{message_layer_ini_forward.1} parent=11 // pred_check
        %p442 = pneg %p314
      $region46: #{message_layer_ini_forward.1} parent=11 // pred_check_branch
        %444 = sbr.rel (%p442) target = $region48
      $region47: #{message_layer_ini_forward.1} parent=11 // pred_region
        _
      $region48: #{message_layer_ini_forward.1} parent=11 // pred_fallthru
        _
      // Predicated region
      $region49: #{message_layer_ini_forward.1} parent=11 // pred_check
        %p445 = pneg %p335
      $region50: #{message_layer_ini_forward.1} parent=11 // pred_check_branch
        %447 = sbr.rel (%p445) target = $region52
      $region51: #{message_layer_ini_forward.1} parent=11 // pred_region
        _
      $region52: #{message_layer_ini_forward.1} parent=11 // pred_fallthru
        _
      // Predicated region
      $region53: #{message_layer_ini_forward.1} parent=11 // pred_check
        %p448 = pneg %p356
      $region54: #{message_layer_ini_forward.1} parent=11 // pred_check_branch
        %450 = sbr.rel (%p448) target = $region56
      $region55: #{message_layer_ini_forward.1} parent=11 // pred_region
        _
      $region56: #{message_layer_ini_forward.1} parent=11 // pred_fallthru
        _
      // Predicated region
      $region57: #{message_layer_ini_forward.1} parent=11 // pred_check
        %p451 = pneg %p377
      $region58: #{message_layer_ini_forward.1} parent=11 // pred_check_branch
        %453 = sbr.rel (%p451) target = $region60
      $region59: #{message_layer_ini_forward.1} parent=11 // pred_region
        _
      $region60: #{message_layer_ini_forward.1} parent=11 // pred_fallthru
        _
    $region12: #{message_layer_ini_forward.1} parent=5 // pred_fallthru
      _
    %p454 = scmp.lt.s32.totalorder %s21, 4
    // Predicated region
    $region61: #{message_layer_ini_forward.1} parent=5 // pred_check
      %p455 = pneg %p454
    $region62: #{message_layer_ini_forward.1} parent=5 // pred_check_branch
      %457 = sbr.rel (%p455) target = $region64
    $region63: #{message_layer_ini_forward.1} parent=5 // pred_region
      // Predicated region
      $region65: #{message_layer_ini_forward.1} parent=63 // pred_check
        %p458 = pneg %p41
      $region66: #{message_layer_ini_forward.1} parent=63 // pred_check_branch
        %460 = sbr.rel (%p458) target = $region68
      $region67: #{message_layer_ini_forward.1} parent=63 // pred_region
        %p461 = scmp.lt.s32.totalorder %s21, 3
        %s462 = scalar_select %p461, %s21, 3
        %s463 = smul.addr %s462, 8
        %s464 = smul.addr %s463, 8
        %s465 = scalar_lea.vmem %s0, %s464
      $region68: #{message_layer_ini_forward.1} parent=63 // pred_fallthru
        _
      // Predicated region
      $region69: #{message_layer_ini_forward.1} parent=63 // pred_check
        %p466 = pneg %p93
      $region70: #{message_layer_ini_forward.1} parent=63 // pred_check_branch
        %468 = sbr.rel (%p466) target = $region72
      $region71: #{message_layer_ini_forward.1} parent=63 // pred_region
        %s469 = sadd.s32 %s21, 2
        %p470 = scmp.lt.s32.totalorder %s469, 0
        %s471 = ssub.s32 0, %s469
        %s472 = scalar_select %p470, %s471, %s469
        %s473 = sand.u32 %s472, 3
        %s474 = ssub.s32 0, %s473
        %s475 = scalar_select %p470, %s474, %s473
        %p476 = scmp.ne.s32.totalorder %s475, 0
        %p477 = scmp.lt.s32.totalorder %s475, 0
        %p478 = pnand %p477, %p476
        %p479 = pneg %p478
        %s480 = sadd.s32 %s475, 4
        %s481 = scalar_select %p479, %s480, %s475
        %p482 = scmp.lt.s32.totalorder %s481, 3
        %s483 = scalar_select %p482, %s481, 3
        %s484 = smul.addr %s483, 8
        %s485 = smul.addr %s484, 8
        %s486 = scalar_lea.vmem %s1, %s485
        %s487 = sadd.s32 %s21, 2
        %p488 = scmp.lt.s32.totalorder %s487, 0
        %s489 = ssub.s32 0, %s487
        %s490 = scalar_select %p488, %s489, %s487
        %s491 = sand.u32 %s490, 3
        %s492 = ssub.s32 0, %s491
        %s493 = scalar_select %p488, %s492, %s491
        %p494 = scmp.ne.s32.totalorder %s493, 0
        %p495 = scmp.lt.s32.totalorder %s493, 0
        %p496 = pnand %p495, %p494
        %p497 = pneg %p496
        %s498 = sadd.s32 %s493, 4
        %s499 = scalar_select %p497, %s498, %s493
      $region72: #{message_layer_ini_forward.1} parent=63 // pred_fallthru
        _
      // Predicated region
      $region73: #{message_layer_ini_forward.1} parent=63 // pred_check
        %p500 = pneg %p119
      $region74: #{message_layer_ini_forward.1} parent=63 // pred_check_branch
        %502 = sbr.rel (%p500) target = $region76
      $region75: #{message_layer_ini_forward.1} parent=63 // pred_region
        %p503 = scmp.lt.s32.totalorder %s21, 3
        %s504 = scalar_select %p503, %s21, 3
        %s505 = smul.addr %s504, 8
        %s506 = smul.addr %s505, 8
        %s507 = scalar_lea.vmem %s2, %s506
      $region76: #{message_layer_ini_forward.1} parent=63 // pred_fallthru
        _
    $region64: #{message_layer_ini_forward.1} parent=5 // pred_fallthru
      _
    %p508 = scmp.le.s32.totalorder 1, %s21
    %p509 = scmp.lt.s32.totalorder %s21, 5
    %p510 = pnand %p508, %p509
    %p511 = pneg %p510
    // Predicated region
    $region77: #{message_layer_ini_forward.1} parent=5 // pred_check
      _
    $region78: #{message_layer_ini_forward.1} parent=5 // pred_check_branch
      %513 = sbr.rel (%p510) target = $region80
    $region79: #{message_layer_ini_forward.1} parent=5 // pred_region
      %s514 = ssub.s32 %s21, 1
      %p515 = scmp.lt.s32.totalorder %s26, 3
      %s516 = scalar_select %p515, %s26, 3
      %s517 = smul.addr %s516, 8
      %s518 = smul.addr %s517, 8
      %s519 = scalar_lea.vmem %s0, %s518
      %p520 = pneg %p47
      %p521 = pneg %p44
      %s522 = sadd.s32 %s26, 2
      %p523 = scmp.lt.s32.totalorder %s522, 0
      %s524 = ssub.s32 0, %s522
      %s525 = scalar_select %p523, %s524, %s522
      %s526 = sand.u32 %s525, 3
      %s527 = ssub.s32 0, %s526
      %s528 = scalar_select %p523, %s527, %s526
      %p529 = scmp.ne.s32.totalorder %s528, 0
      %p530 = scmp.lt.s32.totalorder %s528, 0
      %p531 = pnand %p530, %p529
      %p532 = pneg %p531
      %s533 = sadd.s32 %s528, 4
      %s534 = scalar_select %p532, %s533, %s528
      %p535 = scmp.lt.s32.totalorder %s534, 3
      %s536 = scalar_select %p535, %s534, 3
      %s537 = smul.addr %s536, 8
      %s538 = smul.addr %s537, 8
      %s539 = scalar_lea.vmem %s1, %s538
      %p540 = pneg %p99
      %p541 = pneg %p96
      %p542 = scmp.lt.s32.totalorder %s26, 3
      %s543 = scalar_select %p542, %s26, 3
      %s544 = smul.addr %s543, 8
      %s545 = smul.addr %s544, 8
      %s546 = scalar_lea.vmem %s2, %s545
      %p547 = pneg %p125
      %p548 = pneg %p122
      %p549 = pneg %p146
      %p550 = pneg %p143
      %p551 = pneg %p167
      %p552 = pneg %p164
      %p553 = pneg %p188
      %p554 = pneg %p185
      %p555 = pneg %p209
      %p556 = pneg %p206
      %p557 = pneg %p230
      %p558 = pneg %p227
      %p559 = pneg %p251
      %p560 = pneg %p248
      %p561 = pneg %p272
      %p562 = pneg %p269
      %p563 = pneg %p293
      %p564 = pneg %p290
      %p565 = pneg %p314
      %p566 = pneg %p311
      %p567 = pneg %p335
      %p568 = pneg %p332
      %p569 = pneg %p356
      %p570 = pneg %p353
      %p571 = pneg %p377
      %p572 = pneg %p374
      %p573 = pneg %p403
      %p574 = pneg %p400
      %p575 = scmp.lt.s32.totalorder %s26, 3
      %s576 = scalar_select %p575, %s26, 3
      %s577 = smul.addr %s576, 8
      %s578 = smul.addr %s577, 8
      %s579 = scalar_lea.vmem %s15, %s578
      %p580 = scmp.lt.s32.totalorder %s26, 3
      %s581 = scalar_select %p580, %s26, 3
      %s582 = smul.addr %s581, 8
      %s583 = smul.addr %s582, 8
      %s584 = scalar_lea.vmem %s0, %s583
      %s585 = sadd.s32 %s26, 2
      %p586 = scmp.lt.s32.totalorder %s585, 0
      %s587 = ssub.s32 0, %s585
      %s588 = scalar_select %p586, %s587, %s585
      %s589 = sand.u32 %s588, 3
      %s590 = ssub.s32 0, %s589
      %s591 = scalar_select %p586, %s590, %s589
      %p592 = scmp.ne.s32.totalorder %s591, 0
      %p593 = scmp.lt.s32.totalorder %s591, 0
      %p594 = pnand %p593, %p592
      %p595 = pneg %p594
      %s596 = sadd.s32 %s591, 4
      %s597 = scalar_select %p595, %s596, %s591
      %p598 = scmp.lt.s32.totalorder %s597, 3
      %s599 = scalar_select %p598, %s597, 3
      %s600 = smul.addr %s599, 8
      %s601 = smul.addr %s600, 8
      %s602 = scalar_lea.vmem %s1, %s601
      %s603 = sadd.s32 %s26, 2
      %p604 = scmp.lt.s32.totalorder %s603, 0
      %s605 = ssub.s32 0, %s603
      %s606 = scalar_select %p604, %s605, %s603
      %s607 = sand.u32 %s606, 3
      %s608 = ssub.s32 0, %s607
      %s609 = scalar_select %p604, %s608, %s607
      %p610 = scmp.ne.s32.totalorder %s609, 0
      %p611 = scmp.lt.s32.totalorder %s609, 0
      %p612 = pnand %p611, %p610
      %p613 = pneg %p612
      %s614 = sadd.s32 %s609, 4
      %s615 = scalar_select %p613, %s614, %s609
      %p616 = scmp.lt.s32.totalorder %s26, 3
      %s617 = scalar_select %p616, %s26, 3
      %s618 = smul.addr %s617, 8
      %s619 = smul.addr %s618, 8
      %s620 = scalar_lea.vmem %s2, %s619
      %p621 = scmp.lt.s32.totalorder %s26, 3
      %s622 = scalar_select %p621, %s26, 3
      %s623 = smul.addr %s622, 8
      %s624 = smul.addr %s623, 8
      %s625 = scalar_lea.vmem %s15, %s624
      %v627 = vld [vmem:[%s584] sm:$0xff]
      %v628 = vld [vmem:[%s584 + $0x8] sm:$0xff]
      %v629 = vld [vmem:[%s584 + $0x10] sm:$0xff]
      %v630 = vld [vmem:[%s584 + $0x18] sm:$0xff]
      %v631 = vld [vmem:[%s584 + $0x20] sm:$0xff]
      %v632 = vld [vmem:[%s584 + $0x28] sm:$0xff]
      %v633 = vld [vmem:[%s584 + $0x30] sm:$0xff]
      %v634 = vld [vmem:[%s584 + $0x38] sm:$0xff]
      %v635 = vld [vmem:[%s602] sm:$0xff]
      %v636 = vld [vmem:[%s602 + $0x8] sm:$0xff]
      %v637 = vld [vmem:[%s602 + $0x10] sm:$0xff]
      %v638 = vld [vmem:[%s602 + $0x18] sm:$0xff]
      %v639 = vld [vmem:[%s602 + $0x20] sm:$0xff]
      %v640 = vld [vmem:[%s602 + $0x28] sm:$0xff]
      %v641 = vld [vmem:[%s602 + $0x30] sm:$0xff]
      %v642 = vld [vmem:[%s602 + $0x38] sm:$0xff]
      %v643 = vld [vmem:[%s620] sm:$0xff]
      %v644 = vld [vmem:[%s620 + $0x8] sm:$0xff]
      %v645 = vld [vmem:[%s620 + $0x10] sm:$0xff]
      %v646 = vld [vmem:[%s620 + $0x18] sm:$0xff]
      %v647 = vld [vmem:[%s620 + $0x20] sm:$0xff]
      %v648 = vld [vmem:[%s620 + $0x28] sm:$0xff]
      %v649 = vld [vmem:[%s620 + $0x30] sm:$0xff]
      %v650 = vld [vmem:[%s620 + $0x38] sm:$0xff]
      %v651 = vpack.c.bf16 %v628, %v627
      %v652 = vpack.c.bf16 %v630, %v629
      %v653 = vpack.c.bf16 %v632, %v631
      %v654 = vpack.c.bf16 %v634, %v633
      %v655 = vpack.c.bf16 %v636, %v635
      %v656 = vpack.c.bf16 %v638, %v637
      %v657 = vpack.c.bf16 %v640, %v639
      %v658 = vpack.c.bf16 %v642, %v641
      %v659 = vpack.c.bf16 %v644, %v643
      %v660 = vpack.c.bf16 %v646, %v645
      %v661 = vpack.c.bf16 %v648, %v647
      %v662 = vpack.c.bf16 %v650, %v649
      %v663 = vld [vmem:[%s3] sm:$0xf]
      %v664 = vld [vmem:[%s3 + $0x4] sm:$0xf]
      %v665 = vld [vmem:[%s3 + $0x8] sm:$0xf]
      %v666 = vld [vmem:[%s3 + $0xc] sm:$0xf]
      %v671 = vunpack.c.l.b16 %v663
      %v672 = vunpack.c.l.b16 %v664
      %v673 = vunpack.c.l.b16 %v665
      %v674 = vunpack.c.l.b16 %v666
      %v675 = vpack.c.b16 %v672, %v671
      %v676 = vpack.c.b16 %v674, %v673
      %vm679 = vcmask 261120
      %v681 = vsel %vm679, %v651, 0
      %v684 = vsel %vm679, %v652, 0
      %v687 = vsel %vm679, %v653, 0
      %v690 = vsel %vm679, %v654, 0
      %692 = vmatprep.subr.bf16.mxu0 0
      %693 = vmatpush1.bf16.msra.mxu0 0
      %694 = vmatprep.subr.bf16.mxu0 0
      %695 = vmatpush1.bf16.msra.mxu0 0
      %696 = vmatprep.subr.bf16.mxu0 0
      %697 = vmatpush1.bf16.msra.mxu0 0
      %698 = vmatprep.subr.bf16.mxu0 0
      %699 = vmatpush1.bf16.msra.mxu0 0
      %700 = vmatprep.subr.bf16.mxu0 0
      %701 = vmatpush1.bf16.msra.mxu0 0
      %702 = vmatprep.subr.bf16.mxu0 0
      %703 = vmatpush1.bf16.msra.mxu0 0
      %704 = vmatprep.subr.bf16.mxu0 0
      %705 = vmatpush1.bf16.msra.mxu0 %v676
      %706 = vmatprep.subr.bf16.mxu0 0
      %707 = vmatpush1.bf16.msra.mxu0 %v675
      %708 = vmatprep.subr.bf16.mxu0 0
      %709 = vmatpush2.bf16.msra.mxu0 0
      %710 = vmatprep.subr.bf16.mxu0 0
      %711 = vmatpush2.bf16.msra.mxu0 0
      %712 = vmatprep.subr.bf16.mxu0 0
      %713 = vmatpush2.bf16.msra.mxu0 0
      %714 = vmatprep.subr.bf16.mxu0 0
      %715 = vmatpush2.bf16.msra.mxu0 0
      %716 = vmatprep.subr.bf16.mxu0 0
      %717 = vmatpush2.bf16.msra.mxu0 0
      %718 = vmatprep.subr.bf16.mxu0 0
      %719 = vmatpush2.bf16.msra.mxu0 0
      %720 = vmatprep.subr.bf16.mxu0 0
      %721 = vmatpush2.bf16.msra.mxu0 0
      %722 = vmatprep.subr.bf16.mxu0 0
      %723 = vmatpush2.bf16.msra.mxu0 0
      %724 = vmatprep.mubr.bf16.mxu0 0
      %725 = vmatmul.mubr.bf16.gmra.mxu0 %v681
      %v726 = vpop.f32.mrf.mxu0
      %v727 = vadd.f32 0.0, %v726
      %v728 = vpop.f32.mrf.mxu0
      %v729 = vpop.f32.mrf.mxu0
      %v730 = vadd.f32 0.0, %v729
      %v731 = vpop.f32.mrf.mxu0
      %732 = vmatprep.mubr.bf16.mxu0 0
      %733 = vmatmul.mubr.bf16.gmra.mxu0 %v684
      %v734 = vpop.f32.mrf.mxu0
      %v735 = vadd.f32 0.0, %v734
      %v736 = vpop.f32.mrf.mxu0
      %v737 = vpop.f32.mrf.mxu0
      %v738 = vadd.f32 0.0, %v737
      %v739 = vpop.f32.mrf.mxu0
      %740 = vmatprep.mubr.bf16.mxu0 0
      %741 = vmatmul.mubr.bf16.gmra.mxu0 %v687
      %v742 = vpop.f32.mrf.mxu0
      %v743 = vadd.f32 0.0, %v742
      %v744 = vpop.f32.mrf.mxu0
      %v745 = vpop.f32.mrf.mxu0
      %v746 = vadd.f32 0.0, %v745
      %v747 = vpop.f32.mrf.mxu0
      %748 = vmatprep.mubr.bf16.mxu0 0
      %749 = vmatmul.mubr.bf16.gmra.mxu0 %v690
      %v750 = vpop.f32.mrf.mxu0
      %v751 = vadd.f32 0.0, %v750
      %v752 = vpop.f32.mrf.mxu0
      %v753 = vpop.f32.mrf.mxu0
      %v754 = vadd.f32 0.0, %v753
      %v755 = vpop.f32.mrf.mxu0
      %756 = vdwg.mxu0
      %v757 = vmul.f32 %v727, 0.35355338
      %v758 = vmul.f32 %v730, 0.35355338
      %v759 = vmul.f32 %v735, 0.35355338
      %v760 = vmul.f32 %v738, 0.35355338
      %v761 = vmul.f32 %v743, 0.35355338
      %v762 = vmul.f32 %v746, 0.35355338
      %v763 = vmul.f32 %v751, 0.35355338
      %v764 = vmul.f32 %v754, 0.35355338
      %v765 = vld [vmem:[%s4] sm:$0xf]
      %v766 = vld [vmem:[%s4 + $0x4] sm:$0xf]
      %v767 = vld [vmem:[%s4 + $0x8] sm:$0xf]
      %v768 = vld [vmem:[%s4 + $0xc] sm:$0xf]
      %v773 = vunpack.c.l.b16 %v765
      %v774 = vunpack.c.l.b16 %v766
      %v775 = vunpack.c.l.b16 %v767
      %v776 = vunpack.c.l.b16 %v768
      %v777 = vpack.c.b16 %v774, %v773
      %v778 = vpack.c.b16 %v776, %v775
      %v782 = vsel %vm679, %v655, 0
      %v785 = vsel %vm679, %v656, 0
      %v788 = vsel %vm679, %v657, 0
      %v791 = vsel %vm679, %v658, 0
      %793 = vmatprep.subr.bf16.mxu0 0
      %794 = vmatpush1.bf16.msra.mxu0 0
      %795 = vmatprep.subr.bf16.mxu0 0
      %796 = vmatpush1.bf16.msra.mxu0 0
      %797 = vmatprep.subr.bf16.mxu0 0
      %798 = vmatpush1.bf16.msra.mxu0 0
      %799 = vmatprep.subr.bf16.mxu0 0
      %800 = vmatpush1.bf16.msra.mxu0 0
      %801 = vmatprep.subr.bf16.mxu0 0
      %802 = vmatpush1.bf16.msra.mxu0 0
      %803 = vmatprep.subr.bf16.mxu0 0
      %804 = vmatpush1.bf16.msra.mxu0 0
      %805 = vmatprep.subr.bf16.mxu0 0
      %806 = vmatpush1.bf16.msra.mxu0 %v778
      %807 = vmatprep.subr.bf16.mxu0 0
      %808 = vmatpush1.bf16.msra.mxu0 %v777
      %809 = vmatprep.subr.bf16.mxu0 0
      %810 = vmatpush2.bf16.msra.mxu0 0
      %811 = vmatprep.subr.bf16.mxu0 0
      %812 = vmatpush2.bf16.msra.mxu0 0
      %813 = vmatprep.subr.bf16.mxu0 0
      %814 = vmatpush2.bf16.msra.mxu0 0
      %815 = vmatprep.subr.bf16.mxu0 0
      %816 = vmatpush2.bf16.msra.mxu0 0
      %817 = vmatprep.subr.bf16.mxu0 0
      %818 = vmatpush2.bf16.msra.mxu0 0
      %819 = vmatprep.subr.bf16.mxu0 0
      %820 = vmatpush2.bf16.msra.mxu0 0
      %821 = vmatprep.subr.bf16.mxu0 0
      %822 = vmatpush2.bf16.msra.mxu0 0
      %823 = vmatprep.subr.bf16.mxu0 0
      %824 = vmatpush2.bf16.msra.mxu0 0
      %825 = vmatprep.mubr.bf16.mxu0 0
      %826 = vmatmul.mubr.bf16.gmra.mxu0 %v782
      %v827 = vpop.f32.mrf.mxu0
      %v828 = vadd.f32 0.0, %v827
      %v829 = vpop.f32.mrf.mxu0
      %v830 = vpop.f32.mrf.mxu0
      %v831 = vadd.f32 0.0, %v830
      %v832 = vpop.f32.mrf.mxu0
      %833 = vmatprep.mubr.bf16.mxu0 0
      %834 = vmatmul.mubr.bf16.gmra.mxu0 %v785
      %v835 = vpop.f32.mrf.mxu0
      %v836 = vadd.f32 0.0, %v835
      %v837 = vpop.f32.mrf.mxu0
      %v838 = vpop.f32.mrf.mxu0
      %v839 = vadd.f32 0.0, %v838
      %v840 = vpop.f32.mrf.mxu0
      %841 = vmatprep.mubr.bf16.mxu0 0
      %842 = vmatmul.mubr.bf16.gmra.mxu0 %v788
      %v843 = vpop.f32.mrf.mxu0
      %v844 = vadd.f32 0.0, %v843
      %v845 = vpop.f32.mrf.mxu0
      %v846 = vpop.f32.mrf.mxu0
      %v847 = vadd.f32 0.0, %v846
      %v848 = vpop.f32.mrf.mxu0
      %849 = vmatprep.mubr.bf16.mxu0 0
      %850 = vmatmul.mubr.bf16.gmra.mxu0 %v791
      %v851 = vpop.f32.mrf.mxu0
      %v852 = vadd.f32 0.0, %v851
      %v853 = vpop.f32.mrf.mxu0
      %v854 = vpop.f32.mrf.mxu0
      %v855 = vadd.f32 0.0, %v854
      %v856 = vpop.f32.mrf.mxu0
      %857 = vdwg.mxu0
      %v858 = vld [vmem:[%s5] sm:$0xf]
      %v859 = vld [vmem:[%s5 + $0x4] sm:$0xf]
      %v860 = vld [vmem:[%s5 + $0x8] sm:$0xf]
      %v861 = vld [vmem:[%s5 + $0xc] sm:$0xf]
      %v862 = vld [vmem:[%s6] sm:$0xf]
      %v863 = vld [vmem:[%s6 + $0x4] sm:$0xf]
      %v866 = vunpack.c.l.b16 %v862
      %v867 = vunpack.c.l.b16 %v863
      %v868 = vpack.c.b16 %v867, %v866
      %vm870 = vcmask 130048
      %v872 = vsel %vm870, %v659, 0
      %v875 = vsel %vm870, %v660, 0
      %v878 = vsel %vm870, %v661, 0
      %v881 = vsel %vm870, %v662, 0
      %883 = vmatprep.subr.bf16.mxu0 0
      %884 = vmatpush1.bf16.msra.mxu0 0
      %885 = vmatprep.subr.bf16.mxu0 0
      %886 = vmatpush1.bf16.msra.mxu0 0
      %887 = vmatprep.subr.bf16.mxu0 0
      %888 = vmatpush1.bf16.msra.mxu0 0
      %889 = vmatprep.subr.bf16.mxu0 0
      %890 = vmatpush1.bf16.msra.mxu0 0
      %891 = vmatprep.subr.bf16.mxu0 0
      %892 = vmatpush1.bf16.msra.mxu0 0
      %893 = vmatprep.subr.bf16.mxu0 0
      %894 = vmatpush1.bf16.msra.mxu0 0
      %895 = vmatprep.subr.bf16.mxu0 0
      %896 = vmatpush1.bf16.msra.mxu0 0
      %897 = vmatprep.subr.bf16.mxu0 0
      %898 = vmatpush1.bf16.msra.mxu0 %v868
      %899 = vmatprep.subr.bf16.mxu0 0
      %900 = vmatpush2.bf16.msra.mxu0 0
      %901 = vmatprep.subr.bf16.mxu0 0
      %902 = vmatpush2.bf16.msra.mxu0 0
      %903 = vmatprep.subr.bf16.mxu0 0
      %904 = vmatpush2.bf16.msra.mxu0 0
      %905 = vmatprep.subr.bf16.mxu0 0
      %906 = vmatpush2.bf16.msra.mxu0 0
      %907 = vmatprep.subr.bf16.mxu0 0
      %908 = vmatpush2.bf16.msra.mxu0 0
      %909 = vmatprep.subr.bf16.mxu0 0
      %910 = vmatpush2.bf16.msra.mxu0 0
      %911 = vmatprep.subr.bf16.mxu0 0
      %912 = vmatpush2.bf16.msra.mxu0 0
      %913 = vmatprep.subr.bf16.mxu0 0
      %914 = vmatpush2.bf16.msra.mxu0 0
      %915 = vmatprep.mubr.bf16.mxu0 0
      %916 = vmatmul.mubr.bf16.gmra.mxu0 %v872
      %v917 = vpop.f32.mrf.mxu0
      %v918 = vadd.f32 0.0, %v917
      %v919 = vpop.f32.mrf.mxu0
      %v920 = vpop.f32.mrf.mxu0
      %v921 = vadd.f32 0.0, %v920
      %v922 = vpop.f32.mrf.mxu0
      %923 = vmatprep.mubr.bf16.mxu0 0
      %924 = vmatmul.mubr.bf16.gmra.mxu0 %v875
      %v925 = vpop.f32.mrf.mxu0
      %v926 = vadd.f32 0.0, %v925
      %v927 = vpop.f32.mrf.mxu0
      %v928 = vpop.f32.mrf.mxu0
      %v929 = vadd.f32 0.0, %v928
      %v930 = vpop.f32.mrf.mxu0
      %931 = vmatprep.mubr.bf16.mxu0 0
      %932 = vmatmul.mubr.bf16.gmra.mxu0 %v878
      %v933 = vpop.f32.mrf.mxu0
      %v934 = vadd.f32 0.0, %v933
      %v935 = vpop.f32.mrf.mxu0
      %v936 = vpop.f32.mrf.mxu0
      %v937 = vadd.f32 0.0, %v936
      %v938 = vpop.f32.mrf.mxu0
      %939 = vmatprep.mubr.bf16.mxu0 0
      %940 = vmatmul.mubr.bf16.gmra.mxu0 %v881
      %v941 = vpop.f32.mrf.mxu0
      %v942 = vadd.f32 0.0, %v941
      %v943 = vpop.f32.mrf.mxu0
      %v944 = vpop.f32.mrf.mxu0
      %v945 = vadd.f32 0.0, %v944
      %v946 = vpop.f32.mrf.mxu0
      %947 = vdwg.mxu0
      %v952 = vunpack.c.l.b16 %v858
      %v953 = vunpack.c.l.b16 %v859
      %v954 = vunpack.c.l.b16 %v860
      %v955 = vunpack.c.l.b16 %v861
      %v956 = vpack.c.b16 %v953, %v952
      %v957 = vpack.c.b16 %v955, %v954
      %960 = vmatprep.subr.bf16.mxu0 0
      %961 = vmatpush1.bf16.msra.mxu0 0
      %962 = vmatprep.subr.bf16.mxu0 0
      %963 = vmatpush1.bf16.msra.mxu0 0
      %964 = vmatprep.subr.bf16.mxu0 0
      %965 = vmatpush1.bf16.msra.mxu0 0
      %966 = vmatprep.subr.bf16.mxu0 0
      %967 = vmatpush1.bf16.msra.mxu0 0
      %968 = vmatprep.subr.bf16.mxu0 0
      %969 = vmatpush1.bf16.msra.mxu0 0
      %970 = vmatprep.subr.bf16.mxu0 0
      %971 = vmatpush1.bf16.msra.mxu0 0
      %972 = vmatprep.subr.bf16.mxu0 0
      %973 = vmatpush1.bf16.msra.mxu0 %v957
      %974 = vmatprep.subr.bf16.mxu0 0
      %975 = vmatpush1.bf16.msra.mxu0 %v956
      %976 = vmatprep.subr.bf16.mxu0 0
      %977 = vmatpush2.bf16.msra.mxu0 0
      %978 = vmatprep.subr.bf16.mxu0 0
      %979 = vmatpush2.bf16.msra.mxu0 0
      %980 = vmatprep.subr.bf16.mxu0 0
      %981 = vmatpush2.bf16.msra.mxu0 0
      %982 = vmatprep.subr.bf16.mxu0 0
      %983 = vmatpush2.bf16.msra.mxu0 0
      %984 = vmatprep.subr.bf16.mxu0 0
      %985 = vmatpush2.bf16.msra.mxu0 0
      %986 = vmatprep.subr.bf16.mxu0 0
      %987 = vmatpush2.bf16.msra.mxu0 0
      %988 = vmatprep.subr.bf16.mxu0 0
      %989 = vmatpush2.bf16.msra.mxu0 0
      %990 = vmatprep.subr.bf16.mxu0 0
      %991 = vmatpush2.bf16.msra.mxu0 0
      %992 = vmatprep.mubr.bf16.mxu0 0
      %993 = vmatmul.mubr.bf16.gmra.mxu0 %v782
      %v994 = vpop.f32.mrf.mxu0
      %v995 = vadd.f32 %v918, %v994
      %v996 = vpop.f32.mrf.mxu0
      %v997 = vpop.f32.mrf.mxu0
      %v998 = vadd.f32 %v921, %v997
      %v999 = vpop.f32.mrf.mxu0
      %1000 = vmatprep.mubr.bf16.mxu0 0
      %1001 = vmatmul.mubr.bf16.gmra.mxu0 %v785
      %v1002 = vpop.f32.mrf.mxu0
      %v1003 = vadd.f32 %v926, %v1002
      %v1004 = vpop.f32.mrf.mxu0
      %v1005 = vpop.f32.mrf.mxu0
      %v1006 = vadd.f32 %v929, %v1005
      %v1007 = vpop.f32.mrf.mxu0
      %1008 = vmatprep.mubr.bf16.mxu0 0
      %1009 = vmatmul.mubr.bf16.gmra.mxu0 %v788
      %v1010 = vpop.f32.mrf.mxu0
      %v1011 = vadd.f32 %v934, %v1010
      %v1012 = vpop.f32.mrf.mxu0
      %v1013 = vpop.f32.mrf.mxu0
      %v1014 = vadd.f32 %v937, %v1013
      %v1015 = vpop.f32.mrf.mxu0
      %1016 = vmatprep.mubr.bf16.mxu0 0
      %1017 = vmatmul.mubr.bf16.gmra.mxu0 %v791
      %v1018 = vpop.f32.mrf.mxu0
      %v1019 = vadd.f32 %v942, %v1018
      %v1020 = vpop.f32.mrf.mxu0
      %v1021 = vpop.f32.mrf.mxu0
      %v1022 = vadd.f32 %v945, %v1021
      %v1023 = vpop.f32.mrf.mxu0
      %1024 = vdwg.mxu0
      %v1025 = vpack.c.bf16 %v998, %v995
      %v1026 = vpack.c.bf16 %v1006, %v1003
      %v1027 = vpack.c.bf16 %v1014, %v1011
      %v1028 = vpack.c.bf16 %v1022, %v1019
      %v1029 = vpack.c.bf16 %v758, %v757
      %v1030 = vpack.c.bf16 %v760, %v759
      %v1031 = vpack.c.bf16 %v762, %v761
      %v1032 = vpack.c.bf16 %v764, %v763
      %v1033 = vpack.c.bf16 %v831, %v828
      %v1034 = vpack.c.bf16 %v839, %v836
      %v1035 = vpack.c.bf16 %v847, %v844
      %v1036 = vpack.c.bf16 %v855, %v852
      %vm1037 = vcmask 64512
      %v1039 = vsel %vm1037, %v1029, 0
      %v1042 = vsel %vm1037, %v1030, 0
      %v1045 = vsel %vm1037, %v1031, 0
      %v1048 = vsel %vm1037, %v1032, 0
      %v1051 = vsel %vm1037, %v1033, 0
      %v1054 = vsel %vm1037, %v1034, 0
      %v1057 = vsel %vm1037, %v1035, 0
      %v1060 = vsel %vm1037, %v1036, 0
      %1062 = vmatprep.subr.bf16.mxu0 0
      %1063 = vmatpush1.bf16.xpose.msra.mxu0 0
      %1064 = vmatprep.subr.bf16.mxu0 0
      %1065 = vmatpush1.bf16.xpose.msra.mxu0 0
      %1066 = vmatprep.subr.bf16.mxu0 0
      %1067 = vmatpush1.bf16.xpose.msra.mxu0 0
      %1068 = vmatprep.subr.bf16.mxu0 0
      %1069 = vmatpush1.bf16.xpose.msra.mxu0 0
      %1070 = vmatprep.subr.bf16.mxu0 0
      %1071 = vmatpush1.bf16.xpose.msra.mxu0 %v1060
      %1072 = vmatprep.subr.bf16.mxu0 0
      %1073 = vmatpush1.bf16.xpose.msra.mxu0 %v1057
      %1074 = vmatprep.subr.bf16.mxu0 0
      %1075 = vmatpush1.bf16.xpose.msra.mxu0 %v1054
      %1076 = vmatprep.subr.bf16.mxu0 0
      %1077 = vmatpush1.bf16.xpose.msra.mxu0 %v1051
      %1078 = vmatprep.subr.bf16.mxu0 0
      %1079 = vmatpush2.bf16.xpose.msra.mxu0 0
      %1080 = vmatprep.subr.bf16.mxu0 0
      %1081 = vmatpush2.bf16.xpose.msra.mxu0 0
      %1082 = vmatprep.subr.bf16.mxu0 0
      %1083 = vmatpush2.bf16.xpose.msra.mxu0 0
      %1084 = vmatprep.subr.bf16.mxu0 0
      %1085 = vmatpush2.bf16.xpose.msra.mxu0 0
      %1086 = vmatprep.subr.bf16.mxu0 0
      %1087 = vmatpush2.bf16.xpose.msra.mxu0 0
      %1088 = vmatprep.subr.bf16.mxu0 0
      %1089 = vmatpush2.bf16.xpose.msra.mxu0 0
      %1090 = vmatprep.subr.bf16.mxu0 0
      %1091 = vmatpush2.bf16.xpose.msra.mxu0 0
      %1092 = vmatprep.subr.bf16.mxu0 0
      %1093 = vmatpush2.bf16.xpose.msra.mxu0 0
      %1094 = vmatprep.mubr.bf16.mxu0 0
      %1095 = vmatmul.mubr.bf16.gmra.mxu0 %v1039
      %v1096 = vpop.f32.mrf.mxu0
      %v1097 = vadd.f32 0.0, %v1096
      %v1098 = vpop.f32.mrf.mxu0
      %v1099 = vpop.f32.mrf.mxu0
      %v1100 = vadd.f32 0.0, %v1099
      %v1101 = vpop.f32.mrf.mxu0
      %1102 = vmatprep.mubr.bf16.mxu0 0
      %1103 = vmatmul.mubr.bf16.gmra.mxu0 %v1042
      %v1104 = vpop.f32.mrf.mxu0
      %v1105 = vadd.f32 0.0, %v1104
      %v1106 = vpop.f32.mrf.mxu0
      %v1107 = vpop.f32.mrf.mxu0
      %v1108 = vadd.f32 0.0, %v1107
      %v1109 = vpop.f32.mrf.mxu0
      %1110 = vmatprep.mubr.bf16.mxu0 0
      %1111 = vmatmul.mubr.bf16.gmra.mxu0 %v1045
      %v1112 = vpop.f32.mrf.mxu0
      %v1113 = vadd.f32 0.0, %v1112
      %v1114 = vpop.f32.mrf.mxu0
      %v1115 = vpop.f32.mrf.mxu0
      %v1116 = vadd.f32 0.0, %v1115
      %v1117 = vpop.f32.mrf.mxu0
      %1118 = vmatprep.mubr.bf16.mxu0 0
      %1119 = vmatmul.mubr.bf16.gmra.mxu0 %v1048
      %v1120 = vpop.f32.mrf.mxu0
      %v1121 = vadd.f32 0.0, %v1120
      %v1122 = vpop.f32.mrf.mxu0
      %v1123 = vpop.f32.mrf.mxu0
      %v1124 = vadd.f32 0.0, %v1123
      %v1125 = vpop.f32.mrf.mxu0
      %1126 = vdwg.mxu0
      %s1127 = scalar_lea.vmem %s3, 16
      %v1128 = vld [vmem:[%s1127] sm:$0xf]
      %v1129 = vld [vmem:[%s1127 + $0x4] sm:$0xf]
      %v1130 = vld [vmem:[%s1127 + $0x8] sm:$0xf]
      %v1131 = vld [vmem:[%s1127 + $0xc] sm:$0xf]
      %v1136 = vunpack.c.l.b16 %v1128
      %v1137 = vunpack.c.l.b16 %v1129
      %v1138 = vunpack.c.l.b16 %v1130
      %v1139 = vunpack.c.l.b16 %v1131
      %v1140 = vpack.c.b16 %v1137, %v1136
      %v1141 = vpack.c.b16 %v1139, %v1138
      %1144 = vmatprep.subr.bf16.mxu0 0
      %1145 = vmatpush1.bf16.msra.mxu0 0
      %1146 = vmatprep.subr.bf16.mxu0 0
      %1147 = vmatpush1.bf16.msra.mxu0 0
      %1148 = vmatprep.subr.bf16.mxu0 0
      %1149 = vmatpush1.bf16.msra.mxu0 0
      %1150 = vmatprep.subr.bf16.mxu0 0
      %1151 = vmatpush1.bf16.msra.mxu0 0
      %1152 = vmatprep.subr.bf16.mxu0 0
      %1153 = vmatpush1.bf16.msra.mxu0 0
      %1154 = vmatprep.subr.bf16.mxu0 0
      %1155 = vmatpush1.bf16.msra.mxu0 0
      %1156 = vmatprep.subr.bf16.mxu0 0
      %1157 = vmatpush1.bf16.msra.mxu0 %v1141
      %1158 = vmatprep.subr.bf16.mxu0 0
      %1159 = vmatpush1.bf16.msra.mxu0 %v1140
      %1160 = vmatprep.subr.bf16.mxu0 0
      %1161 = vmatpush2.bf16.msra.mxu0 0
      %1162 = vmatprep.subr.bf16.mxu0 0
      %1163 = vmatpush2.bf16.msra.mxu0 0
      %1164 = vmatprep.subr.bf16.mxu0 0
      %1165 = vmatpush2.bf16.msra.mxu0 0
      %1166 = vmatprep.subr.bf16.mxu0 0
      %1167 = vmatpush2.bf16.msra.mxu0 0
      %1168 = vmatprep.subr.bf16.mxu0 0
      %1169 = vmatpush2.bf16.msra.mxu0 0
      %1170 = vmatprep.subr.bf16.mxu0 0
      %1171 = vmatpush2.bf16.msra.mxu0 0
      %1172 = vmatprep.subr.bf16.mxu0 0
      %1173 = vmatpush2.bf16.msra.mxu0 0
      %1174 = vmatprep.subr.bf16.mxu0 0
      %1175 = vmatpush2.bf16.msra.mxu0 0
      %1176 = vmatprep.mubr.bf16.mxu0 0
      %1177 = vmatmul.mubr.bf16.gmra.mxu0 %v681
      %v1178 = vpop.f32.mrf.mxu0
      %v1179 = vadd.f32 0.0, %v1178
      %v1180 = vpop.f32.mrf.mxu0
      %v1181 = vpop.f32.mrf.mxu0
      %v1182 = vadd.f32 0.0, %v1181
      %v1183 = vpop.f32.mrf.mxu0
      %1184 = vmatprep.mubr.bf16.mxu0 0
      %1185 = vmatmul.mubr.bf16.gmra.mxu0 %v684
      %v1186 = vpop.f32.mrf.mxu0
      %v1187 = vadd.f32 0.0, %v1186
      %v1188 = vpop.f32.mrf.mxu0
      %v1189 = vpop.f32.mrf.mxu0
      %v1190 = vadd.f32 0.0, %v1189
      %v1191 = vpop.f32.mrf.mxu0
      %1192 = vmatprep.mubr.bf16.mxu0 0
      %1193 = vmatmul.mubr.bf16.gmra.mxu0 %v687
      %v1194 = vpop.f32.mrf.mxu0
      %v1195 = vadd.f32 0.0, %v1194
      %v1196 = vpop.f32.mrf.mxu0
      %v1197 = vpop.f32.mrf.mxu0
      %v1198 = vadd.f32 0.0, %v1197
      %v1199 = vpop.f32.mrf.mxu0
      %1200 = vmatprep.mubr.bf16.mxu0 0
      %1201 = vmatmul.mubr.bf16.gmra.mxu0 %v690
      %v1202 = vpop.f32.mrf.mxu0
      %v1203 = vadd.f32 0.0, %v1202
      %v1204 = vpop.f32.mrf.mxu0
      %v1205 = vpop.f32.mrf.mxu0
      %v1206 = vadd.f32 0.0, %v1205
      %v1207 = vpop.f32.mrf.mxu0
      %1208 = vdwg.mxu0
      %v1209 = vmul.f32 %v1179, 0.35355338
      %v1210 = vmul.f32 %v1182, 0.35355338
      %v1211 = vmul.f32 %v1187, 0.35355338
      %v1212 = vmul.f32 %v1190, 0.35355338
      %v1213 = vmul.f32 %v1195, 0.35355338
      %v1214 = vmul.f32 %v1198, 0.35355338
      %v1215 = vmul.f32 %v1203, 0.35355338
      %v1216 = vmul.f32 %v1206, 0.35355338
      %s1217 = scalar_lea.vmem %s4, 16
      %v1218 = vld [vmem:[%s1217] sm:$0xf]
      %v1219 = vld [vmem:[%s1217 + $0x4] sm:$0xf]
      %v1220 = vld [vmem:[%s1217 + $0x8] sm:$0xf]
      %v1221 = vld [vmem:[%s1217 + $0xc] sm:$0xf]
      %v1226 = vunpack.c.l.b16 %v1218
      %v1227 = vunpack.c.l.b16 %v1219
      %v1228 = vunpack.c.l.b16 %v1220
      %v1229 = vunpack.c.l.b16 %v1221
      %v1230 = vpack.c.b16 %v1227, %v1226
      %v1231 = vpack.c.b16 %v1229, %v1228
      %1234 = vmatprep.subr.bf16.mxu0 0
      %1235 = vmatpush1.bf16.msra.mxu0 0
      %1236 = vmatprep.subr.bf16.mxu0 0
      %1237 = vmatpush1.bf16.msra.mxu0 0
      %1238 = vmatprep.subr.bf16.mxu0 0
      %1239 = vmatpush1.bf16.msra.mxu0 0
      %1240 = vmatprep.subr.bf16.mxu0 0
      %1241 = vmatpush1.bf16.msra.mxu0 0
      %1242 = vmatprep.subr.bf16.mxu0 0
      %1243 = vmatpush1.bf16.msra.mxu0 0
      %1244 = vmatprep.subr.bf16.mxu0 0
      %1245 = vmatpush1.bf16.msra.mxu0 0
      %1246 = vmatprep.subr.bf16.mxu0 0
      %1247 = vmatpush1.bf16.msra.mxu0 %v1231
      %1248 = vmatprep.subr.bf16.mxu0 0
      %1249 = vmatpush1.bf16.msra.mxu0 %v1230
      %1250 = vmatprep.subr.bf16.mxu0 0
      %1251 = vmatpush2.bf16.msra.mxu0 0
      %1252 = vmatprep.subr.bf16.mxu0 0
      %1253 = vmatpush2.bf16.msra.mxu0 0
      %1254 = vmatprep.subr.bf16.mxu0 0
      %1255 = vmatpush2.bf16.msra.mxu0 0
      %1256 = vmatprep.subr.bf16.mxu0 0
      %1257 = vmatpush2.bf16.msra.mxu0 0
      %1258 = vmatprep.subr.bf16.mxu0 0
      %1259 = vmatpush2.bf16.msra.mxu0 0
      %1260 = vmatprep.subr.bf16.mxu0 0
      %1261 = vmatpush2.bf16.msra.mxu0 0
      %1262 = vmatprep.subr.bf16.mxu0 0
      %1263 = vmatpush2.bf16.msra.mxu0 0
      %1264 = vmatprep.subr.bf16.mxu0 0
      %1265 = vmatpush2.bf16.msra.mxu0 0
      %1266 = vmatprep.mubr.bf16.mxu0 0
      %1267 = vmatmul.mubr.bf16.gmra.mxu0 %v782
      %v1268 = vpop.f32.mrf.mxu0
      %v1269 = vadd.f32 0.0, %v1268
      %v1270 = vpop.f32.mrf.mxu0
      %v1271 = vpop.f32.mrf.mxu0
      %v1272 = vadd.f32 0.0, %v1271
      %v1273 = vpop.f32.mrf.mxu0
      %1274 = vmatprep.mubr.bf16.mxu0 0
      %1275 = vmatmul.mubr.bf16.gmra.mxu0 %v785
      %v1276 = vpop.f32.mrf.mxu0
      %v1277 = vadd.f32 0.0, %v1276
      %v1278 = vpop.f32.mrf.mxu0
      %v1279 = vpop.f32.mrf.mxu0
      %v1280 = vadd.f32 0.0, %v1279
      %v1281 = vpop.f32.mrf.mxu0
      %1282 = vmatprep.mubr.bf16.mxu0 0
      %1283 = vmatmul.mubr.bf16.gmra.mxu0 %v788
      %v1284 = vpop.f32.mrf.mxu0
      %v1285 = vadd.f32 0.0, %v1284
      %v1286 = vpop.f32.mrf.mxu0
      %v1287 = vpop.f32.mrf.mxu0
      %v1288 = vadd.f32 0.0, %v1287
      %v1289 = vpop.f32.mrf.mxu0
      %1290 = vmatprep.mubr.bf16.mxu0 0
      %1291 = vmatmul.mubr.bf16.gmra.mxu0 %v791
      %v1292 = vpop.f32.mrf.mxu0
      %v1293 = vadd.f32 0.0, %v1292
      %v1294 = vpop.f32.mrf.mxu0
      %v1295 = vpop.f32.mrf.mxu0
      %v1296 = vadd.f32 0.0, %v1295
      %v1297 = vpop.f32.mrf.mxu0
      %1298 = vdwg.mxu0
      %s1299 = scalar_lea.vmem %s5, 16
      %v1300 = vld [vmem:[%s1299] sm:$0xf]
      %v1301 = vld [vmem:[%s1299 + $0x4] sm:$0xf]
      %v1302 = vld [vmem:[%s1299 + $0x8] sm:$0xf]
      %v1303 = vld [vmem:[%s1299 + $0xc] sm:$0xf]
      %s1304 = scalar_lea.vmem %s6, 8
      %v1305 = vld [vmem:[%s1304] sm:$0xf]
      %v1306 = vld [vmem:[%s1304 + $0x4] sm:$0xf]
      %v1309 = vunpack.c.l.b16 %v1305
      %v1310 = vunpack.c.l.b16 %v1306
      %v1311 = vpack.c.b16 %v1310, %v1309
      %1313 = vmatprep.subr.bf16.mxu0 0
      %1314 = vmatpush1.bf16.msra.mxu0 0
      %1315 = vmatprep.subr.bf16.mxu0 0
      %1316 = vmatpush1.bf16.msra.mxu0 0
      %1317 = vmatprep.subr.bf16.mxu0 0
      %1318 = vmatpush1.bf16.msra.mxu0 0
      %1319 = vmatprep.subr.bf16.mxu0 0
      %1320 = vmatpush1.bf16.msra.mxu0 0
      %1321 = vmatprep.subr.bf16.mxu0 0
      %1322 = vmatpush1.bf16.msra.mxu0 0
      %1323 = vmatprep.subr.bf16.mxu0 0
      %1324 = vmatpush1.bf16.msra.mxu0 0
      %1325 = vmatprep.subr.bf16.mxu0 0
      %1326 = vmatpush1.bf16.msra.mxu0 0
      %1327 = vmatprep.subr.bf16.mxu0 0
      %1328 = vmatpush1.bf16.msra.mxu0 %v1311
      %1329 = vmatprep.subr.bf16.mxu0 0
      %1330 = vmatpush2.bf16.msra.mxu0 0
      %1331 = vmatprep.subr.bf16.mxu0 0
      %1332 = vmatpush2.bf16.msra.mxu0 0
      %1333 = vmatprep.subr.bf16.mxu0 0
      %1334 = vmatpush2.bf16.msra.mxu0 0
      %1335 = vmatprep.subr.bf16.mxu0 0
      %1336 = vmatpush2.bf16.msra.mxu0 0
      %1337 = vmatprep.subr.bf16.mxu0 0
      %1338 = vmatpush2.bf16.msra.mxu0 0
      %1339 = vmatprep.subr.bf16.mxu0 0
      %1340 = vmatpush2.bf16.msra.mxu0 0
      %1341 = vmatprep.subr.bf16.mxu0 0
      %1342 = vmatpush2.bf16.msra.mxu0 0
      %1343 = vmatprep.subr.bf16.mxu0 0
      %1344 = vmatpush2.bf16.msra.mxu0 0
      %1345 = vmatprep.mubr.bf16.mxu0 0
      %1346 = vmatmul.mubr.bf16.gmra.mxu0 %v872
      %v1347 = vpop.f32.mrf.mxu0
      %v1348 = vadd.f32 0.0, %v1347
      %v1349 = vpop.f32.mrf.mxu0
      %v1350 = vpop.f32.mrf.mxu0
      %v1351 = vadd.f32 0.0, %v1350
      %v1352 = vpop.f32.mrf.mxu0
      %1353 = vmatprep.mubr.bf16.mxu0 0
      %1354 = vmatmul.mubr.bf16.gmra.mxu0 %v875
      %v1355 = vpop.f32.mrf.mxu0
      %v1356 = vadd.f32 0.0, %v1355
      %v1357 = vpop.f32.mrf.mxu0
      %v1358 = vpop.f32.mrf.mxu0
      %v1359 = vadd.f32 0.0, %v1358
      %v1360 = vpop.f32.mrf.mxu0
      %1361 = vmatprep.mubr.bf16.mxu0 0
      %1362 = vmatmul.mubr.bf16.gmra.mxu0 %v878
      %v1363 = vpop.f32.mrf.mxu0
      %v1364 = vadd.f32 0.0, %v1363
      %v1365 = vpop.f32.mrf.mxu0
      %v1366 = vpop.f32.mrf.mxu0
      %v1367 = vadd.f32 0.0, %v1366
      %v1368 = vpop.f32.mrf.mxu0
      %1369 = vmatprep.mubr.bf16.mxu0 0
      %1370 = vmatmul.mubr.bf16.gmra.mxu0 %v881
      %v1371 = vpop.f32.mrf.mxu0
      %v1372 = vadd.f32 0.0, %v1371
      %v1373 = vpop.f32.mrf.mxu0
      %v1374 = vpop.f32.mrf.mxu0
      %v1375 = vadd.f32 0.0, %v1374
      %v1376 = vpop.f32.mrf.mxu0
      %1377 = vdwg.mxu0
      %v1382 = vunpack.c.l.b16 %v1300
      %v1383 = vunpack.c.l.b16 %v1301
      %v1384 = vunpack.c.l.b16 %v1302
      %v1385 = vunpack.c.l.b16 %v1303
      %v1386 = vpack.c.b16 %v1383, %v1382
      %v1387 = vpack.c.b16 %v1385, %v1384
      %1390 = vmatprep.subr.bf16.mxu0 0
      %1391 = vmatpush1.bf16.msra.mxu0 0
      %1392 = vmatprep.subr.bf16.mxu0 0
      %1393 = vmatpush1.bf16.msra.mxu0 0
      %1394 = vmatprep.subr.bf16.mxu0 0
      %1395 = vmatpush1.bf16.msra.mxu0 0
      %1396 = vmatprep.subr.bf16.mxu0 0
      %1397 = vmatpush1.bf16.msra.mxu0 0
      %1398 = vmatprep.subr.bf16.mxu0 0
      %1399 = vmatpush1.bf16.msra.mxu0 0
      %1400 = vmatprep.subr.bf16.mxu0 0
      %1401 = vmatpush1.bf16.msra.mxu0 0
      %1402 = vmatprep.subr.bf16.mxu0 0
      %1403 = vmatpush1.bf16.msra.mxu0 %v1387
      %1404 = vmatprep.subr.bf16.mxu0 0
      %1405 = vmatpush1.bf16.msra.mxu0 %v1386
      %1406 = vmatprep.subr.bf16.mxu0 0
      %1407 = vmatpush2.bf16.msra.mxu0 0
      %1408 = vmatprep.subr.bf16.mxu0 0
      %1409 = vmatpush2.bf16.msra.mxu0 0
      %1410 = vmatprep.subr.bf16.mxu0 0
      %1411 = vmatpush2.bf16.msra.mxu0 0
      %1412 = vmatprep.subr.bf16.mxu0 0
      %1413 = vmatpush2.bf16.msra.mxu0 0
      %1414 = vmatprep.subr.bf16.mxu0 0
      %1415 = vmatpush2.bf16.msra.mxu0 0
      %1416 = vmatprep.subr.bf16.mxu0 0
      %1417 = vmatpush2.bf16.msra.mxu0 0
      %1418 = vmatprep.subr.bf16.mxu0 0
      %1419 = vmatpush2.bf16.msra.mxu0 0
      %1420 = vmatprep.subr.bf16.mxu0 0
      %1421 = vmatpush2.bf16.msra.mxu0 0
      %1422 = vmatprep.mubr.bf16.mxu0 0
      %1423 = vmatmul.mubr.bf16.gmra.mxu0 %v782
      %v1424 = vpop.f32.mrf.mxu0
      %v1425 = vadd.f32 %v1348, %v1424
      %v1426 = vpop.f32.mrf.mxu0
      %v1427 = vpop.f32.mrf.mxu0
      %v1428 = vadd.f32 %v1351, %v1427
      %v1429 = vpop.f32.mrf.mxu0
      %1430 = vmatprep.mubr.bf16.mxu0 0
      %1431 = vmatmul.mubr.bf16.gmra.mxu0 %v785
      %v1432 = vpop.f32.mrf.mxu0
      %v1433 = vadd.f32 %v1356, %v1432
      %v1434 = vpop.f32.mrf.mxu0
      %v1435 = vpop.f32.mrf.mxu0
      %v1436 = vadd.f32 %v1359, %v1435
      %v1437 = vpop.f32.mrf.mxu0
      %1438 = vmatprep.mubr.bf16.mxu0 0
      %1439 = vmatmul.mubr.bf16.gmra.mxu0 %v788
      %v1440 = vpop.f32.mrf.mxu0
      %v1441 = vadd.f32 %v1364, %v1440
      %v1442 = vpop.f32.mrf.mxu0
      %v1443 = vpop.f32.mrf.mxu0
      %v1444 = vadd.f32 %v1367, %v1443
      %v1445 = vpop.f32.mrf.mxu0
      %1446 = vmatprep.mubr.bf16.mxu0 0
      %1447 = vmatmul.mubr.bf16.gmra.mxu0 %v791
      %v1448 = vpop.f32.mrf.mxu0
      %v1449 = vadd.f32 %v1372, %v1448
      %v1450 = vpop.f32.mrf.mxu0
      %v1451 = vpop.f32.mrf.mxu0
      %v1452 = vadd.f32 %v1375, %v1451
      %v1453 = vpop.f32.mrf.mxu0
      %1454 = vdwg.mxu0
      %v1455 = vpack.c.bf16 %v1428, %v1425
      %v1456 = vpack.c.bf16 %v1436, %v1433
      %v1457 = vpack.c.bf16 %v1444, %v1441
      %v1458 = vpack.c.bf16 %v1452, %v1449
      %v1459 = vpack.c.bf16 %v1210, %v1209
      %v1460 = vpack.c.bf16 %v1212, %v1211
      %v1461 = vpack.c.bf16 %v1214, %v1213
      %v1462 = vpack.c.bf16 %v1216, %v1215
      %v1463 = vpack.c.bf16 %v1272, %v1269
      %v1464 = vpack.c.bf16 %v1280, %v1277
      %v1465 = vpack.c.bf16 %v1288, %v1285
      %v1466 = vpack.c.bf16 %v1296, %v1293
      %v1468 = vsel %vm1037, %v1459, 0
      %v1471 = vsel %vm1037, %v1460, 0
      %v1474 = vsel %vm1037, %v1461, 0
      %v1477 = vsel %vm1037, %v1462, 0
      %v1480 = vsel %vm1037, %v1463, 0
      %v1483 = vsel %vm1037, %v1464, 0
      %v1486 = vsel %vm1037, %v1465, 0
      %v1489 = vsel %vm1037, %v1466, 0
      %1491 = vmatprep.subr.bf16.mxu0 0
      %1492 = vmatpush1.bf16.xpose.msra.mxu0 0
      %1493 = vmatprep.subr.bf16.mxu0 0
      %1494 = vmatpush1.bf16.xpose.msra.mxu0 0
      %1495 = vmatprep.subr.bf16.mxu0 0
      %1496 = vmatpush1.bf16.xpose.msra.mxu0 0
      %1497 = vmatprep.subr.bf16.mxu0 0
      %1498 = vmatpush1.bf16.xpose.msra.mxu0 0
      %1499 = vmatprep.subr.bf16.mxu0 0
      %1500 = vmatpush1.bf16.xpose.msra.mxu0 %v1489
      %1501 = vmatprep.subr.bf16.mxu0 0
      %1502 = vmatpush1.bf16.xpose.msra.mxu0 %v1486
      %1503 = vmatprep.subr.bf16.mxu0 0
      %1504 = vmatpush1.bf16.xpose.msra.mxu0 %v1483
      %1505 = vmatprep.subr.bf16.mxu0 0
      %1506 = vmatpush1.bf16.xpose.msra.mxu0 %v1480
      %1507 = vmatprep.subr.bf16.mxu0 0
      %1508 = vmatpush2.bf16.xpose.msra.mxu0 0
      %1509 = vmatprep.subr.bf16.mxu0 0
      %1510 = vmatpush2.bf16.xpose.msra.mxu0 0
      %1511 = vmatprep.subr.bf16.mxu0 0
      %1512 = vmatpush2.bf16.xpose.msra.mxu0 0
      %1513 = vmatprep.subr.bf16.mxu0 0
      %1514 = vmatpush2.bf16.xpose.msra.mxu0 0
      %1515 = vmatprep.subr.bf16.mxu0 0
      %1516 = vmatpush2.bf16.xpose.msra.mxu0 0
      %1517 = vmatprep.subr.bf16.mxu0 0
      %1518 = vmatpush2.bf16.xpose.msra.mxu0 0
      %1519 = vmatprep.subr.bf16.mxu0 0
      %1520 = vmatpush2.bf16.xpose.msra.mxu0 0
      %1521 = vmatprep.subr.bf16.mxu0 0
      %1522 = vmatpush2.bf16.xpose.msra.mxu0 0
      %1523 = vmatprep.mubr.bf16.mxu0 0
      %1524 = vmatmul.mubr.bf16.gmra.mxu0 %v1468
      %v1525 = vpop.f32.mrf.mxu0
      %v1526 = vadd.f32 0.0, %v1525
      %v1527 = vpop.f32.mrf.mxu0
      %v1528 = vpop.f32.mrf.mxu0
      %v1529 = vadd.f32 0.0, %v1528
      %v1530 = vpop.f32.mrf.mxu0
      %1531 = vmatprep.mubr.bf16.mxu0 0
      %1532 = vmatmul.mubr.bf16.gmra.mxu0 %v1471
      %v1533 = vpop.f32.mrf.mxu0
      %v1534 = vadd.f32 0.0, %v1533
      %v1535 = vpop.f32.mrf.mxu0
      %v1536 = vpop.f32.mrf.mxu0
      %v1537 = vadd.f32 0.0, %v1536
      %v1538 = vpop.f32.mrf.mxu0
      %1539 = vmatprep.mubr.bf16.mxu0 0
      %1540 = vmatmul.mubr.bf16.gmra.mxu0 %v1474
      %v1541 = vpop.f32.mrf.mxu0
      %v1542 = vadd.f32 0.0, %v1541
      %v1543 = vpop.f32.mrf.mxu0
      %v1544 = vpop.f32.mrf.mxu0
      %v1545 = vadd.f32 0.0, %v1544
      %v1546 = vpop.f32.mrf.mxu0
      %1547 = vmatprep.mubr.bf16.mxu0 0
      %1548 = vmatmul.mubr.bf16.gmra.mxu0 %v1477
      %v1549 = vpop.f32.mrf.mxu0
      %v1550 = vadd.f32 0.0, %v1549
      %v1551 = vpop.f32.mrf.mxu0
      %v1552 = vpop.f32.mrf.mxu0
      %v1553 = vadd.f32 0.0, %v1552
      %v1554 = vpop.f32.mrf.mxu0
      %1555 = vdwg.mxu0
      %s1556 = scalar_lea.vmem %s3, 32
      %v1557 = vld [vmem:[%s1556] sm:$0xf]
      %v1558 = vld [vmem:[%s1556 + $0x4] sm:$0xf]
      %v1559 = vld [vmem:[%s1556 + $0x8] sm:$0xf]
      %v1560 = vld [vmem:[%s1556 + $0xc] sm:$0xf]
      %v1565 = vunpack.c.l.b16 %v1557
      %v1566 = vunpack.c.l.b16 %v1558
      %v1567 = vunpack.c.l.b16 %v1559
      %v1568 = vunpack.c.l.b16 %v1560
      %v1569 = vpack.c.b16 %v1566, %v1565
      %v1570 = vpack.c.b16 %v1568, %v1567
      %1573 = vmatprep.subr.bf16.mxu0 0
      %1574 = vmatpush1.bf16.msra.mxu0 0
      %1575 = vmatprep.subr.bf16.mxu0 0
      %1576 = vmatpush1.bf16.msra.mxu0 0
      %1577 = vmatprep.subr.bf16.mxu0 0
      %1578 = vmatpush1.bf16.msra.mxu0 0
      %1579 = vmatprep.subr.bf16.mxu0 0
      %1580 = vmatpush1.bf16.msra.mxu0 0
      %1581 = vmatprep.subr.bf16.mxu0 0
      %1582 = vmatpush1.bf16.msra.mxu0 0
      %1583 = vmatprep.subr.bf16.mxu0 0
      %1584 = vmatpush1.bf16.msra.mxu0 0
      %1585 = vmatprep.subr.bf16.mxu0 0
      %1586 = vmatpush1.bf16.msra.mxu0 %v1570
      %1587 = vmatprep.subr.bf16.mxu0 0
      %1588 = vmatpush1.bf16.msra.mxu0 %v1569
      %1589 = vmatprep.subr.bf16.mxu0 0
      %1590 = vmatpush2.bf16.msra.mxu0 0
      %1591 = vmatprep.subr.bf16.mxu0 0
      %1592 = vmatpush2.bf16.msra.mxu0 0
      %1593 = vmatprep.subr.bf16.mxu0 0
      %1594 = vmatpush2.bf16.msra.mxu0 0
      %1595 = vmatprep.subr.bf16.mxu0 0
      %1596 = vmatpush2.bf16.msra.mxu0 0
      %1597 = vmatprep.subr.bf16.mxu0 0
      %1598 = vmatpush2.bf16.msra.mxu0 0
      %1599 = vmatprep.subr.bf16.mxu0 0
      %1600 = vmatpush2.bf16.msra.mxu0 0
      %1601 = vmatprep.subr.bf16.mxu0 0
      %1602 = vmatpush2.bf16.msra.mxu0 0
      %1603 = vmatprep.subr.bf16.mxu0 0
      %1604 = vmatpush2.bf16.msra.mxu0 0
      %1605 = vmatprep.mubr.bf16.mxu0 0
      %1606 = vmatmul.mubr.bf16.gmra.mxu0 %v681
      %v1607 = vpop.f32.mrf.mxu0
      %v1608 = vadd.f32 0.0, %v1607
      %v1609 = vpop.f32.mrf.mxu0
      %v1610 = vpop.f32.mrf.mxu0
      %v1611 = vadd.f32 0.0, %v1610
      %v1612 = vpop.f32.mrf.mxu0
      %1613 = vmatprep.mubr.bf16.mxu0 0
      %1614 = vmatmul.mubr.bf16.gmra.mxu0 %v684
      %v1615 = vpop.f32.mrf.mxu0
      %v1616 = vadd.f32 0.0, %v1615
      %v1617 = vpop.f32.mrf.mxu0
      %v1618 = vpop.f32.mrf.mxu0
      %v1619 = vadd.f32 0.0, %v1618
      %v1620 = vpop.f32.mrf.mxu0
      %1621 = vmatprep.mubr.bf16.mxu0 0
      %1622 = vmatmul.mubr.bf16.gmra.mxu0 %v687
      %v1623 = vpop.f32.mrf.mxu0
      %v1624 = vadd.f32 0.0, %v1623
      %v1625 = vpop.f32.mrf.mxu0
      %v1626 = vpop.f32.mrf.mxu0
      %v1627 = vadd.f32 0.0, %v1626
      %v1628 = vpop.f32.mrf.mxu0
      %1629 = vmatprep.mubr.bf16.mxu0 0
      %1630 = vmatmul.mubr.bf16.gmra.mxu0 %v690
      %v1631 = vpop.f32.mrf.mxu0
      %v1632 = vadd.f32 0.0, %v1631
      %v1633 = vpop.f32.mrf.mxu0
      %v1634 = vpop.f32.mrf.mxu0
      %v1635 = vadd.f32 0.0, %v1634
      %v1636 = vpop.f32.mrf.mxu0
      %1637 = vdwg.mxu0
      %v1638 = vmul.f32 %v1608, 0.35355338
      %v1639 = vmul.f32 %v1611, 0.35355338
      %v1640 = vmul.f32 %v1616, 0.35355338
      %v1641 = vmul.f32 %v1619, 0.35355338
      %v1642 = vmul.f32 %v1624, 0.35355338
      %v1643 = vmul.f32 %v1627, 0.35355338
      %v1644 = vmul.f32 %v1632, 0.35355338
      %v1645 = vmul.f32 %v1635, 0.35355338
      %s1646 = scalar_lea.vmem %s4, 32
      %v1647 = vld [vmem:[%s1646] sm:$0xf]
      %v1648 = vld [vmem:[%s1646 + $0x4] sm:$0xf]
      %v1649 = vld [vmem:[%s1646 + $0x8] sm:$0xf]
      %v1650 = vld [vmem:[%s1646 + $0xc] sm:$0xf]
      %v1655 = vunpack.c.l.b16 %v1647
      %v1656 = vunpack.c.l.b16 %v1648
      %v1657 = vunpack.c.l.b16 %v1649
      %v1658 = vunpack.c.l.b16 %v1650
      %v1659 = vpack.c.b16 %v1656, %v1655
      %v1660 = vpack.c.b16 %v1658, %v1657
      %1663 = vmatprep.subr.bf16.mxu0 0
      %1664 = vmatpush1.bf16.msra.mxu0 0
      %1665 = vmatprep.subr.bf16.mxu0 0
      %1666 = vmatpush1.bf16.msra.mxu0 0
      %1667 = vmatprep.subr.bf16.mxu0 0
      %1668 = vmatpush1.bf16.msra.mxu0 0
      %1669 = vmatprep.subr.bf16.mxu0 0
      %1670 = vmatpush1.bf16.msra.mxu0 0
      %1671 = vmatprep.subr.bf16.mxu0 0
      %1672 = vmatpush1.bf16.msra.mxu0 0
      %1673 = vmatprep.subr.bf16.mxu0 0
      %1674 = vmatpush1.bf16.msra.mxu0 0
      %1675 = vmatprep.subr.bf16.mxu0 0
      %1676 = vmatpush1.bf16.msra.mxu0 %v1660
      %1677 = vmatprep.subr.bf16.mxu0 0
      %1678 = vmatpush1.bf16.msra.mxu0 %v1659
      %1679 = vmatprep.subr.bf16.mxu0 0
      %1680 = vmatpush2.bf16.msra.mxu0 0
      %1681 = vmatprep.subr.bf16.mxu0 0
      %1682 = vmatpush2.bf16.msra.mxu0 0
      %1683 = vmatprep.subr.bf16.mxu0 0
      %1684 = vmatpush2.bf16.msra.mxu0 0
      %1685 = vmatprep.subr.bf16.mxu0 0
      %1686 = vmatpush2.bf16.msra.mxu0 0
      %1687 = vmatprep.subr.bf16.mxu0 0
      %1688 = vmatpush2.bf16.msra.mxu0 0
      %1689 = vmatprep.subr.bf16.mxu0 0
      %1690 = vmatpush2.bf16.msra.mxu0 0
      %1691 = vmatprep.subr.bf16.mxu0 0
      %1692 = vmatpush2.bf16.msra.mxu0 0
      %1693 = vmatprep.subr.bf16.mxu0 0
      %1694 = vmatpush2.bf16.msra.mxu0 0
      %1695 = vmatprep.mubr.bf16.mxu0 0
      %1696 = vmatmul.mubr.bf16.gmra.mxu0 %v782
      %v1697 = vpop.f32.mrf.mxu0
      %v1698 = vadd.f32 0.0, %v1697
      %v1699 = vpop.f32.mrf.mxu0
      %v1700 = vpop.f32.mrf.mxu0
      %v1701 = vadd.f32 0.0, %v1700
      %v1702 = vpop.f32.mrf.mxu0
      %1703 = vmatprep.mubr.bf16.mxu0 0
      %1704 = vmatmul.mubr.bf16.gmra.mxu0 %v785
      %v1705 = vpop.f32.mrf.mxu0
      %v1706 = vadd.f32 0.0, %v1705
      %v1707 = vpop.f32.mrf.mxu0
      %v1708 = vpop.f32.mrf.mxu0
      %v1709 = vadd.f32 0.0, %v1708
      %v1710 = vpop.f32.mrf.mxu0
      %1711 = vmatprep.mubr.bf16.mxu0 0
      %1712 = vmatmul.mubr.bf16.gmra.mxu0 %v788
      %v1713 = vpop.f32.mrf.mxu0
      %v1714 = vadd.f32 0.0, %v1713
      %v1715 = vpop.f32.mrf.mxu0
      %v1716 = vpop.f32.mrf.mxu0
      %v1717 = vadd.f32 0.0, %v1716
      %v1718 = vpop.f32.mrf.mxu0
      %1719 = vmatprep.mubr.bf16.mxu0 0
      %1720 = vmatmul.mubr.bf16.gmra.mxu0 %v791
      %v1721 = vpop.f32.mrf.mxu0
      %v1722 = vadd.f32 0.0, %v1721
      %v1723 = vpop.f32.mrf.mxu0
      %v1724 = vpop.f32.mrf.mxu0
      %v1725 = vadd.f32 0.0, %v1724
      %v1726 = vpop.f32.mrf.mxu0
      %1727 = vdwg.mxu0
      %s1728 = scalar_lea.vmem %s5, 32
      %v1729 = vld [vmem:[%s1728] sm:$0xf]
      %v1730 = vld [vmem:[%s1728 + $0x4] sm:$0xf]
      %v1731 = vld [vmem:[%s1728 + $0x8] sm:$0xf]
      %v1732 = vld [vmem:[%s1728 + $0xc] sm:$0xf]
      %s1733 = scalar_lea.vmem %s6, 16
      %v1734 = vld [vmem:[%s1733] sm:$0xf]
      %v1735 = vld [vmem:[%s1733 + $0x4] sm:$0xf]
      %v1738 = vunpack.c.l.b16 %v1734
      %v1739 = vunpack.c.l.b16 %v1735
      %v1740 = vpack.c.b16 %v1739, %v1738
      %1742 = vmatprep.subr.bf16.mxu0 0
      %1743 = vmatpush1.bf16.msra.mxu0 0
      %1744 = vmatprep.subr.bf16.mxu0 0
      %1745 = vmatpush1.bf16.msra.mxu0 0
      %1746 = vmatprep.subr.bf16.mxu0 0
      %1747 = vmatpush1.bf16.msra.mxu0 0
      %1748 = vmatprep.subr.bf16.mxu0 0
      %1749 = vmatpush1.bf16.msra.mxu0 0
      %1750 = vmatprep.subr.bf16.mxu0 0
      %1751 = vmatpush1.bf16.msra.mxu0 0
      %1752 = vmatprep.subr.bf16.mxu0 0
      %1753 = vmatpush1.bf16.msra.mxu0 0
      %1754 = vmatprep.subr.bf16.mxu0 0
      %1755 = vmatpush1.bf16.msra.mxu0 0
      %1756 = vmatprep.subr.bf16.mxu0 0
      %1757 = vmatpush1.bf16.msra.mxu0 %v1740
      %1758 = vmatprep.subr.bf16.mxu0 0
      %1759 = vmatpush2.bf16.msra.mxu0 0
      %1760 = vmatprep.subr.bf16.mxu0 0
      %1761 = vmatpush2.bf16.msra.mxu0 0
      %1762 = vmatprep.subr.bf16.mxu0 0
      %1763 = vmatpush2.bf16.msra.mxu0 0
      %1764 = vmatprep.subr.bf16.mxu0 0
      %1765 = vmatpush2.bf16.msra.mxu0 0
      %1766 = vmatprep.subr.bf16.mxu0 0
      %1767 = vmatpush2.bf16.msra.mxu0 0
      %1768 = vmatprep.subr.bf16.mxu0 0
      %1769 = vmatpush2.bf16.msra.mxu0 0
      %1770 = vmatprep.subr.bf16.mxu0 0
      %1771 = vmatpush2.bf16.msra.mxu0 0
      %1772 = vmatprep.subr.bf16.mxu0 0
      %1773 = vmatpush2.bf16.msra.mxu0 0
      %1774 = vmatprep.mubr.bf16.mxu0 0
      %1775 = vmatmul.mubr.bf16.gmra.mxu0 %v872
      %v1776 = vpop.f32.mrf.mxu0
      %v1777 = vadd.f32 0.0, %v1776
      %v1778 = vpop.f32.mrf.mxu0
      %v1779 = vpop.f32.mrf.mxu0
      %v1780 = vadd.f32 0.0, %v1779
      %v1781 = vpop.f32.mrf.mxu0
      %1782 = vmatprep.mubr.bf16.mxu0 0
      %1783 = vmatmul.mubr.bf16.gmra.mxu0 %v875
      %v1784 = vpop.f32.mrf.mxu0
      %v1785 = vadd.f32 0.0, %v1784
      %v1786 = vpop.f32.mrf.mxu0
      %v1787 = vpop.f32.mrf.mxu0
      %v1788 = vadd.f32 0.0, %v1787
      %v1789 = vpop.f32.mrf.mxu0
      %1790 = vmatprep.mubr.bf16.mxu0 0
      %1791 = vmatmul.mubr.bf16.gmra.mxu0 %v878
      %v1792 = vpop.f32.mrf.mxu0
      %v1793 = vadd.f32 0.0, %v1792
      %v1794 = vpop.f32.mrf.mxu0
      %v1795 = vpop.f32.mrf.mxu0
      %v1796 = vadd.f32 0.0, %v1795
      %v1797 = vpop.f32.mrf.mxu0
      %1798 = vmatprep.mubr.bf16.mxu0 0
      %1799 = vmatmul.mubr.bf16.gmra.mxu0 %v881
      %v1800 = vpop.f32.mrf.mxu0
      %v1801 = vadd.f32 0.0, %v1800
      %v1802 = vpop.f32.mrf.mxu0
      %v1803 = vpop.f32.mrf.mxu0
      %v1804 = vadd.f32 0.0, %v1803
      %v1805 = vpop.f32.mrf.mxu0
      %1806 = vdwg.mxu0
      %v1811 = vunpack.c.l.b16 %v1729
      %v1812 = vunpack.c.l.b16 %v1730
      %v1813 = vunpack.c.l.b16 %v1731
      %v1814 = vunpack.c.l.b16 %v1732
      %v1815 = vpack.c.b16 %v1812, %v1811
      %v1816 = vpack.c.b16 %v1814, %v1813
      %1819 = vmatprep.subr.bf16.mxu0 0
      %1820 = vmatpush1.bf16.msra.mxu0 0
      %1821 = vmatprep.subr.bf16.mxu0 0
      %1822 = vmatpush1.bf16.msra.mxu0 0
      %1823 = vmatprep.subr.bf16.mxu0 0
      %1824 = vmatpush1.bf16.msra.mxu0 0
      %1825 = vmatprep.subr.bf16.mxu0 0
      %1826 = vmatpush1.bf16.msra.mxu0 0
      %1827 = vmatprep.subr.bf16.mxu0 0
      %1828 = vmatpush1.bf16.msra.mxu0 0
      %1829 = vmatprep.subr.bf16.mxu0 0
      %1830 = vmatpush1.bf16.msra.mxu0 0
      %1831 = vmatprep.subr.bf16.mxu0 0
      %1832 = vmatpush1.bf16.msra.mxu0 %v1816
      %1833 = vmatprep.subr.bf16.mxu0 0
      %1834 = vmatpush1.bf16.msra.mxu0 %v1815
      %1835 = vmatprep.subr.bf16.mxu0 0
      %1836 = vmatpush2.bf16.msra.mxu0 0
      %1837 = vmatprep.subr.bf16.mxu0 0
      %1838 = vmatpush2.bf16.msra.mxu0 0
      %1839 = vmatprep.subr.bf16.mxu0 0
      %1840 = vmatpush2.bf16.msra.mxu0 0
      %1841 = vmatprep.subr.bf16.mxu0 0
      %1842 = vmatpush2.bf16.msra.mxu0 0
      %1843 = vmatprep.subr.bf16.mxu0 0
      %1844 = vmatpush2.bf16.msra.mxu0 0
      %1845 = vmatprep.subr.bf16.mxu0 0
      %1846 = vmatpush2.bf16.msra.mxu0 0
      %1847 = vmatprep.subr.bf16.mxu0 0
      %1848 = vmatpush2.bf16.msra.mxu0 0
      %1849 = vmatprep.subr.bf16.mxu0 0
      %1850 = vmatpush2.bf16.msra.mxu0 0
      %1851 = vmatprep.mubr.bf16.mxu0 0
      %1852 = vmatmul.mubr.bf16.gmra.mxu0 %v782
      %v1853 = vpop.f32.mrf.mxu0
      %v1854 = vadd.f32 %v1777, %v1853
      %v1855 = vpop.f32.mrf.mxu0
      %v1856 = vpop.f32.mrf.mxu0
      %v1857 = vadd.f32 %v1780, %v1856
      %v1858 = vpop.f32.mrf.mxu0
      %1859 = vmatprep.mubr.bf16.mxu0 0
      %1860 = vmatmul.mubr.bf16.gmra.mxu0 %v785
      %v1861 = vpop.f32.mrf.mxu0
      %v1862 = vadd.f32 %v1785, %v1861
      %v1863 = vpop.f32.mrf.mxu0
      %v1864 = vpop.f32.mrf.mxu0
      %v1865 = vadd.f32 %v1788, %v1864
      %v1866 = vpop.f32.mrf.mxu0
      %1867 = vmatprep.mubr.bf16.mxu0 0
      %1868 = vmatmul.mubr.bf16.gmra.mxu0 %v788
      %v1869 = vpop.f32.mrf.mxu0
      %v1870 = vadd.f32 %v1793, %v1869
      %v1871 = vpop.f32.mrf.mxu0
      %v1872 = vpop.f32.mrf.mxu0
      %v1873 = vadd.f32 %v1796, %v1872
      %v1874 = vpop.f32.mrf.mxu0
      %1875 = vmatprep.mubr.bf16.mxu0 0
      %1876 = vmatmul.mubr.bf16.gmra.mxu0 %v791
      %v1877 = vpop.f32.mrf.mxu0
      %v1878 = vadd.f32 %v1801, %v1877
      %v1879 = vpop.f32.mrf.mxu0
      %v1880 = vpop.f32.mrf.mxu0
      %v1881 = vadd.f32 %v1804, %v1880
      %v1882 = vpop.f32.mrf.mxu0
      %1883 = vdwg.mxu0
      %v1884 = vpack.c.bf16 %v1857, %v1854
      %v1885 = vpack.c.bf16 %v1865, %v1862
      %v1886 = vpack.c.bf16 %v1873, %v1870
      %v1887 = vpack.c.bf16 %v1881, %v1878
      %v1888 = vpack.c.bf16 %v1639, %v1638
      %v1889 = vpack.c.bf16 %v1641, %v1640
      %v1890 = vpack.c.bf16 %v1643, %v1642
      %v1891 = vpack.c.bf16 %v1645, %v1644
      %v1892 = vpack.c.bf16 %v1701, %v1698
      %v1893 = vpack.c.bf16 %v1709, %v1706
      %v1894 = vpack.c.bf16 %v1717, %v1714
      %v1895 = vpack.c.bf16 %v1725, %v1722
      %v1897 = vsel %vm1037, %v1888, 0
      %v1900 = vsel %vm1037, %v1889, 0
      %v1903 = vsel %vm1037, %v1890, 0
      %v1906 = vsel %vm1037, %v1891, 0
      %v1909 = vsel %vm1037, %v1892, 0
      %v1912 = vsel %vm1037, %v1893, 0
      %v1915 = vsel %vm1037, %v1894, 0
      %v1918 = vsel %vm1037, %v1895, 0
      %1920 = vmatprep.subr.bf16.mxu0 0
      %1921 = vmatpush1.bf16.xpose.msra.mxu0 0
      %1922 = vmatprep.subr.bf16.mxu0 0
      %1923 = vmatpush1.bf16.xpose.msra.mxu0 0
      %1924 = vmatprep.subr.bf16.mxu0 0
      %1925 = vmatpush1.bf16.xpose.msra.mxu0 0
      %1926 = vmatprep.subr.bf16.mxu0 0
      %1927 = vmatpush1.bf16.xpose.msra.mxu0 0
      %1928 = vmatprep.subr.bf16.mxu0 0
      %1929 = vmatpush1.bf16.xpose.msra.mxu0 %v1918
      %1930 = vmatprep.subr.bf16.mxu0 0
      %1931 = vmatpush1.bf16.xpose.msra.mxu0 %v1915
      %1932 = vmatprep.subr.bf16.mxu0 0
      %1933 = vmatpush1.bf16.xpose.msra.mxu0 %v1912
      %1934 = vmatprep.subr.bf16.mxu0 0
      %1935 = vmatpush1.bf16.xpose.msra.mxu0 %v1909
      %1936 = vmatprep.subr.bf16.mxu0 0
      %1937 = vmatpush2.bf16.xpose.msra.mxu0 0
      %1938 = vmatprep.subr.bf16.mxu0 0
      %1939 = vmatpush2.bf16.xpose.msra.mxu0 0
      %1940 = vmatprep.subr.bf16.mxu0 0
      %1941 = vmatpush2.bf16.xpose.msra.mxu0 0
      %1942 = vmatprep.subr.bf16.mxu0 0
      %1943 = vmatpush2.bf16.xpose.msra.mxu0 0
      %1944 = vmatprep.subr.bf16.mxu0 0
      %1945 = vmatpush2.bf16.xpose.msra.mxu0 0
      %1946 = vmatprep.subr.bf16.mxu0 0
      %1947 = vmatpush2.bf16.xpose.msra.mxu0 0
      %1948 = vmatprep.subr.bf16.mxu0 0
      %1949 = vmatpush2.bf16.xpose.msra.mxu0 0
      %1950 = vmatprep.subr.bf16.mxu0 0
      %1951 = vmatpush2.bf16.xpose.msra.mxu0 0
      %1952 = vmatprep.mubr.bf16.mxu0 0
      %1953 = vmatmul.mubr.bf16.gmra.mxu0 %v1897
      %v1954 = vpop.f32.mrf.mxu0
      %v1955 = vadd.f32 0.0, %v1954
      %v1956 = vpop.f32.mrf.mxu0
      %v1957 = vpop.f32.mrf.mxu0
      %v1958 = vadd.f32 0.0, %v1957
      %v1959 = vpop.f32.mrf.mxu0
      %1960 = vmatprep.mubr.bf16.mxu0 0
      %1961 = vmatmul.mubr.bf16.gmra.mxu0 %v1900
      %v1962 = vpop.f32.mrf.mxu0
      %v1963 = vadd.f32 0.0, %v1962
      %v1964 = vpop.f32.mrf.mxu0
      %v1965 = vpop.f32.mrf.mxu0
      %v1966 = vadd.f32 0.0, %v1965
      %v1967 = vpop.f32.mrf.mxu0
      %1968 = vmatprep.mubr.bf16.mxu0 0
      %1969 = vmatmul.mubr.bf16.gmra.mxu0 %v1903
      %v1970 = vpop.f32.mrf.mxu0
      %v1971 = vadd.f32 0.0, %v1970
      %v1972 = vpop.f32.mrf.mxu0
      %v1973 = vpop.f32.mrf.mxu0
      %v1974 = vadd.f32 0.0, %v1973
      %v1975 = vpop.f32.mrf.mxu0
      %1976 = vmatprep.mubr.bf16.mxu0 0
      %1977 = vmatmul.mubr.bf16.gmra.mxu0 %v1906
      %v1978 = vpop.f32.mrf.mxu0
      %v1979 = vadd.f32 0.0, %v1978
      %v1980 = vpop.f32.mrf.mxu0
      %v1981 = vpop.f32.mrf.mxu0
      %v1982 = vadd.f32 0.0, %v1981
      %v1983 = vpop.f32.mrf.mxu0
      %1984 = vdwg.mxu0
      %s1985 = scalar_lea.vmem %s3, 48
      %v1986 = vld [vmem:[%s1985] sm:$0xf]
      %v1987 = vld [vmem:[%s1985 + $0x4] sm:$0xf]
      %v1988 = vld [vmem:[%s1985 + $0x8] sm:$0xf]
      %v1989 = vld [vmem:[%s1985 + $0xc] sm:$0xf]
      %v1994 = vunpack.c.l.b16 %v1986
      %v1995 = vunpack.c.l.b16 %v1987
      %v1996 = vunpack.c.l.b16 %v1988
      %v1997 = vunpack.c.l.b16 %v1989
      %v1998 = vpack.c.b16 %v1995, %v1994
      %v1999 = vpack.c.b16 %v1997, %v1996
      %2002 = vmatprep.subr.bf16.mxu0 0
      %2003 = vmatpush1.bf16.msra.mxu0 0
      %2004 = vmatprep.subr.bf16.mxu0 0
      %2005 = vmatpush1.bf16.msra.mxu0 0
      %2006 = vmatprep.subr.bf16.mxu0 0
      %2007 = vmatpush1.bf16.msra.mxu0 0
      %2008 = vmatprep.subr.bf16.mxu0 0
      %2009 = vmatpush1.bf16.msra.mxu0 0
      %2010 = vmatprep.subr.bf16.mxu0 0
      %2011 = vmatpush1.bf16.msra.mxu0 0
      %2012 = vmatprep.subr.bf16.mxu0 0
      %2013 = vmatpush1.bf16.msra.mxu0 0
      %2014 = vmatprep.subr.bf16.mxu0 0
      %2015 = vmatpush1.bf16.msra.mxu0 %v1999
      %2016 = vmatprep.subr.bf16.mxu0 0
      %2017 = vmatpush1.bf16.msra.mxu0 %v1998
      %2018 = vmatprep.subr.bf16.mxu0 0
      %2019 = vmatpush2.bf16.msra.mxu0 0
      %2020 = vmatprep.subr.bf16.mxu0 0
      %2021 = vmatpush2.bf16.msra.mxu0 0
      %2022 = vmatprep.subr.bf16.mxu0 0
      %2023 = vmatpush2.bf16.msra.mxu0 0
      %2024 = vmatprep.subr.bf16.mxu0 0
      %2025 = vmatpush2.bf16.msra.mxu0 0
      %2026 = vmatprep.subr.bf16.mxu0 0
      %2027 = vmatpush2.bf16.msra.mxu0 0
      %2028 = vmatprep.subr.bf16.mxu0 0
      %2029 = vmatpush2.bf16.msra.mxu0 0
      %2030 = vmatprep.subr.bf16.mxu0 0
      %2031 = vmatpush2.bf16.msra.mxu0 0
      %2032 = vmatprep.subr.bf16.mxu0 0
      %2033 = vmatpush2.bf16.msra.mxu0 0
      %2034 = vmatprep.mubr.bf16.mxu0 0
      %2035 = vmatmul.mubr.bf16.gmra.mxu0 %v681
      %v2036 = vpop.f32.mrf.mxu0
      %v2037 = vadd.f32 0.0, %v2036
      %v2038 = vpop.f32.mrf.mxu0
      %v2039 = vpop.f32.mrf.mxu0
      %v2040 = vadd.f32 0.0, %v2039
      %v2041 = vpop.f32.mrf.mxu0
      %2042 = vmatprep.mubr.bf16.mxu0 0
      %2043 = vmatmul.mubr.bf16.gmra.mxu0 %v684
      %v2044 = vpop.f32.mrf.mxu0
      %v2045 = vadd.f32 0.0, %v2044
      %v2046 = vpop.f32.mrf.mxu0
      %v2047 = vpop.f32.mrf.mxu0
      %v2048 = vadd.f32 0.0, %v2047
      %v2049 = vpop.f32.mrf.mxu0
      %2050 = vmatprep.mubr.bf16.mxu0 0
      %2051 = vmatmul.mubr.bf16.gmra.mxu0 %v687
      %v2052 = vpop.f32.mrf.mxu0
      %v2053 = vadd.f32 0.0, %v2052
      %v2054 = vpop.f32.mrf.mxu0
      %v2055 = vpop.f32.mrf.mxu0
      %v2056 = vadd.f32 0.0, %v2055
      %v2057 = vpop.f32.mrf.mxu0
      %2058 = vmatprep.mubr.bf16.mxu0 0
      %2059 = vmatmul.mubr.bf16.gmra.mxu0 %v690
      %v2060 = vpop.f32.mrf.mxu0
      %v2061 = vadd.f32 0.0, %v2060
      %v2062 = vpop.f32.mrf.mxu0
      %v2063 = vpop.f32.mrf.mxu0
      %v2064 = vadd.f32 0.0, %v2063
      %v2065 = vpop.f32.mrf.mxu0
      %2066 = vdwg.mxu0
      %v2067 = vmul.f32 %v2037, 0.35355338
      %v2068 = vmul.f32 %v2040, 0.35355338
      %v2069 = vmul.f32 %v2045, 0.35355338
      %v2070 = vmul.f32 %v2048, 0.35355338
      %v2071 = vmul.f32 %v2053, 0.35355338
      %v2072 = vmul.f32 %v2056, 0.35355338
      %v2073 = vmul.f32 %v2061, 0.35355338
      %v2074 = vmul.f32 %v2064, 0.35355338
      %s2075 = scalar_lea.vmem %s4, 48
      %v2076 = vld [vmem:[%s2075] sm:$0xf]
      %v2077 = vld [vmem:[%s2075 + $0x4] sm:$0xf]
      %v2078 = vld [vmem:[%s2075 + $0x8] sm:$0xf]
      %v2079 = vld [vmem:[%s2075 + $0xc] sm:$0xf]
      %v2084 = vunpack.c.l.b16 %v2076
      %v2085 = vunpack.c.l.b16 %v2077
      %v2086 = vunpack.c.l.b16 %v2078
      %v2087 = vunpack.c.l.b16 %v2079
      %v2088 = vpack.c.b16 %v2085, %v2084
      %v2089 = vpack.c.b16 %v2087, %v2086
      %2092 = vmatprep.subr.bf16.mxu0 0
      %2093 = vmatpush1.bf16.msra.mxu0 0
      %2094 = vmatprep.subr.bf16.mxu0 0
      %2095 = vmatpush1.bf16.msra.mxu0 0
      %2096 = vmatprep.subr.bf16.mxu0 0
      %2097 = vmatpush1.bf16.msra.mxu0 0
      %2098 = vmatprep.subr.bf16.mxu0 0
      %2099 = vmatpush1.bf16.msra.mxu0 0
      %2100 = vmatprep.subr.bf16.mxu0 0
      %2101 = vmatpush1.bf16.msra.mxu0 0
      %2102 = vmatprep.subr.bf16.mxu0 0
      %2103 = vmatpush1.bf16.msra.mxu0 0
      %2104 = vmatprep.subr.bf16.mxu0 0
      %2105 = vmatpush1.bf16.msra.mxu0 %v2089
      %2106 = vmatprep.subr.bf16.mxu0 0
      %2107 = vmatpush1.bf16.msra.mxu0 %v2088
      %2108 = vmatprep.subr.bf16.mxu0 0
      %2109 = vmatpush2.bf16.msra.mxu0 0
      %2110 = vmatprep.subr.bf16.mxu0 0
      %2111 = vmatpush2.bf16.msra.mxu0 0
      %2112 = vmatprep.subr.bf16.mxu0 0
      %2113 = vmatpush2.bf16.msra.mxu0 0
      %2114 = vmatprep.subr.bf16.mxu0 0
      %2115 = vmatpush2.bf16.msra.mxu0 0
      %2116 = vmatprep.subr.bf16.mxu0 0
      %2117 = vmatpush2.bf16.msra.mxu0 0
      %2118 = vmatprep.subr.bf16.mxu0 0
      %2119 = vmatpush2.bf16.msra.mxu0 0
      %2120 = vmatprep.subr.bf16.mxu0 0
      %2121 = vmatpush2.bf16.msra.mxu0 0
      %2122 = vmatprep.subr.bf16.mxu0 0
      %2123 = vmatpush2.bf16.msra.mxu0 0
      %2124 = vmatprep.mubr.bf16.mxu0 0
      %2125 = vmatmul.mubr.bf16.gmra.mxu0 %v782
      %v2126 = vpop.f32.mrf.mxu0
      %v2127 = vadd.f32 0.0, %v2126
      %v2128 = vpop.f32.mrf.mxu0
      %v2129 = vpop.f32.mrf.mxu0
      %v2130 = vadd.f32 0.0, %v2129
      %v2131 = vpop.f32.mrf.mxu0
      %2132 = vmatprep.mubr.bf16.mxu0 0
      %2133 = vmatmul.mubr.bf16.gmra.mxu0 %v785
      %v2134 = vpop.f32.mrf.mxu0
      %v2135 = vadd.f32 0.0, %v2134
      %v2136 = vpop.f32.mrf.mxu0
      %v2137 = vpop.f32.mrf.mxu0
      %v2138 = vadd.f32 0.0, %v2137
      %v2139 = vpop.f32.mrf.mxu0
      %2140 = vmatprep.mubr.bf16.mxu0 0
      %2141 = vmatmul.mubr.bf16.gmra.mxu0 %v788
      %v2142 = vpop.f32.mrf.mxu0
      %v2143 = vadd.f32 0.0, %v2142
      %v2144 = vpop.f32.mrf.mxu0
      %v2145 = vpop.f32.mrf.mxu0
      %v2146 = vadd.f32 0.0, %v2145
      %v2147 = vpop.f32.mrf.mxu0
      %2148 = vmatprep.mubr.bf16.mxu0 0
      %2149 = vmatmul.mubr.bf16.gmra.mxu0 %v791
      %v2150 = vpop.f32.mrf.mxu0
      %v2151 = vadd.f32 0.0, %v2150
      %v2152 = vpop.f32.mrf.mxu0
      %v2153 = vpop.f32.mrf.mxu0
      %v2154 = vadd.f32 0.0, %v2153
      %v2155 = vpop.f32.mrf.mxu0
      %2156 = vdwg.mxu0
      %s2157 = scalar_lea.vmem %s5, 48
      %v2158 = vld [vmem:[%s2157] sm:$0xf]
      %v2159 = vld [vmem:[%s2157 + $0x4] sm:$0xf]
      %v2160 = vld [vmem:[%s2157 + $0x8] sm:$0xf]
      %v2161 = vld [vmem:[%s2157 + $0xc] sm:$0xf]
      %s2162 = scalar_lea.vmem %s6, 24
      %v2163 = vld [vmem:[%s2162] sm:$0xf]
      %v2164 = vld [vmem:[%s2162 + $0x4] sm:$0xf]
      %v2167 = vunpack.c.l.b16 %v2163
      %v2168 = vunpack.c.l.b16 %v2164
      %v2169 = vpack.c.b16 %v2168, %v2167
      %2171 = vmatprep.subr.bf16.mxu0 0
      %2172 = vmatpush1.bf16.msra.mxu0 0
      %2173 = vmatprep.subr.bf16.mxu0 0
      %2174 = vmatpush1.bf16.msra.mxu0 0
      %2175 = vmatprep.subr.bf16.mxu0 0
      %2176 = vmatpush1.bf16.msra.mxu0 0
      %2177 = vmatprep.subr.bf16.mxu0 0
      %2178 = vmatpush1.bf16.msra.mxu0 0
      %2179 = vmatprep.subr.bf16.mxu0 0
      %2180 = vmatpush1.bf16.msra.mxu0 0
      %2181 = vmatprep.subr.bf16.mxu0 0
      %2182 = vmatpush1.bf16.msra.mxu0 0
      %2183 = vmatprep.subr.bf16.mxu0 0
      %2184 = vmatpush1.bf16.msra.mxu0 0
      %2185 = vmatprep.subr.bf16.mxu0 0
      %2186 = vmatpush1.bf16.msra.mxu0 %v2169
      %2187 = vmatprep.subr.bf16.mxu0 0
      %2188 = vmatpush2.bf16.msra.mxu0 0
      %2189 = vmatprep.subr.bf16.mxu0 0
      %2190 = vmatpush2.bf16.msra.mxu0 0
      %2191 = vmatprep.subr.bf16.mxu0 0
      %2192 = vmatpush2.bf16.msra.mxu0 0
      %2193 = vmatprep.subr.bf16.mxu0 0
      %2194 = vmatpush2.bf16.msra.mxu0 0
      %2195 = vmatprep.subr.bf16.mxu0 0
      %2196 = vmatpush2.bf16.msra.mxu0 0
      %2197 = vmatprep.subr.bf16.mxu0 0
      %2198 = vmatpush2.bf16.msra.mxu0 0
      %2199 = vmatprep.subr.bf16.mxu0 0
      %2200 = vmatpush2.bf16.msra.mxu0 0
      %2201 = vmatprep.subr.bf16.mxu0 0
      %2202 = vmatpush2.bf16.msra.mxu0 0
      %2203 = vmatprep.mubr.bf16.mxu0 0
      %2204 = vmatmul.mubr.bf16.gmra.mxu0 %v872
      %v2205 = vpop.f32.mrf.mxu0
      %v2206 = vadd.f32 0.0, %v2205
      %v2207 = vpop.f32.mrf.mxu0
      %v2208 = vpop.f32.mrf.mxu0
      %v2209 = vadd.f32 0.0, %v2208
      %v2210 = vpop.f32.mrf.mxu0
      %2211 = vmatprep.mubr.bf16.mxu0 0
      %2212 = vmatmul.mubr.bf16.gmra.mxu0 %v875
      %v2213 = vpop.f32.mrf.mxu0
      %v2214 = vadd.f32 0.0, %v2213
      %v2215 = vpop.f32.mrf.mxu0
      %v2216 = vpop.f32.mrf.mxu0
      %v2217 = vadd.f32 0.0, %v2216
      %v2218 = vpop.f32.mrf.mxu0
      %2219 = vmatprep.mubr.bf16.mxu0 0
      %2220 = vmatmul.mubr.bf16.gmra.mxu0 %v878
      %v2221 = vpop.f32.mrf.mxu0
      %v2222 = vadd.f32 0.0, %v2221
      %v2223 = vpop.f32.mrf.mxu0
      %v2224 = vpop.f32.mrf.mxu0
      %v2225 = vadd.f32 0.0, %v2224
      %v2226 = vpop.f32.mrf.mxu0
      %2227 = vmatprep.mubr.bf16.mxu0 0
      %2228 = vmatmul.mubr.bf16.gmra.mxu0 %v881
      %v2229 = vpop.f32.mrf.mxu0
      %v2230 = vadd.f32 0.0, %v2229
      %v2231 = vpop.f32.mrf.mxu0
      %v2232 = vpop.f32.mrf.mxu0
      %v2233 = vadd.f32 0.0, %v2232
      %v2234 = vpop.f32.mrf.mxu0
      %2235 = vdwg.mxu0
      %v2240 = vunpack.c.l.b16 %v2158
      %v2241 = vunpack.c.l.b16 %v2159
      %v2242 = vunpack.c.l.b16 %v2160
      %v2243 = vunpack.c.l.b16 %v2161
      %v2244 = vpack.c.b16 %v2241, %v2240
      %v2245 = vpack.c.b16 %v2243, %v2242
      %2248 = vmatprep.subr.bf16.mxu0 0
      %2249 = vmatpush1.bf16.msra.mxu0 0
      %2250 = vmatprep.subr.bf16.mxu0 0
      %2251 = vmatpush1.bf16.msra.mxu0 0
      %2252 = vmatprep.subr.bf16.mxu0 0
      %2253 = vmatpush1.bf16.msra.mxu0 0
      %2254 = vmatprep.subr.bf16.mxu0 0
      %2255 = vmatpush1.bf16.msra.mxu0 0
      %2256 = vmatprep.subr.bf16.mxu0 0
      %2257 = vmatpush1.bf16.msra.mxu0 0
      %2258 = vmatprep.subr.bf16.mxu0 0
      %2259 = vmatpush1.bf16.msra.mxu0 0
      %2260 = vmatprep.subr.bf16.mxu0 0
      %2261 = vmatpush1.bf16.msra.mxu0 %v2245
      %2262 = vmatprep.subr.bf16.mxu0 0
      %2263 = vmatpush1.bf16.msra.mxu0 %v2244
      %2264 = vmatprep.subr.bf16.mxu0 0
      %2265 = vmatpush2.bf16.msra.mxu0 0
      %2266 = vmatprep.subr.bf16.mxu0 0
      %2267 = vmatpush2.bf16.msra.mxu0 0
      %2268 = vmatprep.subr.bf16.mxu0 0
      %2269 = vmatpush2.bf16.msra.mxu0 0
      %2270 = vmatprep.subr.bf16.mxu0 0
      %2271 = vmatpush2.bf16.msra.mxu0 0
      %2272 = vmatprep.subr.bf16.mxu0 0
      %2273 = vmatpush2.bf16.msra.mxu0 0
      %2274 = vmatprep.subr.bf16.mxu0 0
      %2275 = vmatpush2.bf16.msra.mxu0 0
      %2276 = vmatprep.subr.bf16.mxu0 0
      %2277 = vmatpush2.bf16.msra.mxu0 0
      %2278 = vmatprep.subr.bf16.mxu0 0
      %2279 = vmatpush2.bf16.msra.mxu0 0
      %2280 = vmatprep.mubr.bf16.mxu0 0
      %2281 = vmatmul.mubr.bf16.gmra.mxu0 %v782
      %v2282 = vpop.f32.mrf.mxu0
      %v2283 = vadd.f32 %v2206, %v2282
      %v2284 = vpop.f32.mrf.mxu0
      %v2285 = vpop.f32.mrf.mxu0
      %v2286 = vadd.f32 %v2209, %v2285
      %v2287 = vpop.f32.mrf.mxu0
      %2288 = vmatprep.mubr.bf16.mxu0 0
      %2289 = vmatmul.mubr.bf16.gmra.mxu0 %v785
      %v2290 = vpop.f32.mrf.mxu0
      %v2291 = vadd.f32 %v2214, %v2290
      %v2292 = vpop.f32.mrf.mxu0
      %v2293 = vpop.f32.mrf.mxu0
      %v2294 = vadd.f32 %v2217, %v2293
      %v2295 = vpop.f32.mrf.mxu0
      %2296 = vmatprep.mubr.bf16.mxu0 0
      %2297 = vmatmul.mubr.bf16.gmra.mxu0 %v788
      %v2298 = vpop.f32.mrf.mxu0
      %v2299 = vadd.f32 %v2222, %v2298
      %v2300 = vpop.f32.mrf.mxu0
      %v2301 = vpop.f32.mrf.mxu0
      %v2302 = vadd.f32 %v2225, %v2301
      %v2303 = vpop.f32.mrf.mxu0
      %2304 = vmatprep.mubr.bf16.mxu0 0
      %2305 = vmatmul.mubr.bf16.gmra.mxu0 %v791
      %v2306 = vpop.f32.mrf.mxu0
      %v2307 = vadd.f32 %v2230, %v2306
      %v2308 = vpop.f32.mrf.mxu0
      %v2309 = vpop.f32.mrf.mxu0
      %v2310 = vadd.f32 %v2233, %v2309
      %v2311 = vpop.f32.mrf.mxu0
      %2312 = vdwg.mxu0
      %v2313 = vpack.c.bf16 %v2286, %v2283
      %v2314 = vpack.c.bf16 %v2294, %v2291
      %v2315 = vpack.c.bf16 %v2302, %v2299
      %v2316 = vpack.c.bf16 %v2310, %v2307
      %v2317 = vpack.c.bf16 %v2068, %v2067
      %v2318 = vpack.c.bf16 %v2070, %v2069
      %v2319 = vpack.c.bf16 %v2072, %v2071
      %v2320 = vpack.c.bf16 %v2074, %v2073
      %v2321 = vpack.c.bf16 %v2130, %v2127
      %v2322 = vpack.c.bf16 %v2138, %v2135
      %v2323 = vpack.c.bf16 %v2146, %v2143
      %v2324 = vpack.c.bf16 %v2154, %v2151
      %v2326 = vsel %vm1037, %v2317, 0
      %v2329 = vsel %vm1037, %v2318, 0
      %v2332 = vsel %vm1037, %v2319, 0
      %v2335 = vsel %vm1037, %v2320, 0
      %v2338 = vsel %vm1037, %v2321, 0
      %v2341 = vsel %vm1037, %v2322, 0
      %v2344 = vsel %vm1037, %v2323, 0
      %v2347 = vsel %vm1037, %v2324, 0
      %2349 = vmatprep.subr.bf16.mxu0 0
      %2350 = vmatpush1.bf16.xpose.msra.mxu0 0
      %2351 = vmatprep.subr.bf16.mxu0 0
      %2352 = vmatpush1.bf16.xpose.msra.mxu0 0
      %2353 = vmatprep.subr.bf16.mxu0 0
      %2354 = vmatpush1.bf16.xpose.msra.mxu0 0
      %2355 = vmatprep.subr.bf16.mxu0 0
      %2356 = vmatpush1.bf16.xpose.msra.mxu0 0
      %2357 = vmatprep.subr.bf16.mxu0 0
      %2358 = vmatpush1.bf16.xpose.msra.mxu0 %v2347
      %2359 = vmatprep.subr.bf16.mxu0 0
      %2360 = vmatpush1.bf16.xpose.msra.mxu0 %v2344
      %2361 = vmatprep.subr.bf16.mxu0 0
      %2362 = vmatpush1.bf16.xpose.msra.mxu0 %v2341
      %2363 = vmatprep.subr.bf16.mxu0 0
      %2364 = vmatpush1.bf16.xpose.msra.mxu0 %v2338
      %2365 = vmatprep.subr.bf16.mxu0 0
      %2366 = vmatpush2.bf16.xpose.msra.mxu0 0
      %2367 = vmatprep.subr.bf16.mxu0 0
      %2368 = vmatpush2.bf16.xpose.msra.mxu0 0
      %2369 = vmatprep.subr.bf16.mxu0 0
      %2370 = vmatpush2.bf16.xpose.msra.mxu0 0
      %2371 = vmatprep.subr.bf16.mxu0 0
      %2372 = vmatpush2.bf16.xpose.msra.mxu0 0
      %2373 = vmatprep.subr.bf16.mxu0 0
      %2374 = vmatpush2.bf16.xpose.msra.mxu0 0
      %2375 = vmatprep.subr.bf16.mxu0 0
      %2376 = vmatpush2.bf16.xpose.msra.mxu0 0
      %2377 = vmatprep.subr.bf16.mxu0 0
      %2378 = vmatpush2.bf16.xpose.msra.mxu0 0
      %2379 = vmatprep.subr.bf16.mxu0 0
      %2380 = vmatpush2.bf16.xpose.msra.mxu0 0
      %2381 = vmatprep.mubr.bf16.mxu0 0
      %2382 = vmatmul.mubr.bf16.gmra.mxu0 %v2326
      %v2383 = vpop.f32.mrf.mxu0
      %v2384 = vadd.f32 0.0, %v2383
      %v2385 = vpop.f32.mrf.mxu0
      %v2386 = vpop.f32.mrf.mxu0
      %v2387 = vadd.f32 0.0, %v2386
      %v2388 = vpop.f32.mrf.mxu0
      %2389 = vmatprep.mubr.bf16.mxu0 0
      %2390 = vmatmul.mubr.bf16.gmra.mxu0 %v2329
      %v2391 = vpop.f32.mrf.mxu0
      %v2392 = vadd.f32 0.0, %v2391
      %v2393 = vpop.f32.mrf.mxu0
      %v2394 = vpop.f32.mrf.mxu0
      %v2395 = vadd.f32 0.0, %v2394
      %v2396 = vpop.f32.mrf.mxu0
      %2397 = vmatprep.mubr.bf16.mxu0 0
      %2398 = vmatmul.mubr.bf16.gmra.mxu0 %v2332
      %v2399 = vpop.f32.mrf.mxu0
      %v2400 = vadd.f32 0.0, %v2399
      %v2401 = vpop.f32.mrf.mxu0
      %v2402 = vpop.f32.mrf.mxu0
      %v2403 = vadd.f32 0.0, %v2402
      %v2404 = vpop.f32.mrf.mxu0
      %2405 = vmatprep.mubr.bf16.mxu0 0
      %2406 = vmatmul.mubr.bf16.gmra.mxu0 %v2335
      %v2407 = vpop.f32.mrf.mxu0
      %v2408 = vadd.f32 0.0, %v2407
      %v2409 = vpop.f32.mrf.mxu0
      %v2410 = vpop.f32.mrf.mxu0
      %v2411 = vadd.f32 0.0, %v2410
      %v2412 = vpop.f32.mrf.mxu0
      %2413 = vdwg.mxu0
      %vm2414 = vcmask 523264
      %v2415 = vsel %vm2414, %v1097, -inf
      %2416 = vmax.xlane.f32.xlu0 %v2415
      %v2417 = vpop.xlane.xlu0 %2416
      %v2418 = vsel %vm2414, %v1100, -inf
      %2419 = vmax.xlane.f32.xlu0 %v2418
      %v2420 = vpop.xlane.xlu0 %2419
      %v2421 = vsel %vm2414, %v1105, -inf
      %2422 = vmax.xlane.f32.xlu0 %v2421
      %v2423 = vpop.xlane.xlu0 %2422
      %v2424 = vsel %vm2414, %v1108, -inf
      %2425 = vmax.xlane.f32.xlu0 %v2424
      %v2426 = vpop.xlane.xlu0 %2425
      %v2427 = vsel %vm2414, %v1113, -inf
      %2428 = vmax.xlane.f32.xlu0 %v2427
      %v2429 = vpop.xlane.xlu0 %2428
      %v2430 = vsel %vm2414, %v1116, -inf
      %2431 = vmax.xlane.f32.xlu0 %v2430
      %v2432 = vpop.xlane.xlu0 %2431
      %v2433 = vsel %vm2414, %v1121, -inf
      %2434 = vmax.xlane.f32.xlu0 %v2433
      %v2435 = vpop.xlane.xlu0 %2434
      %v2436 = vsel %vm2414, %v1124, -inf
      %2437 = vmax.xlane.f32.xlu0 %v2436
      %v2438 = vpop.xlane.xlu0 %2437
      %v2439 = vsel %vm2414, %v1526, -inf
      %2440 = vmax.xlane.f32.xlu0 %v2439
      %v2441 = vpop.xlane.xlu0 %2440
      %v2442 = vsel %vm2414, %v1529, -inf
      %2443 = vmax.xlane.f32.xlu0 %v2442
      %v2444 = vpop.xlane.xlu0 %2443
      %v2445 = vsel %vm2414, %v1534, -inf
      %2446 = vmax.xlane.f32.xlu0 %v2445
      %v2447 = vpop.xlane.xlu0 %2446
      %v2448 = vsel %vm2414, %v1537, -inf
      %2449 = vmax.xlane.f32.xlu0 %v2448
      %v2450 = vpop.xlane.xlu0 %2449
      %v2451 = vsel %vm2414, %v1542, -inf
      %2452 = vmax.xlane.f32.xlu0 %v2451
      %v2453 = vpop.xlane.xlu0 %2452
      %v2454 = vsel %vm2414, %v1545, -inf
      %2455 = vmax.xlane.f32.xlu0 %v2454
      %v2456 = vpop.xlane.xlu0 %2455
      %v2457 = vsel %vm2414, %v1550, -inf
      %2458 = vmax.xlane.f32.xlu0 %v2457
      %v2459 = vpop.xlane.xlu0 %2458
      %v2460 = vsel %vm2414, %v1553, -inf
      %2461 = vmax.xlane.f32.xlu0 %v2460
      %v2462 = vpop.xlane.xlu0 %2461
      %v2463 = vsel %vm2414, %v1955, -inf
      %2464 = vmax.xlane.f32.xlu0 %v2463
      %v2465 = vpop.xlane.xlu0 %2464
      %v2466 = vsel %vm2414, %v1958, -inf
      %2467 = vmax.xlane.f32.xlu0 %v2466
      %v2468 = vpop.xlane.xlu0 %2467
      %v2469 = vsel %vm2414, %v1963, -inf
      %2470 = vmax.xlane.f32.xlu0 %v2469
      %v2471 = vpop.xlane.xlu0 %2470
      %v2472 = vsel %vm2414, %v1966, -inf
      %2473 = vmax.xlane.f32.xlu0 %v2472
      %v2474 = vpop.xlane.xlu0 %2473
      %v2475 = vsel %vm2414, %v1971, -inf
      %2476 = vmax.xlane.f32.xlu0 %v2475
      %v2477 = vpop.xlane.xlu0 %2476
      %v2478 = vsel %vm2414, %v1974, -inf
      %2479 = vmax.xlane.f32.xlu0 %v2478
      %v2480 = vpop.xlane.xlu0 %2479
      %v2481 = vsel %vm2414, %v1979, -inf
      %2482 = vmax.xlane.f32.xlu0 %v2481
      %v2483 = vpop.xlane.xlu0 %2482
      %v2484 = vsel %vm2414, %v1982, -inf
      %2485 = vmax.xlane.f32.xlu0 %v2484
      %v2486 = vpop.xlane.xlu0 %2485
      %v2487 = vsel %vm2414, %v2384, -inf
      %2488 = vmax.xlane.f32.xlu0 %v2487
      %v2489 = vpop.xlane.xlu0 %2488
      %v2490 = vsel %vm2414, %v2387, -inf
      %2491 = vmax.xlane.f32.xlu0 %v2490
      %v2492 = vpop.xlane.xlu0 %2491
      %v2493 = vsel %vm2414, %v2392, -inf
      %2494 = vmax.xlane.f32.xlu0 %v2493
      %v2495 = vpop.xlane.xlu0 %2494
      %v2496 = vsel %vm2414, %v2395, -inf
      %2497 = vmax.xlane.f32.xlu0 %v2496
      %v2498 = vpop.xlane.xlu0 %2497
      %v2499 = vsel %vm2414, %v2400, -inf
      %2500 = vmax.xlane.f32.xlu0 %v2499
      %v2501 = vpop.xlane.xlu0 %2500
      %v2502 = vsel %vm2414, %v2403, -inf
      %2503 = vmax.xlane.f32.xlu0 %v2502
      %v2504 = vpop.xlane.xlu0 %2503
      %v2505 = vsel %vm2414, %v2408, -inf
      %2506 = vmax.xlane.f32.xlu0 %v2505
      %v2507 = vpop.xlane.xlu0 %2506
      %v2508 = vsel %vm2414, %v2411, -inf
      %2509 = vmax.xlane.f32.xlu0 %v2508
      %v2510 = vpop.xlane.xlu0 %2509
      %v2511 = vsub.f32 %v1097, %v2417
      %v2512 = vsub.f32 %v1100, %v2420
      %v2513 = vsub.f32 %v1105, %v2423
      %v2514 = vsub.f32 %v1108, %v2426
      %v2515 = vsub.f32 %v1113, %v2429
      %v2516 = vsub.f32 %v1116, %v2432
      %v2517 = vsub.f32 %v1121, %v2435
      %v2518 = vsub.f32 %v1124, %v2438
      %v2519 = vsub.f32 %v1526, %v2441
      %v2520 = vsub.f32 %v1529, %v2444
      %v2521 = vsub.f32 %v1534, %v2447
      %v2522 = vsub.f32 %v1537, %v2450
      %v2523 = vsub.f32 %v1542, %v2453
      %v2524 = vsub.f32 %v1545, %v2456
      %v2525 = vsub.f32 %v1550, %v2459
      %v2526 = vsub.f32 %v1553, %v2462
      %v2527 = vsub.f32 %v1955, %v2465
      %v2528 = vsub.f32 %v1958, %v2468
      %v2529 = vsub.f32 %v1963, %v2471
      %v2530 = vsub.f32 %v1966, %v2474
      %v2531 = vsub.f32 %v1971, %v2477
      %v2532 = vsub.f32 %v1974, %v2480
      %v2533 = vsub.f32 %v1979, %v2483
      %v2534 = vsub.f32 %v1982, %v2486
      %v2535 = vsub.f32 %v2384, %v2489
      %v2536 = vsub.f32 %v2387, %v2492
      %v2537 = vsub.f32 %v2392, %v2495
      %v2538 = vsub.f32 %v2395, %v2498
      %v2539 = vsub.f32 %v2400, %v2501
      %v2540 = vsub.f32 %v2403, %v2504
      %v2541 = vsub.f32 %v2408, %v2507
      %v2542 = vsub.f32 %v2411, %v2510
      %v2543 = vmul.f32 %v2511, 1.442695
      %v2544 = vpow.pop %v2543
      %v2545 = vmul.f32 %v2512, 1.442695
      %v2546 = vpow.pop %v2545
      %v2547 = vmul.f32 %v2513, 1.442695
      %v2548 = vpow.pop %v2547
      %v2549 = vmul.f32 %v2514, 1.442695
      %v2550 = vpow.pop %v2549
      %v2551 = vmul.f32 %v2515, 1.442695
      %v2552 = vpow.pop %v2551
      %v2553 = vmul.f32 %v2516, 1.442695
      %v2554 = vpow.pop %v2553
      %v2555 = vmul.f32 %v2517, 1.442695
      %v2556 = vpow.pop %v2555
      %v2557 = vmul.f32 %v2518, 1.442695
      %v2558 = vpow.pop %v2557
      %v2559 = vmul.f32 %v2519, 1.442695
      %v2560 = vpow.pop %v2559
      %v2561 = vmul.f32 %v2520, 1.442695
      %v2562 = vpow.pop %v2561
      %v2563 = vmul.f32 %v2521, 1.442695
      %v2564 = vpow.pop %v2563
      %v2565 = vmul.f32 %v2522, 1.442695
      %v2566 = vpow.pop %v2565
      %v2567 = vmul.f32 %v2523, 1.442695
      %v2568 = vpow.pop %v2567
      %v2569 = vmul.f32 %v2524, 1.442695
      %v2570 = vpow.pop %v2569
      %v2571 = vmul.f32 %v2525, 1.442695
      %v2572 = vpow.pop %v2571
      %v2573 = vmul.f32 %v2526, 1.442695
      %v2574 = vpow.pop %v2573
      %v2575 = vmul.f32 %v2527, 1.442695
      %v2576 = vpow.pop %v2575
      %v2577 = vmul.f32 %v2528, 1.442695
      %v2578 = vpow.pop %v2577
      %v2579 = vmul.f32 %v2529, 1.442695
      %v2580 = vpow.pop %v2579
      %v2581 = vmul.f32 %v2530, 1.442695
      %v2582 = vpow.pop %v2581
      %v2583 = vmul.f32 %v2531, 1.442695
      %v2584 = vpow.pop %v2583
      %v2585 = vmul.f32 %v2532, 1.442695
      %v2586 = vpow.pop %v2585
      %v2587 = vmul.f32 %v2533, 1.442695
      %v2588 = vpow.pop %v2587
      %v2589 = vmul.f32 %v2534, 1.442695
      %v2590 = vpow.pop %v2589
      %v2591 = vmul.f32 %v2535, 1.442695
      %v2592 = vpow.pop %v2591
      %v2593 = vmul.f32 %v2536, 1.442695
      %v2594 = vpow.pop %v2593
      %v2595 = vmul.f32 %v2537, 1.442695
      %v2596 = vpow.pop %v2595
      %v2597 = vmul.f32 %v2538, 1.442695
      %v2598 = vpow.pop %v2597
      %v2599 = vmul.f32 %v2539, 1.442695
      %v2600 = vpow.pop %v2599
      %v2601 = vmul.f32 %v2540, 1.442695
      %v2602 = vpow.pop %v2601
      %v2603 = vmul.f32 %v2541, 1.442695
      %v2604 = vpow.pop %v2603
      %v2605 = vmul.f32 %v2542, 1.442695
      %v2606 = vpow.pop %v2605
      %v2607 = vsel %vm2414, %v2544, 0.0
      %2608 = vadd.xlane.f32.xlu0 %v2607
      %v2609 = vpop.xlane.xlu0 %2608
      %v2610 = vsel %vm2414, %v2546, 0.0
      %2611 = vadd.xlane.f32.xlu0 %v2610
      %v2612 = vpop.xlane.xlu0 %2611
      %v2613 = vsel %vm2414, %v2548, 0.0
      %2614 = vadd.xlane.f32.xlu0 %v2613
      %v2615 = vpop.xlane.xlu0 %2614
      %v2616 = vsel %vm2414, %v2550, 0.0
      %2617 = vadd.xlane.f32.xlu0 %v2616
      %v2618 = vpop.xlane.xlu0 %2617
      %v2619 = vsel %vm2414, %v2552, 0.0
      %2620 = vadd.xlane.f32.xlu0 %v2619
      %v2621 = vpop.xlane.xlu0 %2620
      %v2622 = vsel %vm2414, %v2554, 0.0
      %2623 = vadd.xlane.f32.xlu0 %v2622
      %v2624 = vpop.xlane.xlu0 %2623
      %v2625 = vsel %vm2414, %v2556, 0.0
      %2626 = vadd.xlane.f32.xlu0 %v2625
      %v2627 = vpop.xlane.xlu0 %2626
      %v2628 = vsel %vm2414, %v2558, 0.0
      %2629 = vadd.xlane.f32.xlu0 %v2628
      %v2630 = vpop.xlane.xlu0 %2629
      %v2631 = vsel %vm2414, %v2560, 0.0
      %2632 = vadd.xlane.f32.xlu0 %v2631
      %v2633 = vpop.xlane.xlu0 %2632
      %v2634 = vsel %vm2414, %v2562, 0.0
      %2635 = vadd.xlane.f32.xlu0 %v2634
      %v2636 = vpop.xlane.xlu0 %2635
      %v2637 = vsel %vm2414, %v2564, 0.0
      %2638 = vadd.xlane.f32.xlu0 %v2637
      %v2639 = vpop.xlane.xlu0 %2638
      %v2640 = vsel %vm2414, %v2566, 0.0
      %2641 = vadd.xlane.f32.xlu0 %v2640
      %v2642 = vpop.xlane.xlu0 %2641
      %v2643 = vsel %vm2414, %v2568, 0.0
      %2644 = vadd.xlane.f32.xlu0 %v2643
      %v2645 = vpop.xlane.xlu0 %2644
      %v2646 = vsel %vm2414, %v2570, 0.0
      %2647 = vadd.xlane.f32.xlu0 %v2646
      %v2648 = vpop.xlane.xlu0 %2647
      %v2649 = vsel %vm2414, %v2572, 0.0
      %2650 = vadd.xlane.f32.xlu0 %v2649
      %v2651 = vpop.xlane.xlu0 %2650
      %v2652 = vsel %vm2414, %v2574, 0.0
      %2653 = vadd.xlane.f32.xlu0 %v2652
      %v2654 = vpop.xlane.xlu0 %2653
      %v2655 = vsel %vm2414, %v2576, 0.0
      %2656 = vadd.xlane.f32.xlu0 %v2655
      %v2657 = vpop.xlane.xlu0 %2656
      %v2658 = vsel %vm2414, %v2578, 0.0
      %2659 = vadd.xlane.f32.xlu0 %v2658
      %v2660 = vpop.xlane.xlu0 %2659
      %v2661 = vsel %vm2414, %v2580, 0.0
      %2662 = vadd.xlane.f32.xlu0 %v2661
      %v2663 = vpop.xlane.xlu0 %2662
      %v2664 = vsel %vm2414, %v2582, 0.0
      %2665 = vadd.xlane.f32.xlu0 %v2664
      %v2666 = vpop.xlane.xlu0 %2665
      %v2667 = vsel %vm2414, %v2584, 0.0
      %2668 = vadd.xlane.f32.xlu0 %v2667
      %v2669 = vpop.xlane.xlu0 %2668
      %v2670 = vsel %vm2414, %v2586, 0.0
      %2671 = vadd.xlane.f32.xlu0 %v2670
      %v2672 = vpop.xlane.xlu0 %2671
      %v2673 = vsel %vm2414, %v2588, 0.0
      %2674 = vadd.xlane.f32.xlu0 %v2673
      %v2675 = vpop.xlane.xlu0 %2674
      %v2676 = vsel %vm2414, %v2590, 0.0
      %2677 = vadd.xlane.f32.xlu0 %v2676
      %v2678 = vpop.xlane.xlu0 %2677
      %v2679 = vsel %vm2414, %v2592, 0.0
      %2680 = vadd.xlane.f32.xlu0 %v2679
      %v2681 = vpop.xlane.xlu0 %2680
      %v2682 = vsel %vm2414, %v2594, 0.0
      %2683 = vadd.xlane.f32.xlu0 %v2682
      %v2684 = vpop.xlane.xlu0 %2683
      %v2685 = vsel %vm2414, %v2596, 0.0
      %2686 = vadd.xlane.f32.xlu0 %v2685
      %v2687 = vpop.xlane.xlu0 %2686
      %v2688 = vsel %vm2414, %v2598, 0.0
      %2689 = vadd.xlane.f32.xlu0 %v2688
      %v2690 = vpop.xlane.xlu0 %2689
      %v2691 = vsel %vm2414, %v2600, 0.0
      %2692 = vadd.xlane.f32.xlu0 %v2691
      %v2693 = vpop.xlane.xlu0 %2692
      %v2694 = vsel %vm2414, %v2602, 0.0
      %2695 = vadd.xlane.f32.xlu0 %v2694
      %v2696 = vpop.xlane.xlu0 %2695
      %v2697 = vsel %vm2414, %v2604, 0.0
      %2698 = vadd.xlane.f32.xlu0 %v2697
      %v2699 = vpop.xlane.xlu0 %2698
      %v2700 = vsel %vm2414, %v2606, 0.0
      %2701 = vadd.xlane.f32.xlu0 %v2700
      %v2702 = vpop.xlane.xlu0 %2701
      %v2703 = vrcp.pop %v2609
      %v2704 = vrcp.pop %v2612
      %v2705 = vrcp.pop %v2615
      %v2706 = vrcp.pop %v2618
      %v2707 = vrcp.pop %v2621
      %v2708 = vrcp.pop %v2624
      %v2709 = vrcp.pop %v2627
      %v2710 = vrcp.pop %v2630
      %v2711 = vrcp.pop %v2633
      %v2712 = vrcp.pop %v2636
      %v2713 = vrcp.pop %v2639
      %v2714 = vrcp.pop %v2642
      %v2715 = vrcp.pop %v2645
      %v2716 = vrcp.pop %v2648
      %v2717 = vrcp.pop %v2651
      %v2718 = vrcp.pop %v2654
      %v2719 = vrcp.pop %v2657
      %v2720 = vrcp.pop %v2660
      %v2721 = vrcp.pop %v2663
      %v2722 = vrcp.pop %v2666
      %v2723 = vrcp.pop %v2669
      %v2724 = vrcp.pop %v2672
      %v2725 = vrcp.pop %v2675
      %v2726 = vrcp.pop %v2678
      %v2727 = vrcp.pop %v2681
      %v2728 = vrcp.pop %v2684
      %v2729 = vrcp.pop %v2687
      %v2730 = vrcp.pop %v2690
      %v2731 = vrcp.pop %v2693
      %v2732 = vrcp.pop %v2696
      %v2733 = vrcp.pop %v2699
      %v2734 = vrcp.pop %v2702
      %v2735 = vmul.f32 %v2544, %v2703
      %v2736 = vmul.f32 %v2546, %v2704
      %v2737 = vmul.f32 %v2548, %v2705
      %v2738 = vmul.f32 %v2550, %v2706
      %v2739 = vmul.f32 %v2552, %v2707
      %v2740 = vmul.f32 %v2554, %v2708
      %v2741 = vmul.f32 %v2556, %v2709
      %v2742 = vmul.f32 %v2558, %v2710
      %v2743 = vmul.f32 %v2560, %v2711
      %v2744 = vmul.f32 %v2562, %v2712
      %v2745 = vmul.f32 %v2564, %v2713
      %v2746 = vmul.f32 %v2566, %v2714
      %v2747 = vmul.f32 %v2568, %v2715
      %v2748 = vmul.f32 %v2570, %v2716
      %v2749 = vmul.f32 %v2572, %v2717
      %v2750 = vmul.f32 %v2574, %v2718
      %v2751 = vmul.f32 %v2576, %v2719
      %v2752 = vmul.f32 %v2578, %v2720
      %v2753 = vmul.f32 %v2580, %v2721
      %v2754 = vmul.f32 %v2582, %v2722
      %v2755 = vmul.f32 %v2584, %v2723
      %v2756 = vmul.f32 %v2586, %v2724
      %v2757 = vmul.f32 %v2588, %v2725
      %v2758 = vmul.f32 %v2590, %v2726
      %v2759 = vmul.f32 %v2592, %v2727
      %v2760 = vmul.f32 %v2594, %v2728
      %v2761 = vmul.f32 %v2596, %v2729
      %v2762 = vmul.f32 %v2598, %v2730
      %v2763 = vmul.f32 %v2600, %v2731
      %v2764 = vmul.f32 %v2602, %v2732
      %v2765 = vmul.f32 %v2604, %v2733
      %v2766 = vmul.f32 %v2606, %v2734
      %v2767 = vpack.c.bf16 %v2736, %v2735
      %v2768 = vpack.c.bf16 %v2738, %v2737
      %v2769 = vpack.c.bf16 %v2740, %v2739
      %v2770 = vpack.c.bf16 %v2742, %v2741
      %v2771 = vpack.c.bf16 %v2744, %v2743
      %v2772 = vpack.c.bf16 %v2746, %v2745
      %v2773 = vpack.c.bf16 %v2748, %v2747
      %v2774 = vpack.c.bf16 %v2750, %v2749
      %v2775 = vpack.c.bf16 %v2752, %v2751
      %v2776 = vpack.c.bf16 %v2754, %v2753
      %v2777 = vpack.c.bf16 %v2756, %v2755
      %v2778 = vpack.c.bf16 %v2758, %v2757
      %v2779 = vpack.c.bf16 %v2760, %v2759
      %v2780 = vpack.c.bf16 %v2762, %v2761
      %v2781 = vpack.c.bf16 %v2764, %v2763
      %v2782 = vpack.c.bf16 %v2766, %v2765
      %v2784 = vsel %vm2414, %v2767, 0
      %v2787 = vsel %vm2414, %v2768, 0
      %v2790 = vsel %vm2414, %v2769, 0
      %v2793 = vsel %vm2414, %v2770, 0
      %2795 = vmatprep.subr.bf16.mxu0 0
      %2796 = vmatpush1.bf16.msra.mxu0 0
      %2797 = vmatprep.subr.bf16.mxu0 0
      %2798 = vmatpush1.bf16.msra.mxu0 0
      %2799 = vmatprep.subr.bf16.mxu0 0
      %2800 = vmatpush1.bf16.msra.mxu0 0
      %2801 = vmatprep.subr.bf16.mxu0 0
      %2802 = vmatpush1.bf16.msra.mxu0 0
      %2803 = vmatprep.subr.bf16.mxu0 0
      %2804 = vmatpush1.bf16.msra.mxu0 %v1028
      %2805 = vmatprep.subr.bf16.mxu0 0
      %2806 = vmatpush1.bf16.msra.mxu0 %v1027
      %2807 = vmatprep.subr.bf16.mxu0 0
      %2808 = vmatpush1.bf16.msra.mxu0 %v1026
      %2809 = vmatprep.subr.bf16.mxu0 0
      %2810 = vmatpush1.bf16.msra.mxu0 %v1025
      %2811 = vmatprep.subr.bf16.mxu0 0
      %2812 = vmatpush2.bf16.msra.mxu0 0
      %2813 = vmatprep.subr.bf16.mxu0 0
      %2814 = vmatpush2.bf16.msra.mxu0 0
      %2815 = vmatprep.subr.bf16.mxu0 0
      %2816 = vmatpush2.bf16.msra.mxu0 0
      %2817 = vmatprep.subr.bf16.mxu0 0
      %2818 = vmatpush2.bf16.msra.mxu0 0
      %2819 = vmatprep.subr.bf16.mxu0 0
      %2820 = vmatpush2.bf16.msra.mxu0 0
      %2821 = vmatprep.subr.bf16.mxu0 0
      %2822 = vmatpush2.bf16.msra.mxu0 0
      %2823 = vmatprep.subr.bf16.mxu0 0
      %2824 = vmatpush2.bf16.msra.mxu0 0
      %2825 = vmatprep.subr.bf16.mxu0 0
      %2826 = vmatpush2.bf16.msra.mxu0 0
      %2827 = vmatprep.mubr.bf16.mxu0 0
      %2828 = vmatmul.mubr.bf16.gmra.mxu0 %v2784
      %v2829 = vpop.f32.mrf.mxu0
      %v2830 = vadd.f32 0.0, %v2829
      %v2831 = vpop.f32.mrf.mxu0
      %v2832 = vpop.f32.mrf.mxu0
      %v2833 = vadd.f32 0.0, %v2832
      %v2834 = vpop.f32.mrf.mxu0
      %2835 = vmatprep.mubr.bf16.mxu0 0
      %2836 = vmatmul.mubr.bf16.gmra.mxu0 %v2787
      %v2837 = vpop.f32.mrf.mxu0
      %v2838 = vadd.f32 0.0, %v2837
      %v2839 = vpop.f32.mrf.mxu0
      %v2840 = vpop.f32.mrf.mxu0
      %v2841 = vadd.f32 0.0, %v2840
      %v2842 = vpop.f32.mrf.mxu0
      %2843 = vmatprep.mubr.bf16.mxu0 0
      %2844 = vmatmul.mubr.bf16.gmra.mxu0 %v2790
      %v2845 = vpop.f32.mrf.mxu0
      %v2846 = vadd.f32 0.0, %v2845
      %v2847 = vpop.f32.mrf.mxu0
      %v2848 = vpop.f32.mrf.mxu0
      %v2849 = vadd.f32 0.0, %v2848
      %v2850 = vpop.f32.mrf.mxu0
      %2851 = vmatprep.mubr.bf16.mxu0 0
      %2852 = vmatmul.mubr.bf16.gmra.mxu0 %v2793
      %v2853 = vpop.f32.mrf.mxu0
      %v2854 = vadd.f32 0.0, %v2853
      %v2855 = vpop.f32.mrf.mxu0
      %v2856 = vpop.f32.mrf.mxu0
      %v2857 = vadd.f32 0.0, %v2856
      %v2858 = vpop.f32.mrf.mxu0
      %2859 = vdwg.mxu0
      %v2860 = vpack.c.bf16 %v2833, %v2830
      %v2861 = vpack.c.bf16 %v2841, %v2838
      %v2862 = vpack.c.bf16 %v2849, %v2846
      %v2863 = vpack.c.bf16 %v2857, %v2854
      %v2864 = vld [vmem:[%s7] sm:$0xf]
      %v2866 = vsel %vm2414, %v2771, 0
      %v2869 = vsel %vm2414, %v2772, 0
      %v2872 = vsel %vm2414, %v2773, 0
      %v2875 = vsel %vm2414, %v2774, 0
      %2877 = vmatprep.subr.bf16.mxu0 0
      %2878 = vmatpush1.bf16.msra.mxu0 0
      %2879 = vmatprep.subr.bf16.mxu0 0
      %2880 = vmatpush1.bf16.msra.mxu0 0
      %2881 = vmatprep.subr.bf16.mxu0 0
      %2882 = vmatpush1.bf16.msra.mxu0 0
      %2883 = vmatprep.subr.bf16.mxu0 0
      %2884 = vmatpush1.bf16.msra.mxu0 0
      %2885 = vmatprep.subr.bf16.mxu0 0
      %2886 = vmatpush1.bf16.msra.mxu0 %v1458
      %2887 = vmatprep.subr.bf16.mxu0 0
      %2888 = vmatpush1.bf16.msra.mxu0 %v1457
      %2889 = vmatprep.subr.bf16.mxu0 0
      %2890 = vmatpush1.bf16.msra.mxu0 %v1456
      %2891 = vmatprep.subr.bf16.mxu0 0
      %2892 = vmatpush1.bf16.msra.mxu0 %v1455
      %2893 = vmatprep.subr.bf16.mxu0 0
      %2894 = vmatpush2.bf16.msra.mxu0 0
      %2895 = vmatprep.subr.bf16.mxu0 0
      %2896 = vmatpush2.bf16.msra.mxu0 0
      %2897 = vmatprep.subr.bf16.mxu0 0
      %2898 = vmatpush2.bf16.msra.mxu0 0
      %2899 = vmatprep.subr.bf16.mxu0 0
      %2900 = vmatpush2.bf16.msra.mxu0 0
      %2901 = vmatprep.subr.bf16.mxu0 0
      %2902 = vmatpush2.bf16.msra.mxu0 0
      %2903 = vmatprep.subr.bf16.mxu0 0
      %2904 = vmatpush2.bf16.msra.mxu0 0
      %2905 = vmatprep.subr.bf16.mxu0 0
      %2906 = vmatpush2.bf16.msra.mxu0 0
      %2907 = vmatprep.subr.bf16.mxu0 0
      %2908 = vmatpush2.bf16.msra.mxu0 0
      %2909 = vmatprep.mubr.bf16.mxu0 0
      %2910 = vmatmul.mubr.bf16.gmra.mxu0 %v2866
      %v2911 = vpop.f32.mrf.mxu0
      %v2912 = vadd.f32 0.0, %v2911
      %v2913 = vpop.f32.mrf.mxu0
      %v2914 = vpop.f32.mrf.mxu0
      %v2915 = vadd.f32 0.0, %v2914
      %v2916 = vpop.f32.mrf.mxu0
      %2917 = vmatprep.mubr.bf16.mxu0 0
      %2918 = vmatmul.mubr.bf16.gmra.mxu0 %v2869
      %v2919 = vpop.f32.mrf.mxu0
      %v2920 = vadd.f32 0.0, %v2919
      %v2921 = vpop.f32.mrf.mxu0
      %v2922 = vpop.f32.mrf.mxu0
      %v2923 = vadd.f32 0.0, %v2922
      %v2924 = vpop.f32.mrf.mxu0
      %2925 = vmatprep.mubr.bf16.mxu0 0
      %2926 = vmatmul.mubr.bf16.gmra.mxu0 %v2872
      %v2927 = vpop.f32.mrf.mxu0
      %v2928 = vadd.f32 0.0, %v2927
      %v2929 = vpop.f32.mrf.mxu0
      %v2930 = vpop.f32.mrf.mxu0
      %v2931 = vadd.f32 0.0, %v2930
      %v2932 = vpop.f32.mrf.mxu0
      %2933 = vmatprep.mubr.bf16.mxu0 0
      %2934 = vmatmul.mubr.bf16.gmra.mxu0 %v2875
      %v2935 = vpop.f32.mrf.mxu0
      %v2936 = vadd.f32 0.0, %v2935
      %v2937 = vpop.f32.mrf.mxu0
      %v2938 = vpop.f32.mrf.mxu0
      %v2939 = vadd.f32 0.0, %v2938
      %v2940 = vpop.f32.mrf.mxu0
      %2941 = vdwg.mxu0
      %v2942 = vpack.c.bf16 %v2915, %v2912
      %v2943 = vpack.c.bf16 %v2923, %v2920
      %v2944 = vpack.c.bf16 %v2931, %v2928
      %v2945 = vpack.c.bf16 %v2939, %v2936
      %s2946 = scalar_lea.vmem %s7, 4
      %v2947 = vld [vmem:[%s2946] sm:$0xf]
      %v2949 = vsel %vm1037, %v2942, 0
      %v2952 = vsel %vm1037, %v2943, 0
      %v2955 = vsel %vm1037, %v2944, 0
      %v2958 = vsel %vm1037, %v2945, 0
      %vm2960 = vcmask 1043456
      %v2962 = vsel %vm2960, %v2947, 0
      %2964 = vmatprep.subr.bf16.mxu0 0
      %2965 = vmatpush1.bf16.msra.mxu0 0
      %2966 = vmatprep.subr.bf16.mxu0 0
      %2967 = vmatpush1.bf16.msra.mxu0 0
      %2968 = vmatprep.subr.bf16.mxu0 0
      %2969 = vmatpush1.bf16.msra.mxu0 0
      %2970 = vmatprep.subr.bf16.mxu0 0
      %2971 = vmatpush1.bf16.msra.mxu0 0
      %2972 = vmatprep.subr.bf16.mxu0 0
      %2973 = vmatpush1.bf16.msra.mxu0 0
      %2974 = vmatprep.subr.bf16.mxu0 0
      %2975 = vmatpush1.bf16.msra.mxu0 0
      %2976 = vmatprep.subr.bf16.mxu0 0
      %2977 = vmatpush1.bf16.msra.mxu0 0
      %2978 = vmatprep.subr.bf16.mxu0 0
      %2979 = vmatpush1.bf16.msra.mxu0 %v2962
      %2980 = vmatprep.subr.bf16.mxu0 0
      %2981 = vmatpush2.bf16.msra.mxu0 0
      %2982 = vmatprep.subr.bf16.mxu0 0
      %2983 = vmatpush2.bf16.msra.mxu0 0
      %2984 = vmatprep.subr.bf16.mxu0 0
      %2985 = vmatpush2.bf16.msra.mxu0 0
      %2986 = vmatprep.subr.bf16.mxu0 0
      %2987 = vmatpush2.bf16.msra.mxu0 0
      %2988 = vmatprep.subr.bf16.mxu0 0
      %2989 = vmatpush2.bf16.msra.mxu0 0
      %2990 = vmatprep.subr.bf16.mxu0 0
      %2991 = vmatpush2.bf16.msra.mxu0 0
      %2992 = vmatprep.subr.bf16.mxu0 0
      %2993 = vmatpush2.bf16.msra.mxu0 0
      %2994 = vmatprep.subr.bf16.mxu0 0
      %2995 = vmatpush2.bf16.msra.mxu0 0
      %2996 = vmatprep.mubr.bf16.mxu0 0
      %2997 = vmatmul.mubr.bf16.gmra.mxu0 %v2949
      %v2998 = vpop.f32.mrf.mxu0
      %v2999 = vadd.f32 0.0, %v2998
      %v3000 = vpop.f32.mrf.mxu0
      %v3001 = vpop.f32.mrf.mxu0
      %v3002 = vadd.f32 0.0, %v3001
      %v3003 = vpop.f32.mrf.mxu0
      %3004 = vmatprep.mubr.bf16.mxu0 0
      %3005 = vmatmul.mubr.bf16.gmra.mxu0 %v2952
      %v3006 = vpop.f32.mrf.mxu0
      %v3007 = vadd.f32 0.0, %v3006
      %v3008 = vpop.f32.mrf.mxu0
      %v3009 = vpop.f32.mrf.mxu0
      %v3010 = vadd.f32 0.0, %v3009
      %v3011 = vpop.f32.mrf.mxu0
      %3012 = vmatprep.mubr.bf16.mxu0 0
      %3013 = vmatmul.mubr.bf16.gmra.mxu0 %v2955
      %v3014 = vpop.f32.mrf.mxu0
      %v3015 = vadd.f32 0.0, %v3014
      %v3016 = vpop.f32.mrf.mxu0
      %v3017 = vpop.f32.mrf.mxu0
      %v3018 = vadd.f32 0.0, %v3017
      %v3019 = vpop.f32.mrf.mxu0
      %3020 = vmatprep.mubr.bf16.mxu0 0
      %3021 = vmatmul.mubr.bf16.gmra.mxu0 %v2958
      %v3022 = vpop.f32.mrf.mxu0
      %v3023 = vadd.f32 0.0, %v3022
      %v3024 = vpop.f32.mrf.mxu0
      %v3025 = vpop.f32.mrf.mxu0
      %v3026 = vadd.f32 0.0, %v3025
      %v3027 = vpop.f32.mrf.mxu0
      %3028 = vdwg.mxu0
      %v3030 = vsel %vm1037, %v2860, 0
      %v3033 = vsel %vm1037, %v2861, 0
      %v3036 = vsel %vm1037, %v2862, 0
      %v3039 = vsel %vm1037, %v2863, 0
      %v3042 = vsel %vm2960, %v2864, 0
      %3044 = vmatprep.subr.bf16.mxu0 0
      %3045 = vmatpush1.bf16.msra.mxu0 0
      %3046 = vmatprep.subr.bf16.mxu0 0
      %3047 = vmatpush1.bf16.msra.mxu0 0
      %3048 = vmatprep.subr.bf16.mxu0 0
      %3049 = vmatpush1.bf16.msra.mxu0 0
      %3050 = vmatprep.subr.bf16.mxu0 0
      %3051 = vmatpush1.bf16.msra.mxu0 0
      %3052 = vmatprep.subr.bf16.mxu0 0
      %3053 = vmatpush1.bf16.msra.mxu0 0
      %3054 = vmatprep.subr.bf16.mxu0 0
      %3055 = vmatpush1.bf16.msra.mxu0 0
      %3056 = vmatprep.subr.bf16.mxu0 0
      %3057 = vmatpush1.bf16.msra.mxu0 0
      %3058 = vmatprep.subr.bf16.mxu0 0
      %3059 = vmatpush1.bf16.msra.mxu0 %v3042
      %3060 = vmatprep.subr.bf16.mxu0 0
      %3061 = vmatpush2.bf16.msra.mxu0 0
      %3062 = vmatprep.subr.bf16.mxu0 0
      %3063 = vmatpush2.bf16.msra.mxu0 0
      %3064 = vmatprep.subr.bf16.mxu0 0
      %3065 = vmatpush2.bf16.msra.mxu0 0
      %3066 = vmatprep.subr.bf16.mxu0 0
      %3067 = vmatpush2.bf16.msra.mxu0 0
      %3068 = vmatprep.subr.bf16.mxu0 0
      %3069 = vmatpush2.bf16.msra.mxu0 0
      %3070 = vmatprep.subr.bf16.mxu0 0
      %3071 = vmatpush2.bf16.msra.mxu0 0
      %3072 = vmatprep.subr.bf16.mxu0 0
      %3073 = vmatpush2.bf16.msra.mxu0 0
      %3074 = vmatprep.subr.bf16.mxu0 0
      %3075 = vmatpush2.bf16.msra.mxu0 0
      %3076 = vmatprep.mubr.bf16.mxu0 0
      %3077 = vmatmul.mubr.bf16.gmra.mxu0 %v3030
      %v3078 = vpop.f32.mrf.mxu0
      %v3079 = vadd.f32 %v2999, %v3078
      %v3080 = vpop.f32.mrf.mxu0
      %v3081 = vpop.f32.mrf.mxu0
      %v3082 = vadd.f32 %v3002, %v3081
      %v3083 = vpop.f32.mrf.mxu0
      %3084 = vmatprep.mubr.bf16.mxu0 0
      %3085 = vmatmul.mubr.bf16.gmra.mxu0 %v3033
      %v3086 = vpop.f32.mrf.mxu0
      %v3087 = vadd.f32 %v3007, %v3086
      %v3088 = vpop.f32.mrf.mxu0
      %v3089 = vpop.f32.mrf.mxu0
      %v3090 = vadd.f32 %v3010, %v3089
      %v3091 = vpop.f32.mrf.mxu0
      %3092 = vmatprep.mubr.bf16.mxu0 0
      %3093 = vmatmul.mubr.bf16.gmra.mxu0 %v3036
      %v3094 = vpop.f32.mrf.mxu0
      %v3095 = vadd.f32 %v3015, %v3094
      %v3096 = vpop.f32.mrf.mxu0
      %v3097 = vpop.f32.mrf.mxu0
      %v3098 = vadd.f32 %v3018, %v3097
      %v3099 = vpop.f32.mrf.mxu0
      %3100 = vmatprep.mubr.bf16.mxu0 0
      %3101 = vmatmul.mubr.bf16.gmra.mxu0 %v3039
      %v3102 = vpop.f32.mrf.mxu0
      %v3103 = vadd.f32 %v3023, %v3102
      %v3104 = vpop.f32.mrf.mxu0
      %v3105 = vpop.f32.mrf.mxu0
      %v3106 = vadd.f32 %v3026, %v3105
      %v3107 = vpop.f32.mrf.mxu0
      %3108 = vdwg.mxu0
      %v3110 = vsel %vm2414, %v2775, 0
      %v3113 = vsel %vm2414, %v2776, 0
      %v3116 = vsel %vm2414, %v2777, 0
      %v3119 = vsel %vm2414, %v2778, 0
      %3121 = vmatprep.subr.bf16.mxu0 0
      %3122 = vmatpush1.bf16.msra.mxu0 0
      %3123 = vmatprep.subr.bf16.mxu0 0
      %3124 = vmatpush1.bf16.msra.mxu0 0
      %3125 = vmatprep.subr.bf16.mxu0 0
      %3126 = vmatpush1.bf16.msra.mxu0 0
      %3127 = vmatprep.subr.bf16.mxu0 0
      %3128 = vmatpush1.bf16.msra.mxu0 0
      %3129 = vmatprep.subr.bf16.mxu0 0
      %3130 = vmatpush1.bf16.msra.mxu0 %v1887
      %3131 = vmatprep.subr.bf16.mxu0 0
      %3132 = vmatpush1.bf16.msra.mxu0 %v1886
      %3133 = vmatprep.subr.bf16.mxu0 0
      %3134 = vmatpush1.bf16.msra.mxu0 %v1885
      %3135 = vmatprep.subr.bf16.mxu0 0
      %3136 = vmatpush1.bf16.msra.mxu0 %v1884
      %3137 = vmatprep.subr.bf16.mxu0 0
      %3138 = vmatpush2.bf16.msra.mxu0 0
      %3139 = vmatprep.subr.bf16.mxu0 0
      %3140 = vmatpush2.bf16.msra.mxu0 0
      %3141 = vmatprep.subr.bf16.mxu0 0
      %3142 = vmatpush2.bf16.msra.mxu0 0
      %3143 = vmatprep.subr.bf16.mxu0 0
      %3144 = vmatpush2.bf16.msra.mxu0 0
      %3145 = vmatprep.subr.bf16.mxu0 0
      %3146 = vmatpush2.bf16.msra.mxu0 0
      %3147 = vmatprep.subr.bf16.mxu0 0
      %3148 = vmatpush2.bf16.msra.mxu0 0
      %3149 = vmatprep.subr.bf16.mxu0 0
      %3150 = vmatpush2.bf16.msra.mxu0 0
      %3151 = vmatprep.subr.bf16.mxu0 0
      %3152 = vmatpush2.bf16.msra.mxu0 0
      %3153 = vmatprep.mubr.bf16.mxu0 0
      %3154 = vmatmul.mubr.bf16.gmra.mxu0 %v3110
      %v3155 = vpop.f32.mrf.mxu0
      %v3156 = vadd.f32 0.0, %v3155
      %v3157 = vpop.f32.mrf.mxu0
      %v3158 = vpop.f32.mrf.mxu0
      %v3159 = vadd.f32 0.0, %v3158
      %v3160 = vpop.f32.mrf.mxu0
      %3161 = vmatprep.mubr.bf16.mxu0 0
      %3162 = vmatmul.mubr.bf16.gmra.mxu0 %v3113
      %v3163 = vpop.f32.mrf.mxu0
      %v3164 = vadd.f32 0.0, %v3163
      %v3165 = vpop.f32.mrf.mxu0
      %v3166 = vpop.f32.mrf.mxu0
      %v3167 = vadd.f32 0.0, %v3166
      %v3168 = vpop.f32.mrf.mxu0
      %3169 = vmatprep.mubr.bf16.mxu0 0
      %3170 = vmatmul.mubr.bf16.gmra.mxu0 %v3116
      %v3171 = vpop.f32.mrf.mxu0
      %v3172 = vadd.f32 0.0, %v3171
      %v3173 = vpop.f32.mrf.mxu0
      %v3174 = vpop.f32.mrf.mxu0
      %v3175 = vadd.f32 0.0, %v3174
      %v3176 = vpop.f32.mrf.mxu0
      %3177 = vmatprep.mubr.bf16.mxu0 0
      %3178 = vmatmul.mubr.bf16.gmra.mxu0 %v3119
      %v3179 = vpop.f32.mrf.mxu0
      %v3180 = vadd.f32 0.0, %v3179
      %v3181 = vpop.f32.mrf.mxu0
      %v3182 = vpop.f32.mrf.mxu0
      %v3183 = vadd.f32 0.0, %v3182
      %v3184 = vpop.f32.mrf.mxu0
      %3185 = vdwg.mxu0
      %v3186 = vpack.c.bf16 %v3159, %v3156
      %v3187 = vpack.c.bf16 %v3167, %v3164
      %v3188 = vpack.c.bf16 %v3175, %v3172
      %v3189 = vpack.c.bf16 %v3183, %v3180
      %s3190 = scalar_lea.vmem %s7, 8
      %v3191 = vld [vmem:[%s3190] sm:$0xf]
      %v3193 = vsel %vm1037, %v3186, 0
      %v3196 = vsel %vm1037, %v3187, 0
      %v3199 = vsel %vm1037, %v3188, 0
      %v3202 = vsel %vm1037, %v3189, 0
      %v3205 = vsel %vm2960, %v3191, 0
      %3207 = vmatprep.subr.bf16.mxu0 0
      %3208 = vmatpush1.bf16.msra.mxu0 0
      %3209 = vmatprep.subr.bf16.mxu0 0
      %3210 = vmatpush1.bf16.msra.mxu0 0
      %3211 = vmatprep.subr.bf16.mxu0 0
      %3212 = vmatpush1.bf16.msra.mxu0 0
      %3213 = vmatprep.subr.bf16.mxu0 0
      %3214 = vmatpush1.bf16.msra.mxu0 0
      %3215 = vmatprep.subr.bf16.mxu0 0
      %3216 = vmatpush1.bf16.msra.mxu0 0
      %3217 = vmatprep.subr.bf16.mxu0 0
      %3218 = vmatpush1.bf16.msra.mxu0 0
      %3219 = vmatprep.subr.bf16.mxu0 0
      %3220 = vmatpush1.bf16.msra.mxu0 0
      %3221 = vmatprep.subr.bf16.mxu0 0
      %3222 = vmatpush1.bf16.msra.mxu0 %v3205
      %3223 = vmatprep.subr.bf16.mxu0 0
      %3224 = vmatpush2.bf16.msra.mxu0 0
      %3225 = vmatprep.subr.bf16.mxu0 0
      %3226 = vmatpush2.bf16.msra.mxu0 0
      %3227 = vmatprep.subr.bf16.mxu0 0
      %3228 = vmatpush2.bf16.msra.mxu0 0
      %3229 = vmatprep.subr.bf16.mxu0 0
      %3230 = vmatpush2.bf16.msra.mxu0 0
      %3231 = vmatprep.subr.bf16.mxu0 0
      %3232 = vmatpush2.bf16.msra.mxu0 0
      %3233 = vmatprep.subr.bf16.mxu0 0
      %3234 = vmatpush2.bf16.msra.mxu0 0
      %3235 = vmatprep.subr.bf16.mxu0 0
      %3236 = vmatpush2.bf16.msra.mxu0 0
      %3237 = vmatprep.subr.bf16.mxu0 0
      %3238 = vmatpush2.bf16.msra.mxu0 0
      %3239 = vmatprep.mubr.bf16.mxu0 0
      %3240 = vmatmul.mubr.bf16.gmra.mxu0 %v3193
      %v3241 = vpop.f32.mrf.mxu0
      %v3242 = vadd.f32 0.0, %v3241
      %v3243 = vpop.f32.mrf.mxu0
      %v3244 = vpop.f32.mrf.mxu0
      %v3245 = vadd.f32 0.0, %v3244
      %v3246 = vpop.f32.mrf.mxu0
      %3247 = vmatprep.mubr.bf16.mxu0 0
      %3248 = vmatmul.mubr.bf16.gmra.mxu0 %v3196
      %v3249 = vpop.f32.mrf.mxu0
      %v3250 = vadd.f32 0.0, %v3249
      %v3251 = vpop.f32.mrf.mxu0
      %v3252 = vpop.f32.mrf.mxu0
      %v3253 = vadd.f32 0.0, %v3252
      %v3254 = vpop.f32.mrf.mxu0
      %3255 = vmatprep.mubr.bf16.mxu0 0
      %3256 = vmatmul.mubr.bf16.gmra.mxu0 %v3199
      %v3257 = vpop.f32.mrf.mxu0
      %v3258 = vadd.f32 0.0, %v3257
      %v3259 = vpop.f32.mrf.mxu0
      %v3260 = vpop.f32.mrf.mxu0
      %v3261 = vadd.f32 0.0, %v3260
      %v3262 = vpop.f32.mrf.mxu0
      %3263 = vmatprep.mubr.bf16.mxu0 0
      %3264 = vmatmul.mubr.bf16.gmra.mxu0 %v3202
      %v3265 = vpop.f32.mrf.mxu0
      %v3266 = vadd.f32 0.0, %v3265
      %v3267 = vpop.f32.mrf.mxu0
      %v3268 = vpop.f32.mrf.mxu0
      %v3269 = vadd.f32 0.0, %v3268
      %v3270 = vpop.f32.mrf.mxu0
      %3271 = vdwg.mxu0
      %v3272 = vadd.f32 %v3079, %v3242
      %v3273 = vadd.f32 %v3082, %v3245
      %v3274 = vadd.f32 %v3087, %v3250
      %v3275 = vadd.f32 %v3090, %v3253
      %v3276 = vadd.f32 %v3095, %v3258
      %v3277 = vadd.f32 %v3098, %v3261
      %v3278 = vadd.f32 %v3103, %v3266
      %v3279 = vadd.f32 %v3106, %v3269
      %v3281 = vsel %vm2414, %v2779, 0
      %v3284 = vsel %vm2414, %v2780, 0
      %v3287 = vsel %vm2414, %v2781, 0
      %v3290 = vsel %vm2414, %v2782, 0
      %3292 = vmatprep.subr.bf16.mxu0 0
      %3293 = vmatpush1.bf16.msra.mxu0 0
      %3294 = vmatprep.subr.bf16.mxu0 0
      %3295 = vmatpush1.bf16.msra.mxu0 0
      %3296 = vmatprep.subr.bf16.mxu0 0
      %3297 = vmatpush1.bf16.msra.mxu0 0
      %3298 = vmatprep.subr.bf16.mxu0 0
      %3299 = vmatpush1.bf16.msra.mxu0 0
      %3300 = vmatprep.subr.bf16.mxu0 0
      %3301 = vmatpush1.bf16.msra.mxu0 %v2316
      %3302 = vmatprep.subr.bf16.mxu0 0
      %3303 = vmatpush1.bf16.msra.mxu0 %v2315
      %3304 = vmatprep.subr.bf16.mxu0 0
      %3305 = vmatpush1.bf16.msra.mxu0 %v2314
      %3306 = vmatprep.subr.bf16.mxu0 0
      %3307 = vmatpush1.bf16.msra.mxu0 %v2313
      %3308 = vmatprep.subr.bf16.mxu0 0
      %3309 = vmatpush2.bf16.msra.mxu0 0
      %3310 = vmatprep.subr.bf16.mxu0 0
      %3311 = vmatpush2.bf16.msra.mxu0 0
      %3312 = vmatprep.subr.bf16.mxu0 0
      %3313 = vmatpush2.bf16.msra.mxu0 0
      %3314 = vmatprep.subr.bf16.mxu0 0
      %3315 = vmatpush2.bf16.msra.mxu0 0
      %3316 = vmatprep.subr.bf16.mxu0 0
      %3317 = vmatpush2.bf16.msra.mxu0 0
      %3318 = vmatprep.subr.bf16.mxu0 0
      %3319 = vmatpush2.bf16.msra.mxu0 0
      %3320 = vmatprep.subr.bf16.mxu0 0
      %3321 = vmatpush2.bf16.msra.mxu0 0
      %3322 = vmatprep.subr.bf16.mxu0 0
      %3323 = vmatpush2.bf16.msra.mxu0 0
      %3324 = vmatprep.mubr.bf16.mxu0 0
      %3325 = vmatmul.mubr.bf16.gmra.mxu0 %v3281
      %v3326 = vpop.f32.mrf.mxu0
      %v3327 = vadd.f32 0.0, %v3326
      %v3328 = vpop.f32.mrf.mxu0
      %v3329 = vpop.f32.mrf.mxu0
      %v3330 = vadd.f32 0.0, %v3329
      %v3331 = vpop.f32.mrf.mxu0
      %3332 = vmatprep.mubr.bf16.mxu0 0
      %3333 = vmatmul.mubr.bf16.gmra.mxu0 %v3284
      %v3334 = vpop.f32.mrf.mxu0
      %v3335 = vadd.f32 0.0, %v3334
      %v3336 = vpop.f32.mrf.mxu0
      %v3337 = vpop.f32.mrf.mxu0
      %v3338 = vadd.f32 0.0, %v3337
      %v3339 = vpop.f32.mrf.mxu0
      %3340 = vmatprep.mubr.bf16.mxu0 0
      %3341 = vmatmul.mubr.bf16.gmra.mxu0 %v3287
      %v3342 = vpop.f32.mrf.mxu0
      %v3343 = vadd.f32 0.0, %v3342
      %v3344 = vpop.f32.mrf.mxu0
      %v3345 = vpop.f32.mrf.mxu0
      %v3346 = vadd.f32 0.0, %v3345
      %v3347 = vpop.f32.mrf.mxu0
      %3348 = vmatprep.mubr.bf16.mxu0 0
      %3349 = vmatmul.mubr.bf16.gmra.mxu0 %v3290
      %v3350 = vpop.f32.mrf.mxu0
      %v3351 = vadd.f32 0.0, %v3350
      %v3352 = vpop.f32.mrf.mxu0
      %v3353 = vpop.f32.mrf.mxu0
      %v3354 = vadd.f32 0.0, %v3353
      %v3355 = vpop.f32.mrf.mxu0
      %3356 = vdwg.mxu0
      %v3357 = vpack.c.bf16 %v3330, %v3327
      %v3358 = vpack.c.bf16 %v3338, %v3335
      %v3359 = vpack.c.bf16 %v3346, %v3343
      %v3360 = vpack.c.bf16 %v3354, %v3351
      %s3361 = scalar_lea.vmem %s7, 12
      %v3362 = vld [vmem:[%s3361] sm:$0xf]
      %v3364 = vsel %vm1037, %v3357, 0
      %v3367 = vsel %vm1037, %v3358, 0
      %v3370 = vsel %vm1037, %v3359, 0
      %v3373 = vsel %vm1037, %v3360, 0
      %v3376 = vsel %vm2960, %v3362, 0
      %3378 = vmatprep.subr.bf16.mxu0 0
      %3379 = vmatpush1.bf16.msra.mxu0 0
      %3380 = vmatprep.subr.bf16.mxu0 0
      %3381 = vmatpush1.bf16.msra.mxu0 0
      %3382 = vmatprep.subr.bf16.mxu0 0
      %3383 = vmatpush1.bf16.msra.mxu0 0
      %3384 = vmatprep.subr.bf16.mxu0 0
      %3385 = vmatpush1.bf16.msra.mxu0 0
      %3386 = vmatprep.subr.bf16.mxu0 0
      %3387 = vmatpush1.bf16.msra.mxu0 0
      %3388 = vmatprep.subr.bf16.mxu0 0
      %3389 = vmatpush1.bf16.msra.mxu0 0
      %3390 = vmatprep.subr.bf16.mxu0 0
      %3391 = vmatpush1.bf16.msra.mxu0 0
      %3392 = vmatprep.subr.bf16.mxu0 0
      %3393 = vmatpush1.bf16.msra.mxu0 %v3376
      %3394 = vmatprep.subr.bf16.mxu0 0
      %3395 = vmatpush2.bf16.msra.mxu0 0
      %3396 = vmatprep.subr.bf16.mxu0 0
      %3397 = vmatpush2.bf16.msra.mxu0 0
      %3398 = vmatprep.subr.bf16.mxu0 0
      %3399 = vmatpush2.bf16.msra.mxu0 0
      %3400 = vmatprep.subr.bf16.mxu0 0
      %3401 = vmatpush2.bf16.msra.mxu0 0
      %3402 = vmatprep.subr.bf16.mxu0 0
      %3403 = vmatpush2.bf16.msra.mxu0 0
      %3404 = vmatprep.subr.bf16.mxu0 0
      %3405 = vmatpush2.bf16.msra.mxu0 0
      %3406 = vmatprep.subr.bf16.mxu0 0
      %3407 = vmatpush2.bf16.msra.mxu0 0
      %3408 = vmatprep.subr.bf16.mxu0 0
      %3409 = vmatpush2.bf16.msra.mxu0 0
      %3410 = vmatprep.mubr.bf16.mxu0 0
      %3411 = vmatmul.mubr.bf16.gmra.mxu0 %v3364
      %v3412 = vpop.f32.mrf.mxu0
      %v3413 = vadd.f32 0.0, %v3412
      %v3414 = vpop.f32.mrf.mxu0
      %v3415 = vpop.f32.mrf.mxu0
      %v3416 = vadd.f32 0.0, %v3415
      %v3417 = vpop.f32.mrf.mxu0
      %3418 = vmatprep.mubr.bf16.mxu0 0
      %3419 = vmatmul.mubr.bf16.gmra.mxu0 %v3367
      %v3420 = vpop.f32.mrf.mxu0
      %v3421 = vadd.f32 0.0, %v3420
      %v3422 = vpop.f32.mrf.mxu0
      %v3423 = vpop.f32.mrf.mxu0
      %v3424 = vadd.f32 0.0, %v3423
      %v3425 = vpop.f32.mrf.mxu0
      %3426 = vmatprep.mubr.bf16.mxu0 0
      %3427 = vmatmul.mubr.bf16.gmra.mxu0 %v3370
      %v3428 = vpop.f32.mrf.mxu0
      %v3429 = vadd.f32 0.0, %v3428
      %v3430 = vpop.f32.mrf.mxu0
      %v3431 = vpop.f32.mrf.mxu0
      %v3432 = vadd.f32 0.0, %v3431
      %v3433 = vpop.f32.mrf.mxu0
      %3434 = vmatprep.mubr.bf16.mxu0 0
      %3435 = vmatmul.mubr.bf16.gmra.mxu0 %v3373
      %v3436 = vpop.f32.mrf.mxu0
      %v3437 = vadd.f32 0.0, %v3436
      %v3438 = vpop.f32.mrf.mxu0
      %v3439 = vpop.f32.mrf.mxu0
      %v3440 = vadd.f32 0.0, %v3439
      %v3441 = vpop.f32.mrf.mxu0
      %3442 = vdwg.mxu0
      %v3443 = vadd.f32 %v3272, %v3413
      %v3444 = vadd.f32 %v3273, %v3416
      %v3445 = vadd.f32 %v3274, %v3421
      %v3446 = vadd.f32 %v3275, %v3424
      %v3447 = vadd.f32 %v3276, %v3429
      %v3448 = vadd.f32 %v3277, %v3432
      %v3449 = vadd.f32 %v3278, %v3437
      %v3450 = vadd.f32 %v3279, %v3440
      %v3451 = vld [vmem:[%s11] sm:$0x1]
      %v3452 = vld [vmem:[%s12] sm:$0x1]
      %v3453 = vsel %vm679, %v3443, 0.0
      %3454 = vadd.xlane.f32.xlu0 %v3453
      %v3455 = vpop.xlane.xlu0 %3454
      %v3456 = vsel %vm679, %v3444, 0.0
      %3457 = vadd.xlane.f32.xlu0 %v3456
      %v3458 = vpop.xlane.xlu0 %3457
      %v3459 = vsel %vm679, %v3445, 0.0
      %3460 = vadd.xlane.f32.xlu0 %v3459
      %v3461 = vpop.xlane.xlu0 %3460
      %v3462 = vsel %vm679, %v3446, 0.0
      %3463 = vadd.xlane.f32.xlu0 %v3462
      %v3464 = vpop.xlane.xlu0 %3463
      %v3465 = vsel %vm679, %v3447, 0.0
      %3466 = vadd.xlane.f32.xlu0 %v3465
      %v3467 = vpop.xlane.xlu0 %3466
      %v3468 = vsel %vm679, %v3448, 0.0
      %3469 = vadd.xlane.f32.xlu0 %v3468
      %v3470 = vpop.xlane.xlu0 %3469
      %v3471 = vsel %vm679, %v3449, 0.0
      %3472 = vadd.xlane.f32.xlu0 %v3471
      %v3473 = vpop.xlane.xlu0 %3472
      %v3474 = vsel %vm679, %v3450, 0.0
      %3475 = vadd.xlane.f32.xlu0 %v3474
      %v3476 = vpop.xlane.xlu0 %3475
      %v3477 = vrcp.pop 32.0
      %v3478 = vmul.f32 %v3455, %v3477
      %v3479 = vmul.f32 %v3458, %v3477
      %v3480 = vmul.f32 %v3461, %v3477
      %v3481 = vmul.f32 %v3464, %v3477
      %v3482 = vmul.f32 %v3467, %v3477
      %v3483 = vmul.f32 %v3470, %v3477
      %v3484 = vmul.f32 %v3473, %v3477
      %v3485 = vmul.f32 %v3476, %v3477
      %v3486 = vsub.f32 %v3443, %v3478
      %v3487 = vsub.f32 %v3444, %v3479
      %v3488 = vsub.f32 %v3445, %v3480
      %v3489 = vsub.f32 %v3446, %v3481
      %v3490 = vsub.f32 %v3447, %v3482
      %v3491 = vsub.f32 %v3448, %v3483
      %v3492 = vsub.f32 %v3449, %v3484
      %v3493 = vsub.f32 %v3450, %v3485
      %v3494 = vmul.f32 %v3486, %v3486
      %v3495 = vmul.f32 %v3487, %v3487
      %v3496 = vmul.f32 %v3488, %v3488
      %v3497 = vmul.f32 %v3489, %v3489
      %v3498 = vmul.f32 %v3490, %v3490
      %v3499 = vmul.f32 %v3491, %v3491
      %v3500 = vmul.f32 %v3492, %v3492
      %v3501 = vmul.f32 %v3493, %v3493
      %v3502 = vsel %vm679, %v3494, 0.0
      %3503 = vadd.xlane.f32.xlu0 %v3502
      %v3504 = vpop.xlane.xlu0 %3503
      %v3505 = vsel %vm679, %v3495, 0.0
      %3506 = vadd.xlane.f32.xlu0 %v3505
      %v3507 = vpop.xlane.xlu0 %3506
      %v3508 = vsel %vm679, %v3496, 0.0
      %3509 = vadd.xlane.f32.xlu0 %v3508
      %v3510 = vpop.xlane.xlu0 %3509
      %v3511 = vsel %vm679, %v3497, 0.0
      %3512 = vadd.xlane.f32.xlu0 %v3511
      %v3513 = vpop.xlane.xlu0 %3512
      %v3514 = vsel %vm679, %v3498, 0.0
      %3515 = vadd.xlane.f32.xlu0 %v3514
      %v3516 = vpop.xlane.xlu0 %3515
      %v3517 = vsel %vm679, %v3499, 0.0
      %3518 = vadd.xlane.f32.xlu0 %v3517
      %v3519 = vpop.xlane.xlu0 %3518
      %v3520 = vsel %vm679, %v3500, 0.0
      %3521 = vadd.xlane.f32.xlu0 %v3520
      %v3522 = vpop.xlane.xlu0 %3521
      %v3523 = vsel %vm679, %v3501, 0.0
      %3524 = vadd.xlane.f32.xlu0 %v3523
      %v3525 = vpop.xlane.xlu0 %3524
      %v3526 = vmul.f32 %v3504, 0.032258064
      %v3527 = vmul.f32 %v3507, 0.032258064
      %v3528 = vmul.f32 %v3510, 0.032258064
      %v3529 = vmul.f32 %v3513, 0.032258064
      %v3530 = vmul.f32 %v3516, 0.032258064
      %v3531 = vmul.f32 %v3519, 0.032258064
      %v3532 = vmul.f32 %v3522, 0.032258064
      %v3533 = vmul.f32 %v3525, 0.032258064
      %v3534 = vrsqrt.pop %v3526
      %v3535 = vmul.f32 %v3526, %v3534
      %vm3536 = vcmp.eq.f32.partialorder %v3526, inf
      %v3537 = vsel %vm3536, %v3526, %v3535
      %vm3538 = vcmp.eq.f32.partialorder %v3526, 0.0
      %v3539 = vand.u32 %v3526, 2147483648
      %v3540 = vsel %vm3538, %v3539, %v3537
      %v3541 = vrsqrt.pop %v3527
      %v3542 = vmul.f32 %v3527, %v3541
      %vm3543 = vcmp.eq.f32.partialorder %v3527, inf
      %v3544 = vsel %vm3543, %v3527, %v3542
      %vm3545 = vcmp.eq.f32.partialorder %v3527, 0.0
      %v3546 = vand.u32 %v3527, 2147483648
      %v3547 = vsel %vm3545, %v3546, %v3544
      %v3548 = vrsqrt.pop %v3528
      %v3549 = vmul.f32 %v3528, %v3548
      %vm3550 = vcmp.eq.f32.partialorder %v3528, inf
      %v3551 = vsel %vm3550, %v3528, %v3549
      %vm3552 = vcmp.eq.f32.partialorder %v3528, 0.0
      %v3553 = vand.u32 %v3528, 2147483648
      %v3554 = vsel %vm3552, %v3553, %v3551
      %v3555 = vrsqrt.pop %v3529
      %v3556 = vmul.f32 %v3529, %v3555
      %vm3557 = vcmp.eq.f32.partialorder %v3529, inf
      %v3558 = vsel %vm3557, %v3529, %v3556
      %vm3559 = vcmp.eq.f32.partialorder %v3529, 0.0
      %v3560 = vand.u32 %v3529, 2147483648
      %v3561 = vsel %vm3559, %v3560, %v3558
      %v3562 = vrsqrt.pop %v3530
      %v3563 = vmul.f32 %v3530, %v3562
      %vm3564 = vcmp.eq.f32.partialorder %v3530, inf
      %v3565 = vsel %vm3564, %v3530, %v3563
      %vm3566 = vcmp.eq.f32.partialorder %v3530, 0.0
      %v3567 = vand.u32 %v3530, 2147483648
      %v3568 = vsel %vm3566, %v3567, %v3565
      %v3569 = vrsqrt.pop %v3531
      %v3570 = vmul.f32 %v3531, %v3569
      %vm3571 = vcmp.eq.f32.partialorder %v3531, inf
      %v3572 = vsel %vm3571, %v3531, %v3570
      %vm3573 = vcmp.eq.f32.partialorder %v3531, 0.0
      %v3574 = vand.u32 %v3531, 2147483648
      %v3575 = vsel %vm3573, %v3574, %v3572
      %v3576 = vrsqrt.pop %v3532
      %v3577 = vmul.f32 %v3532, %v3576
      %vm3578 = vcmp.eq.f32.partialorder %v3532, inf
      %v3579 = vsel %vm3578, %v3532, %v3577
      %vm3580 = vcmp.eq.f32.partialorder %v3532, 0.0
      %v3581 = vand.u32 %v3532, 2147483648
      %v3582 = vsel %vm3580, %v3581, %v3579
      %v3583 = vrsqrt.pop %v3533
      %v3584 = vmul.f32 %v3533, %v3583
      %vm3585 = vcmp.eq.f32.partialorder %v3533, inf
      %v3586 = vsel %vm3585, %v3533, %v3584
      %vm3587 = vcmp.eq.f32.partialorder %v3533, 0.0
      %v3588 = vand.u32 %v3533, 2147483648
      %v3589 = vsel %vm3587, %v3588, %v3586
      %v3590 = vadd.f32 %v3540, 1e-06
      %v3591 = vadd.f32 %v3547, 1e-06
      %v3592 = vadd.f32 %v3554, 1e-06
      %v3593 = vadd.f32 %v3561, 1e-06
      %v3594 = vadd.f32 %v3568, 1e-06
      %v3595 = vadd.f32 %v3575, 1e-06
      %v3596 = vadd.f32 %v3582, 1e-06
      %v3597 = vadd.f32 %v3589, 1e-06
      %v3598 = vrcp.pop %v3590
      %v3599 = vrcp.pop %v3591
      %v3600 = vrcp.pop %v3592
      %v3601 = vrcp.pop %v3593
      %v3602 = vrcp.pop %v3594
      %v3603 = vrcp.pop %v3595
      %v3604 = vrcp.pop %v3596
      %v3605 = vrcp.pop %v3597
      %v3606 = vmul.f32 %v3486, %v3598
      %v3607 = vmul.f32 %v3487, %v3599
      %v3608 = vmul.f32 %v3488, %v3600
      %v3609 = vmul.f32 %v3489, %v3601
      %v3610 = vmul.f32 %v3490, %v3602
      %v3611 = vmul.f32 %v3491, %v3603
      %v3612 = vmul.f32 %v3492, %v3604
      %v3613 = vmul.f32 %v3493, %v3605
      %v3615 = vlaneseq
      %v3616 = vshrl.u32 %v3615, 7
      %v3617 = vsub.s32 0, %v3616
      %v3618 = vrot.slane %v3451, %v3617
      %v3620 = vmul.f32 %v3618, %v3606
      %v3621 = vmul.f32 %v3618, %v3607
      %v3622 = vmul.f32 %v3618, %v3608
      %v3623 = vmul.f32 %v3618, %v3609
      %v3624 = vmul.f32 %v3618, %v3610
      %v3625 = vmul.f32 %v3618, %v3611
      %v3626 = vmul.f32 %v3618, %v3612
      %v3627 = vmul.f32 %v3618, %v3613
      %v3629 = vlaneseq
      %v3630 = vshrl.u32 %v3629, 7
      %v3631 = vsub.s32 0, %v3630
      %v3632 = vrot.slane %v3452, %v3631
      %v3634 = vadd.f32 %v3620, %v3632
      %v3635 = vadd.f32 %v3621, %v3632
      %v3636 = vadd.f32 %v3622, %v3632
      %v3637 = vadd.f32 %v3623, %v3632
      %v3638 = vadd.f32 %v3624, %v3632
      %v3639 = vadd.f32 %v3625, %v3632
      %v3640 = vadd.f32 %v3626, %v3632
      %v3641 = vadd.f32 %v3627, %v3632
      %v3642 = vld [vmem:[%s8] sm:$0xf]
      %v3643 = vld [vmem:[%s8 + $0x4] sm:$0xf]
      %v3644 = vld [vmem:[%s8 + $0x8] sm:$0xf]
      %v3645 = vld [vmem:[%s8 + $0xc] sm:$0xf]
      %v3646 = vpack.c.bf16 %v3635, %v3634
      %v3647 = vpack.c.bf16 %v3637, %v3636
      %v3648 = vpack.c.bf16 %v3639, %v3638
      %v3649 = vpack.c.bf16 %v3641, %v3640
      %v3650 = vld [vmem:[%s9] sm:$0xf]
      %v3651 = vld [vmem:[%s9 + $0x4] sm:$0xf]
      %v3652 = vld [vmem:[%s9 + $0x8] sm:$0xf]
      %v3653 = vld [vmem:[%s9 + $0xc] sm:$0xf]
      %v3658 = vunpack.c.l.b16 %v3650
      %v3659 = vunpack.c.l.b16 %v3651
      %v3660 = vunpack.c.l.b16 %v3652
      %v3661 = vunpack.c.l.b16 %v3653
      %v3662 = vpack.c.b16 %v3659, %v3658
      %v3663 = vpack.c.b16 %v3661, %v3660
      %v3667 = vsel %vm679, %v3646, 0
      %v3670 = vsel %vm679, %v3647, 0
      %v3673 = vsel %vm679, %v3648, 0
      %v3676 = vsel %vm679, %v3649, 0
      %3678 = vmatprep.subr.bf16.mxu0 0
      %3679 = vmatpush1.bf16.msra.mxu0 0
      %3680 = vmatprep.subr.bf16.mxu0 0
      %3681 = vmatpush1.bf16.msra.mxu0 0
      %3682 = vmatprep.subr.bf16.mxu0 0
      %3683 = vmatpush1.bf16.msra.mxu0 0
      %3684 = vmatprep.subr.bf16.mxu0 0
      %3685 = vmatpush1.bf16.msra.mxu0 0
      %3686 = vmatprep.subr.bf16.mxu0 0
      %3687 = vmatpush1.bf16.msra.mxu0 0
      %3688 = vmatprep.subr.bf16.mxu0 0
      %3689 = vmatpush1.bf16.msra.mxu0 0
      %3690 = vmatprep.subr.bf16.mxu0 0
      %3691 = vmatpush1.bf16.msra.mxu0 %v3663
      %3692 = vmatprep.subr.bf16.mxu0 0
      %3693 = vmatpush1.bf16.msra.mxu0 %v3662
      %3694 = vmatprep.subr.bf16.mxu0 0
      %3695 = vmatpush2.bf16.msra.mxu0 0
      %3696 = vmatprep.subr.bf16.mxu0 0
      %3697 = vmatpush2.bf16.msra.mxu0 0
      %3698 = vmatprep.subr.bf16.mxu0 0
      %3699 = vmatpush2.bf16.msra.mxu0 0
      %3700 = vmatprep.subr.bf16.mxu0 0
      %3701 = vmatpush2.bf16.msra.mxu0 0
      %3702 = vmatprep.subr.bf16.mxu0 0
      %3703 = vmatpush2.bf16.msra.mxu0 0
      %3704 = vmatprep.subr.bf16.mxu0 0
      %3705 = vmatpush2.bf16.msra.mxu0 0
      %3706 = vmatprep.subr.bf16.mxu0 0
      %3707 = vmatpush2.bf16.msra.mxu0 0
      %3708 = vmatprep.subr.bf16.mxu0 0
      %3709 = vmatpush2.bf16.msra.mxu0 0
      %3710 = vmatprep.mubr.bf16.mxu0 0
      %3711 = vmatmul.mubr.bf16.gmra.mxu0 %v3667
      %v3712 = vpop.f32.mrf.mxu0
      %v3713 = vadd.f32 0.0, %v3712
      %v3714 = vpop.f32.mrf.mxu0
      %v3715 = vpop.f32.mrf.mxu0
      %v3716 = vadd.f32 0.0, %v3715
      %v3717 = vpop.f32.mrf.mxu0
      %3718 = vmatprep.mubr.bf16.mxu0 0
      %3719 = vmatmul.mubr.bf16.gmra.mxu0 %v3670
      %v3720 = vpop.f32.mrf.mxu0
      %v3721 = vadd.f32 0.0, %v3720
      %v3722 = vpop.f32.mrf.mxu0
      %v3723 = vpop.f32.mrf.mxu0
      %v3724 = vadd.f32 0.0, %v3723
      %v3725 = vpop.f32.mrf.mxu0
      %3726 = vmatprep.mubr.bf16.mxu0 0
      %3727 = vmatmul.mubr.bf16.gmra.mxu0 %v3673
      %v3728 = vpop.f32.mrf.mxu0
      %v3729 = vadd.f32 0.0, %v3728
      %v3730 = vpop.f32.mrf.mxu0
      %v3731 = vpop.f32.mrf.mxu0
      %v3732 = vadd.f32 0.0, %v3731
      %v3733 = vpop.f32.mrf.mxu0
      %3734 = vmatprep.mubr.bf16.mxu0 0
      %3735 = vmatmul.mubr.bf16.gmra.mxu0 %v3676
      %v3736 = vpop.f32.mrf.mxu0
      %v3737 = vadd.f32 0.0, %v3736
      %v3738 = vpop.f32.mrf.mxu0
      %v3739 = vpop.f32.mrf.mxu0
      %v3740 = vadd.f32 0.0, %v3739
      %v3741 = vpop.f32.mrf.mxu0
      %3742 = vdwg.mxu0
      %v3747 = vunpack.c.l.b16 %v3642
      %v3748 = vunpack.c.l.b16 %v3643
      %v3749 = vunpack.c.l.b16 %v3644
      %v3750 = vunpack.c.l.b16 %v3645
      %v3751 = vpack.c.b16 %v3748, %v3747
      %v3752 = vpack.c.b16 %v3750, %v3749
      %3755 = vmatprep.subr.bf16.mxu0 0
      %3756 = vmatpush1.bf16.msra.mxu0 0
      %3757 = vmatprep.subr.bf16.mxu0 0
      %3758 = vmatpush1.bf16.msra.mxu0 0
      %3759 = vmatprep.subr.bf16.mxu0 0
      %3760 = vmatpush1.bf16.msra.mxu0 0
      %3761 = vmatprep.subr.bf16.mxu0 0
      %3762 = vmatpush1.bf16.msra.mxu0 0
      %3763 = vmatprep.subr.bf16.mxu0 0
      %3764 = vmatpush1.bf16.msra.mxu0 0
      %3765 = vmatprep.subr.bf16.mxu0 0
      %3766 = vmatpush1.bf16.msra.mxu0 0
      %3767 = vmatprep.subr.bf16.mxu0 0
      %3768 = vmatpush1.bf16.msra.mxu0 %v3752
      %3769 = vmatprep.subr.bf16.mxu0 0
      %3770 = vmatpush1.bf16.msra.mxu0 %v3751
      %3771 = vmatprep.subr.bf16.mxu0 0
      %3772 = vmatpush2.bf16.msra.mxu0 0
      %3773 = vmatprep.subr.bf16.mxu0 0
      %3774 = vmatpush2.bf16.msra.mxu0 0
      %3775 = vmatprep.subr.bf16.mxu0 0
      %3776 = vmatpush2.bf16.msra.mxu0 0
      %3777 = vmatprep.subr.bf16.mxu0 0
      %3778 = vmatpush2.bf16.msra.mxu0 0
      %3779 = vmatprep.subr.bf16.mxu0 0
      %3780 = vmatpush2.bf16.msra.mxu0 0
      %3781 = vmatprep.subr.bf16.mxu0 0
      %3782 = vmatpush2.bf16.msra.mxu0 0
      %3783 = vmatprep.subr.bf16.mxu0 0
      %3784 = vmatpush2.bf16.msra.mxu0 0
      %3785 = vmatprep.subr.bf16.mxu0 0
      %3786 = vmatpush2.bf16.msra.mxu0 0
      %3787 = vmatprep.mubr.bf16.mxu0 0
      %3788 = vmatmul.mubr.bf16.gmra.mxu0 %v681
      %v3789 = vpop.f32.mrf.mxu0
      %v3790 = vadd.f32 %v3713, %v3789
      %v3791 = vpop.f32.mrf.mxu0
      %v3792 = vpop.f32.mrf.mxu0
      %v3793 = vadd.f32 %v3716, %v3792
      %v3794 = vpop.f32.mrf.mxu0
      %3795 = vmatprep.mubr.bf16.mxu0 0
      %3796 = vmatmul.mubr.bf16.gmra.mxu0 %v684
      %v3797 = vpop.f32.mrf.mxu0
      %v3798 = vadd.f32 %v3721, %v3797
      %v3799 = vpop.f32.mrf.mxu0
      %v3800 = vpop.f32.mrf.mxu0
      %v3801 = vadd.f32 %v3724, %v3800
      %v3802 = vpop.f32.mrf.mxu0
      %3803 = vmatprep.mubr.bf16.mxu0 0
      %3804 = vmatmul.mubr.bf16.gmra.mxu0 %v687
      %v3805 = vpop.f32.mrf.mxu0
      %v3806 = vadd.f32 %v3729, %v3805
      %v3807 = vpop.f32.mrf.mxu0
      %v3808 = vpop.f32.mrf.mxu0
      %v3809 = vadd.f32 %v3732, %v3808
      %v3810 = vpop.f32.mrf.mxu0
      %3811 = vmatprep.mubr.bf16.mxu0 0
      %3812 = vmatmul.mubr.bf16.gmra.mxu0 %v690
      %v3813 = vpop.f32.mrf.mxu0
      %v3814 = vadd.f32 %v3737, %v3813
      %v3815 = vpop.f32.mrf.mxu0
      %v3816 = vpop.f32.mrf.mxu0
      %v3817 = vadd.f32 %v3740, %v3816
      %v3818 = vpop.f32.mrf.mxu0
      %3819 = vdwg.mxu0
      %v3820 = vmax.f32 %v3790, 0.0
      %v3821 = vmax.f32 %v3793, 0.0
      %v3822 = vmax.f32 %v3798, 0.0
      %v3823 = vmax.f32 %v3801, 0.0
      %v3824 = vmax.f32 %v3806, 0.0
      %v3825 = vmax.f32 %v3809, 0.0
      %v3826 = vmax.f32 %v3814, 0.0
      %v3827 = vmax.f32 %v3817, 0.0
      %v3828 = vpack.c.bf16 %v3821, %v3820
      %v3829 = vpack.c.bf16 %v3823, %v3822
      %v3830 = vpack.c.bf16 %v3825, %v3824
      %v3831 = vpack.c.bf16 %v3827, %v3826
      %v3832 = vld [vmem:[%s10] sm:$0xf]
      %v3833 = vld [vmem:[%s10 + $0x4] sm:$0xf]
      %v3834 = vld [vmem:[%s10 + $0x8] sm:$0xf]
      %v3835 = vld [vmem:[%s10 + $0xc] sm:$0xf]
      %v3836 = vld [vmem:[%s10 + $0x10] sm:$0xf]
      %v3837 = vld [vmem:[%s10 + $0x14] sm:$0xf]
      %v3838 = vld [vmem:[%s10 + $0x18] sm:$0xf]
      %v3839 = vld [vmem:[%s10 + $0x1c] sm:$0xf]
      %v3848 = vunpack.c.l.b16 %v3832
      %v3849 = vunpack.c.l.b16 %v3833
      %v3850 = vunpack.c.l.b16 %v3834
      %v3851 = vunpack.c.l.b16 %v3835
      %v3852 = vunpack.c.l.b16 %v3836
      %v3853 = vunpack.c.l.b16 %v3837
      %v3854 = vunpack.c.l.b16 %v3838
      %v3855 = vunpack.c.l.b16 %v3839
      %v3856 = vpack.c.b16 %v3849, %v3848
      %v3857 = vpack.c.b16 %v3851, %v3850
      %v3858 = vpack.c.b16 %v3853, %v3852
      %v3859 = vpack.c.b16 %v3855, %v3854
      %v3865 = vsel %vm2414, %v3828, 0
      %v3868 = vsel %vm2414, %v3829, 0
      %v3871 = vsel %vm2414, %v3830, 0
      %v3874 = vsel %vm2414, %v3831, 0
      %3876 = vmatprep.subr.bf16.mxu0 0
      %3877 = vmatpush1.bf16.msra.mxu0 0
      %3878 = vmatprep.subr.bf16.mxu0 0
      %3879 = vmatpush1.bf16.msra.mxu0 0
      %3880 = vmatprep.subr.bf16.mxu0 0
      %3881 = vmatpush1.bf16.msra.mxu0 0
      %3882 = vmatprep.subr.bf16.mxu0 0
      %3883 = vmatpush1.bf16.msra.mxu0 0
      %3884 = vmatprep.subr.bf16.mxu0 0
      %3885 = vmatpush1.bf16.msra.mxu0 %v3859
      %3886 = vmatprep.subr.bf16.mxu0 0
      %3887 = vmatpush1.bf16.msra.mxu0 %v3858
      %3888 = vmatprep.subr.bf16.mxu0 0
      %3889 = vmatpush1.bf16.msra.mxu0 %v3857
      %3890 = vmatprep.subr.bf16.mxu0 0
      %3891 = vmatpush1.bf16.msra.mxu0 %v3856
      %3892 = vmatprep.subr.bf16.mxu0 0
      %3893 = vmatpush2.bf16.msra.mxu0 0
      %3894 = vmatprep.subr.bf16.mxu0 0
      %3895 = vmatpush2.bf16.msra.mxu0 0
      %3896 = vmatprep.subr.bf16.mxu0 0
      %3897 = vmatpush2.bf16.msra.mxu0 0
      %3898 = vmatprep.subr.bf16.mxu0 0
      %3899 = vmatpush2.bf16.msra.mxu0 0
      %3900 = vmatprep.subr.bf16.mxu0 0
      %3901 = vmatpush2.bf16.msra.mxu0 0
      %3902 = vmatprep.subr.bf16.mxu0 0
      %3903 = vmatpush2.bf16.msra.mxu0 0
      %3904 = vmatprep.subr.bf16.mxu0 0
      %3905 = vmatpush2.bf16.msra.mxu0 0
      %3906 = vmatprep.subr.bf16.mxu0 0
      %3907 = vmatpush2.bf16.msra.mxu0 0
      %3908 = vmatprep.mubr.bf16.mxu0 0
      %3909 = vmatmul.mubr.bf16.gmra.mxu0 %v3865
      %v3910 = vpop.f32.mrf.mxu0
      %v3911 = vadd.f32 0.0, %v3910
      %v3912 = vpop.f32.mrf.mxu0
      %v3913 = vpop.f32.mrf.mxu0
      %v3914 = vadd.f32 0.0, %v3913
      %v3915 = vpop.f32.mrf.mxu0
      %3916 = vmatprep.mubr.bf16.mxu0 0
      %3917 = vmatmul.mubr.bf16.gmra.mxu0 %v3868
      %v3918 = vpop.f32.mrf.mxu0
      %v3919 = vadd.f32 0.0, %v3918
      %v3920 = vpop.f32.mrf.mxu0
      %v3921 = vpop.f32.mrf.mxu0
      %v3922 = vadd.f32 0.0, %v3921
      %v3923 = vpop.f32.mrf.mxu0
      %3924 = vmatprep.mubr.bf16.mxu0 0
      %3925 = vmatmul.mubr.bf16.gmra.mxu0 %v3871
      %v3926 = vpop.f32.mrf.mxu0
      %v3927 = vadd.f32 0.0, %v3926
      %v3928 = vpop.f32.mrf.mxu0
      %v3929 = vpop.f32.mrf.mxu0
      %v3930 = vadd.f32 0.0, %v3929
      %v3931 = vpop.f32.mrf.mxu0
      %3932 = vmatprep.mubr.bf16.mxu0 0
      %3933 = vmatmul.mubr.bf16.gmra.mxu0 %v3874
      %v3934 = vpop.f32.mrf.mxu0
      %v3935 = vadd.f32 0.0, %v3934
      %v3936 = vpop.f32.mrf.mxu0
      %v3937 = vpop.f32.mrf.mxu0
      %v3938 = vadd.f32 0.0, %v3937
      %v3939 = vpop.f32.mrf.mxu0
      %3940 = vdwg.mxu0
      %v3941 = vld [vmem:[%s13] sm:$0x1]
      %v3942 = vld [vmem:[%s14] sm:$0x1]
      %v3943 = vsel %vm679, %v3911, 0.0
      %3944 = vadd.xlane.f32.xlu0 %v3943
      %v3945 = vpop.xlane.xlu0 %3944
      %v3946 = vsel %vm679, %v3914, 0.0
      %3947 = vadd.xlane.f32.xlu0 %v3946
      %v3948 = vpop.xlane.xlu0 %3947
      %v3949 = vsel %vm679, %v3919, 0.0
      %3950 = vadd.xlane.f32.xlu0 %v3949
      %v3951 = vpop.xlane.xlu0 %3950
      %v3952 = vsel %vm679, %v3922, 0.0
      %3953 = vadd.xlane.f32.xlu0 %v3952
      %v3954 = vpop.xlane.xlu0 %3953
      %v3955 = vsel %vm679, %v3927, 0.0
      %3956 = vadd.xlane.f32.xlu0 %v3955
      %v3957 = vpop.xlane.xlu0 %3956
      %v3958 = vsel %vm679, %v3930, 0.0
      %3959 = vadd.xlane.f32.xlu0 %v3958
      %v3960 = vpop.xlane.xlu0 %3959
      %v3961 = vsel %vm679, %v3935, 0.0
      %3962 = vadd.xlane.f32.xlu0 %v3961
      %v3963 = vpop.xlane.xlu0 %3962
      %v3964 = vsel %vm679, %v3938, 0.0
      %3965 = vadd.xlane.f32.xlu0 %v3964
      %v3966 = vpop.xlane.xlu0 %3965
      %v3967 = vmul.f32 %v3945, %v3477
      %v3968 = vmul.f32 %v3948, %v3477
      %v3969 = vmul.f32 %v3951, %v3477
      %v3970 = vmul.f32 %v3954, %v3477
      %v3971 = vmul.f32 %v3957, %v3477
      %v3972 = vmul.f32 %v3960, %v3477
      %v3973 = vmul.f32 %v3963, %v3477
      %v3974 = vmul.f32 %v3966, %v3477
      %v3975 = vsub.f32 %v3911, %v3967
      %v3976 = vsub.f32 %v3914, %v3968
      %v3977 = vsub.f32 %v3919, %v3969
      %v3978 = vsub.f32 %v3922, %v3970
      %v3979 = vsub.f32 %v3927, %v3971
      %v3980 = vsub.f32 %v3930, %v3972
      %v3981 = vsub.f32 %v3935, %v3973
      %v3982 = vsub.f32 %v3938, %v3974
      %v3983 = vmul.f32 %v3975, %v3975
      %v3984 = vmul.f32 %v3976, %v3976
      %v3985 = vmul.f32 %v3977, %v3977
      %v3986 = vmul.f32 %v3978, %v3978
      %v3987 = vmul.f32 %v3979, %v3979
      %v3988 = vmul.f32 %v3980, %v3980
      %v3989 = vmul.f32 %v3981, %v3981
      %v3990 = vmul.f32 %v3982, %v3982
      %v3991 = vsel %vm679, %v3983, 0.0
      %3992 = vadd.xlane.f32.xlu0 %v3991
      %v3993 = vpop.xlane.xlu0 %3992
      %v3994 = vsel %vm679, %v3984, 0.0
      %3995 = vadd.xlane.f32.xlu0 %v3994
      %v3996 = vpop.xlane.xlu0 %3995
      %v3997 = vsel %vm679, %v3985, 0.0
      %3998 = vadd.xlane.f32.xlu0 %v3997
      %v3999 = vpop.xlane.xlu0 %3998
      %v4000 = vsel %vm679, %v3986, 0.0
      %4001 = vadd.xlane.f32.xlu0 %v4000
      %v4002 = vpop.xlane.xlu0 %4001
      %v4003 = vsel %vm679, %v3987, 0.0
      %4004 = vadd.xlane.f32.xlu0 %v4003
      %v4005 = vpop.xlane.xlu0 %4004
      %v4006 = vsel %vm679, %v3988, 0.0
      %4007 = vadd.xlane.f32.xlu0 %v4006
      %v4008 = vpop.xlane.xlu0 %4007
      %v4009 = vsel %vm679, %v3989, 0.0
      %4010 = vadd.xlane.f32.xlu0 %v4009
      %v4011 = vpop.xlane.xlu0 %4010
      %v4012 = vsel %vm679, %v3990, 0.0
      %4013 = vadd.xlane.f32.xlu0 %v4012
      %v4014 = vpop.xlane.xlu0 %4013
      %v4015 = vmul.f32 %v3993, 0.032258064
      %v4016 = vmul.f32 %v3996, 0.032258064
      %v4017 = vmul.f32 %v3999, 0.032258064
      %v4018 = vmul.f32 %v4002, 0.032258064
      %v4019 = vmul.f32 %v4005, 0.032258064
      %v4020 = vmul.f32 %v4008, 0.032258064
      %v4021 = vmul.f32 %v4011, 0.032258064
      %v4022 = vmul.f32 %v4014, 0.032258064
      %v4023 = vrsqrt.pop %v4015
      %v4024 = vmul.f32 %v4015, %v4023
      %vm4025 = vcmp.eq.f32.partialorder %v4015, inf
      %v4026 = vsel %vm4025, %v4015, %v4024
      %vm4027 = vcmp.eq.f32.partialorder %v4015, 0.0
      %v4028 = vand.u32 %v4015, 2147483648
      %v4029 = vsel %vm4027, %v4028, %v4026
      %v4030 = vrsqrt.pop %v4016
      %v4031 = vmul.f32 %v4016, %v4030
      %vm4032 = vcmp.eq.f32.partialorder %v4016, inf
      %v4033 = vsel %vm4032, %v4016, %v4031
      %vm4034 = vcmp.eq.f32.partialorder %v4016, 0.0
      %v4035 = vand.u32 %v4016, 2147483648
      %v4036 = vsel %vm4034, %v4035, %v4033
      %v4037 = vrsqrt.pop %v4017
      %v4038 = vmul.f32 %v4017, %v4037
      %vm4039 = vcmp.eq.f32.partialorder %v4017, inf
      %v4040 = vsel %vm4039, %v4017, %v4038
      %vm4041 = vcmp.eq.f32.partialorder %v4017, 0.0
      %v4042 = vand.u32 %v4017, 2147483648
      %v4043 = vsel %vm4041, %v4042, %v4040
      %v4044 = vrsqrt.pop %v4018
      %v4045 = vmul.f32 %v4018, %v4044
      %vm4046 = vcmp.eq.f32.partialorder %v4018, inf
      %v4047 = vsel %vm4046, %v4018, %v4045
      %vm4048 = vcmp.eq.f32.partialorder %v4018, 0.0
      %v4049 = vand.u32 %v4018, 2147483648
      %v4050 = vsel %vm4048, %v4049, %v4047
      %v4051 = vrsqrt.pop %v4019
      %v4052 = vmul.f32 %v4019, %v4051
      %vm4053 = vcmp.eq.f32.partialorder %v4019, inf
      %v4054 = vsel %vm4053, %v4019, %v4052
      %vm4055 = vcmp.eq.f32.partialorder %v4019, 0.0
      %v4056 = vand.u32 %v4019, 2147483648
      %v4057 = vsel %vm4055, %v4056, %v4054
      %v4058 = vrsqrt.pop %v4020
      %v4059 = vmul.f32 %v4020, %v4058
      %vm4060 = vcmp.eq.f32.partialorder %v4020, inf
      %v4061 = vsel %vm4060, %v4020, %v4059
      %vm4062 = vcmp.eq.f32.partialorder %v4020, 0.0
      %v4063 = vand.u32 %v4020, 2147483648
      %v4064 = vsel %vm4062, %v4063, %v4061
      %v4065 = vrsqrt.pop %v4021
      %v4066 = vmul.f32 %v4021, %v4065
      %vm4067 = vcmp.eq.f32.partialorder %v4021, inf
      %v4068 = vsel %vm4067, %v4021, %v4066
      %vm4069 = vcmp.eq.f32.partialorder %v4021, 0.0
      %v4070 = vand.u32 %v4021, 2147483648
      %v4071 = vsel %vm4069, %v4070, %v4068
      %v4072 = vrsqrt.pop %v4022
      %v4073 = vmul.f32 %v4022, %v4072
      %vm4074 = vcmp.eq.f32.partialorder %v4022, inf
      %v4075 = vsel %vm4074, %v4022, %v4073
      %vm4076 = vcmp.eq.f32.partialorder %v4022, 0.0
      %v4077 = vand.u32 %v4022, 2147483648
      %v4078 = vsel %vm4076, %v4077, %v4075
      %v4079 = vadd.f32 %v4029, 1e-06
      %v4080 = vadd.f32 %v4036, 1e-06
      %v4081 = vadd.f32 %v4043, 1e-06
      %v4082 = vadd.f32 %v4050, 1e-06
      %v4083 = vadd.f32 %v4057, 1e-06
      %v4084 = vadd.f32 %v4064, 1e-06
      %v4085 = vadd.f32 %v4071, 1e-06
      %v4086 = vadd.f32 %v4078, 1e-06
      %v4087 = vrcp.pop %v4079
      %v4088 = vrcp.pop %v4080
      %v4089 = vrcp.pop %v4081
      %v4090 = vrcp.pop %v4082
      %v4091 = vrcp.pop %v4083
      %v4092 = vrcp.pop %v4084
      %v4093 = vrcp.pop %v4085
      %v4094 = vrcp.pop %v4086
      %v4095 = vmul.f32 %v3975, %v4087
      %v4096 = vmul.f32 %v3976, %v4088
      %v4097 = vmul.f32 %v3977, %v4089
      %v4098 = vmul.f32 %v3978, %v4090
      %v4099 = vmul.f32 %v3979, %v4091
      %v4100 = vmul.f32 %v3980, %v4092
      %v4101 = vmul.f32 %v3981, %v4093
      %v4102 = vmul.f32 %v3982, %v4094
      %v4104 = vlaneseq
      %v4105 = vshrl.u32 %v4104, 7
      %v4106 = vsub.s32 0, %v4105
      %v4107 = vrot.slane %v3941, %v4106
      %v4109 = vmul.f32 %v4107, %v4095
      %v4110 = vmul.f32 %v4107, %v4096
      %v4111 = vmul.f32 %v4107, %v4097
      %v4112 = vmul.f32 %v4107, %v4098
      %v4113 = vmul.f32 %v4107, %v4099
      %v4114 = vmul.f32 %v4107, %v4100
      %v4115 = vmul.f32 %v4107, %v4101
      %v4116 = vmul.f32 %v4107, %v4102
      %v4118 = vlaneseq
      %v4119 = vshrl.u32 %v4118, 7
      %v4120 = vsub.s32 0, %v4119
      %v4121 = vrot.slane %v3942, %v4120
      %v4123 = vadd.f32 %v4109, %v4121
      %v4124 = vadd.f32 %v4110, %v4121
      %v4125 = vadd.f32 %v4111, %v4121
      %v4126 = vadd.f32 %v4112, %v4121
      %v4127 = vadd.f32 %v4113, %v4121
      %v4128 = vadd.f32 %v4114, %v4121
      %v4129 = vadd.f32 %v4115, %v4121
      %v4130 = vadd.f32 %v4116, %v4121
      %v4131 = vadd.f32 %v627, %v4123
      %v4132 = vadd.f32 %v628, %v4124
      %v4133 = vadd.f32 %v629, %v4125
      %v4134 = vadd.f32 %v630, %v4126
      %v4135 = vadd.f32 %v631, %v4127
      %v4136 = vadd.f32 %v632, %v4128
      %v4137 = vadd.f32 %v633, %v4129
      %v4138 = vadd.f32 %v634, %v4130
      %4139 = vst.msk [vmem:[%s625] sm:$0xff] %vm679, %v4131
      %4140 = vst.msk [vmem:[%s625 + $0x8] sm:$0xff] %vm679, %v4132
      %4141 = vst.msk [vmem:[%s625 + $0x10] sm:$0xff] %vm679, %v4133
      %4142 = vst.msk [vmem:[%s625 + $0x18] sm:$0xff] %vm679, %v4134
      %4143 = vst.msk [vmem:[%s625 + $0x20] sm:$0xff] %vm679, %v4135
      %4144 = vst.msk [vmem:[%s625 + $0x28] sm:$0xff] %vm679, %v4136
      %4145 = vst.msk [vmem:[%s625 + $0x30] sm:$0xff] %vm679, %v4137
      %4146 = vst.msk [vmem:[%s625 + $0x38] sm:$0xff] %vm679, %v4138
      %p4147 = scmp.lt.s32.totalorder %s26, 3
      %s4148 = scalar_select %p4147, %s26, 3
      %s4149 = smul.addr %s4148, 8
      %s4150 = smul.addr %s4149, 8
      %s4151 = scalar_lea.vmem %s15, %s4150
      // Predicated region
      $region81: #{message_layer_ini_forward.1} parent=79 // pred_check
        %p4152 = pneg %p400
      $region82: #{message_layer_ini_forward.1} parent=79 // pred_check_branch
        %4154 = sbr.rel (%p4152) target = $region84
      $region83: #{message_layer_ini_forward.1} parent=79 // pred_region
        _
      $region84: #{message_layer_ini_forward.1} parent=79 // pred_fallthru
        _
    $region80: #{message_layer_ini_forward.1} parent=5 // pred_fallthru
      _
    %p4155 = scmp.le.s32.totalorder 2, %s21
    // Predicated region
    $region85: #{message_layer_ini_forward.1} parent=5 // pred_check
      %p4156 = pneg %p4155
    $region86: #{message_layer_ini_forward.1} parent=5 // pred_check_branch
      %4158 = sbr.rel (%p4156) target = $region88
    $region87: #{message_layer_ini_forward.1} parent=5 // pred_region
      %s4159 = ssub.s32 %s21, 2
      // Predicated region
      $region89: #{message_layer_ini_forward.1} parent=87 // pred_check
        %p4160 = pneg %p406
      $region90: #{message_layer_ini_forward.1} parent=87 // pred_check_branch
        %4162 = sbr.rel (%p4160) target = $region92
      $region91: #{message_layer_ini_forward.1} parent=87 // pred_region
        %p4163 = scmp.lt.s32.totalorder %s27, 3
        %s4164 = scalar_select %p4163, %s27, 3
        %s4165 = smul.addr %s4164, 8
        %s4166 = smul.addr %s4165, 8
        %s4167 = scalar_lea.vmem %s15, %s4166
      $region92: #{message_layer_ini_forward.1} parent=87 // pred_fallthru
        _
    $region88: #{message_layer_ini_forward.1} parent=5 // pred_fallthru
      _
  $region6: #{message_layer_ini_forward.1} parent=0 // loop_footer
    %s25 = sadd.s32 1, %s21
  $region7: #{message_layer_ini_forward.1} parent=0 // loop_footer_branch
    %20 = sbr.rel target = $region3
  $region8: #{message_layer_ini_forward.1} parent=0 // loop_exit
    _

</llo_original>
